<compile_context>
chip_gen: v7x
topology: tpu7x:2x2x1
jax: 0.10.0
libtpu: 0.0.40
codegen_flags: <defaults>
</compile_context>

<pallas_src>
import functools
import math

import jax
import jax.numpy as jnp
from jax.experimental import pallas as pl
from jax.experimental.pallas import tpu as pltpu


# ----------------------------------------------------------------------------
# Fused kernel: qkv = z@Wqkv+b ; per-head softmax(q k^T) v (scale pre-folded) ;
# head concat ; single output projection.  Whole problem in one grid step.
# ----------------------------------------------------------------------------
def _latent_attention_kernel(z_ref, wqkv_ref, bqkv_ref, wproj_ref, bproj_ref,
                             o_ref, *, batch, seq, num_heads):
    D = wproj_ref.shape[0]
    hd = D // num_heads

    # --- QKV projection: one big MXU matmul over all B*L rows. ---------------
    z2 = z_ref[...]                                             # (B*L, D)
    qkv = jnp.dot(z2, wqkv_ref[...],
                  preferred_element_type=jnp.float32) + bqkv_ref[...]   # (B*L, 3D)
    qkv = qkv.reshape(batch, seq, 3 * D)                        # free sublane split

    # --- Attention, batched over B, statically unrolled over heads. ----------
    head_outs = []
    for h in range(num_heads):
        qh = qkv[:, :, h * hd:(h + 1) * hd]                     # (B, L, hd)  (Q pre-scaled)
        kh = qkv[:, :, D + h * hd:D + (h + 1) * hd]             # (B, L, hd)
        vh = qkv[:, :, 2 * D + h * hd:2 * D + (h + 1) * hd]     # (B, L, hd)

        # scores: batched q @ k^T (contract head dim), f32 accumulation
        s = jnp.einsum('bld,bmd->blm', qh, kh,
                       preferred_element_type=jnp.float32)      # (B, L, L)

        # numerically-stable softmax over keys (non-causal, no mask)
        m = jnp.max(s, axis=-1, keepdims=True)
        e = jnp.exp(s - m)
        denom = jnp.sum(e, axis=-1, keepdims=True)
        p = e * pl.reciprocal(denom, approx=False)              # EUP reciprocal

        head_outs.append(jnp.einsum('blm,bmd->bld', p, vh,
                                    preferred_element_type=jnp.float32))  # (B, L, hd)

    # --- Head merge + ONE output projection with full K=D contraction. -------
    y = jnp.concatenate(head_outs, axis=-1).reshape(batch * seq, D)       # (B*L, D)
    out = jnp.dot(y, wproj_ref[...],
                  preferred_element_type=jnp.float32) + bproj_ref[...]
    o_ref[...] = out.astype(o_ref.dtype)


# ----------------------------------------------------------------------------
# Wrapper
# ----------------------------------------------------------------------------
def latent_attention_rl(z, w_attn, b_attn, w_proj, b_proj, *, num_heads):
    """z: (B, L_new, d_new) f32 -> (B, L_new, d_new) f32.

    w_attn: (d_new, 3*d_new), b_attn: (3*d_new,), w_proj: (d_new, d_new),
    b_proj: (d_new,).  (Weights stored input-major, i.e. torch weight.T.)
    """
    B, L, D = z.shape
    assert D % num_heads == 0
    hd = D // num_heads
    scale = 1.0 / math.sqrt(hd)

    # Fold the 1/sqrt(head_dim) scale into the Q columns (weight + bias), once.
    col_scale = jnp.concatenate([jnp.full((D,), scale, dtype=w_attn.dtype),
                                 jnp.ones((2 * D,), dtype=w_attn.dtype)])
    w_qkv = w_attn * col_scale[None, :]                         # (D, 3D)
    b_qkv = (b_attn * col_scale).reshape(1, 3 * D)
    b_proj2 = b_proj.reshape(1, D)

    # Flatten batch into rows: contiguous, free reshape; lets the kernel do
    # the projections as single big matmuls and write one contiguous slab.
    z2 = z.reshape(B * L, D)

    # Advisory cost estimate for XLA scheduling around the custom call.
    flops = (2 * (B * L) * D * (3 * D)          # qkv projection
             + B * 4 * L * L * D                # scores + attn*V over all heads
             + 2 * (B * L) * D * D)             # output projection
    transcendentals = B * num_heads * L * L     # exp in softmax
    bytes_accessed = 4 * (2 * B * L * D                          # z in + out
                          + D * 3 * D + 3 * D + D * D + D)       # weights/biases

    kernel = functools.partial(_latent_attention_kernel,
                               batch=B, seq=L, num_heads=num_heads)
    out2 = pl.pallas_call(
        kernel,
        out_shape=jax.ShapeDtypeStruct((B * L, D), z.dtype),
        grid=(1,),                                               # single step
        in_specs=[
            pl.BlockSpec((B * L, D), lambda i: (0, 0)),          # z rows
            pl.BlockSpec((D, 3 * D), lambda i: (0, 0)),          # Wqkv (Q pre-scaled)
            pl.BlockSpec((1, 3 * D), lambda i: (0, 0)),          # bqkv
            pl.BlockSpec((D, D), lambda i: (0, 0)),              # Wproj
            pl.BlockSpec((1, D), lambda i: (0, 0)),              # bproj
        ],
        out_specs=pl.BlockSpec((B * L, D), lambda i: (0, 0)),
        compiler_params=pltpu.CompilerParams(
            dimension_semantics=("arbitrary",),
            vmem_limit_bytes=32 * 1024 * 1024,                   # tiny working set
        ),
        cost_estimate=pl.CostEstimate(
            flops=flops,
            transcendentals=transcendentals,
            bytes_accessed=bytes_accessed,
        ),
    )(z2, w_qkv, b_qkv, w_proj, b_proj2)

    return out2.reshape(B, L, D)


# ----------------------------------------------------------------------------
# Pure-JAX reference (mirrors the PyTorch module, eval mode: dropout = identity)
# ----------------------------------------------------------------------------
def reference_forward(z, w_attn, b_attn, w_proj, b_proj, num_heads):
    B, L, D = z.shape
    hd = D // num_heads
    with jax.default_matmul_precision("highest"):
        qkv = z @ w_attn + b_attn
        q, k, v = jnp.split(qkv, 3, axis=-1)
        q = q.reshape(B, L, num_heads, hd).transpose(0, 2, 1, 3)
        k = k.reshape(B, L, num_heads, hd).transpose(0, 2, 1, 3)
        v = v.reshape(B, L, num_heads, hd).transpose(0, 2, 1, 3)
        att = (q @ jnp.swapaxes(k, -1, -2)) * (1.0 / math.sqrt(hd))
        att = jax.nn.softmax(att, axis=-1)
        y = att @ v
        y = y.transpose(0, 2, 1, 3).reshape(B, L, D)
        return y @ w_proj + b_proj


# ----------------------------------------------------------------------------
# Main
# ----------------------------------------------------------------------------
if __name__ == "__main__":
    # Small shapes consistent with the module: latent length L_new, width d_new.
    B = 4
    L_new = 16
    d_new = 32
    num_heads_latent = 4          # d_new % num_heads_latent == 0

    key = jax.random.PRNGKey(0)
    kz, kw1, kb1, kw2, kb2 = jax.random.split(key, 5)

    z = jax.random.normal(kz, (B, L_new, d_new), dtype=jnp.float32)

    # PyTorch-Linear-style uniform init (bias=True), weights stored input-major.
    bound = 1.0 / math.sqrt(d_new)
    w_attn = jax.random.uniform(kw1, (d_new, 3 * d_new), jnp.float32, -bound, bound)
    b_attn = jax.random.uniform(kb1, (3 * d_new,), jnp.float32, -bound, bound)
    w_proj = jax.random.uniform(kw2, (d_new, d_new), jnp.float32, -bound, bound)
    b_proj = jax.random.uniform(kb2, (d_new,), jnp.float32, -bound, bound)

    out = latent_attention_rl(z, w_attn, b_attn, w_proj, b_proj,
                              num_heads=num_heads_latent)
    out = jax.block_until_ready(out)

    ref = reference_forward(z, w_attn, b_attn, w_proj, b_proj, num_heads_latent)
    assert out.shape == (B, L_new, d_new), out.shape
    assert jnp.allclose(out, ref, atol=5e-5, rtol=5e-5), "mismatch vs reference"

    print("KERNEL_OK")
</pallas_src>

<mosaic_0001>
module attributes {stable_mosaic.version = 11 : i64} {
  func.func @_latent_attention_kernel(%arg0: i32, %arg1: memref<64x32xf32, #tpu.memory_space<vmem>>, %arg2: memref<32x96xf32, #tpu.memory_space<vmem>>, %arg3: memref<1x96xf32, #tpu.memory_space<vmem>>, %arg4: memref<32x32xf32, #tpu.memory_space<vmem>>, %arg5: memref<1x32xf32, #tpu.memory_space<vmem>>, %arg6: memref<64x32xf32, #tpu.memory_space<vmem>>) attributes {dimension_semantics = [#tpu.dimension_semantics<arbitrary>], iteration_bounds = array<i64: 1>, scalar_prefetch = 0 : i64, scratch_operands = 0 : i64, tpu.core_type = #tpu.core_type<tc>, window_params = [{pipeline_mode = #tpu.pipeline_mode<synchronous>, transform_indices = @transform_0, window_bounds = array<i64: 64, 32>}, {pipeline_mode = #tpu.pipeline_mode<synchronous>, transform_indices = @transform_1, window_bounds = array<i64: 32, 96>}, {pipeline_mode = #tpu.pipeline_mode<synchronous>, transform_indices = @transform_2, window_bounds = array<i64: 1, 96>}, {pipeline_mode = #tpu.pipeline_mode<synchronous>, transform_indices = @transform_3, window_bounds = array<i64: 32, 32>}, {pipeline_mode = #tpu.pipeline_mode<synchronous>, transform_indices = @transform_4, window_bounds = array<i64: 1, 32>}, {pipeline_mode = #tpu.pipeline_mode<synchronous>, transform_indices = @transform_5, window_bounds = array<i64: 64, 32>}]} {
    %c0 = arith.constant 0 : index
    %c0_0 = arith.constant 0 : index
    %0 = vector.load %arg1[%c0, %c0_0] : memref<64x32xf32, #tpu.memory_space<vmem>>, vector<64x32xf32>
    %c0_1 = arith.constant 0 : index
    %c0_2 = arith.constant 0 : index
    %1 = vector.load %arg2[%c0_1, %c0_2] : memref<32x96xf32, #tpu.memory_space<vmem>>, vector<32x96xf32>
    %cst = arith.constant dense<0.000000e+00> : vector<64x96xf32>
    %2 = tpu.matmul %0, %1, %cst {dimension_numbers = #tpu.dot_dimension_numbers<[1], [0], [0], [1], [0, 0, 1, 1], [], []>} : vector<64x32xf32>, vector<32x96xf32>, vector<64x96xf32> -> vector<64x96xf32>
    %c0_3 = arith.constant 0 : index
    %c0_4 = arith.constant 0 : index
    %3 = vector.load %arg3[%c0_3, %c0_4] : memref<1x96xf32, #tpu.memory_space<vmem>>, vector<1x96xf32>
    %4 = vector.broadcast %3 : vector<1x96xf32> to vector<64x96xf32>
    %5 = arith.addf %2, %4 : vector<64x96xf32>
    %6 = vector.shape_cast %5 : vector<64x96xf32> to vector<4x16x96xf32>
    %7 = vector.extract_strided_slice %6 {offsets = [0, 0, 0], sizes = [4, 16, 8], strides = [1, 1, 1]} : vector<4x16x96xf32> to vector<4x16x8xf32>
    %8 = vector.extract_strided_slice %6 {offsets = [0, 0, 32], sizes = [4, 16, 8], strides = [1, 1, 1]} : vector<4x16x96xf32> to vector<4x16x8xf32>
    %9 = vector.extract_strided_slice %6 {offsets = [0, 0, 64], sizes = [4, 16, 8], strides = [1, 1, 1]} : vector<4x16x96xf32> to vector<4x16x8xf32>
    "tpu.trace_start"() <{level = 10 : i32, message = "bld,bmd->blm"}> : () -> ()
    %cst_5 = arith.constant dense<0.000000e+00> : vector<4x16x16xf32>
    %10 = tpu.matmul %7, %8, %cst_5 {dimension_numbers = #tpu.dot_dimension_numbers<[2], [2], [1], [1], [0, 0, 0, 1, 1, 1], [0], [0]>} : vector<4x16x8xf32>, vector<4x16x8xf32>, vector<4x16x16xf32> -> vector<4x16x16xf32>
    "tpu.trace_stop"() : () -> ()
    %cst_6 = arith.constant dense<0xFF800000> : vector<4x16xf32>
    %11 = vector.multi_reduction <maximumf>, %10, %cst_6 [2] : vector<4x16x16xf32> to vector<4x16xf32>
    %12 = vector.shape_cast %11 : vector<4x16xf32> to vector<4x16x1xf32>
    %13 = vector.broadcast %12 : vector<4x16x1xf32> to vector<4x16x16xf32>
    %14 = arith.subf %10, %13 : vector<4x16x16xf32>
    %15 = math.exp %14 : vector<4x16x16xf32>
    %cst_7 = arith.constant dense<0.000000e+00> : vector<4x16xf32>
    %16 = vector.multi_reduction <add>, %15, %cst_7 [2] : vector<4x16x16xf32> to vector<4x16xf32>
    %17 = vector.shape_cast %16 : vector<4x16xf32> to vector<4x16x1xf32>
    %18 = tpu.reciprocal %17 : vector<4x16x1xf32> -> vector<4x16x1xf32>
    %19 = vector.broadcast %18 : vector<4x16x1xf32> to vector<4x16x16xf32>
    %20 = arith.mulf %15, %19 : vector<4x16x16xf32>
    "tpu.trace_start"() <{level = 10 : i32, message = "blm,bmd->bld"}> : () -> ()
    %cst_8 = arith.constant dense<0.000000e+00> : vector<4x16x8xf32>
    %21 = tpu.matmul %20, %9, %cst_8 {dimension_numbers = #tpu.dot_dimension_numbers<[2], [1], [1], [2], [0, 0, 0, 1, 1, 2], [0], [0]>} : vector<4x16x16xf32>, vector<4x16x8xf32>, vector<4x16x8xf32> -> vector<4x16x8xf32>
    "tpu.trace_stop"() : () -> ()
    %22 = vector.extract_strided_slice %6 {offsets = [0, 0, 8], sizes = [4, 16, 8], strides = [1, 1, 1]} : vector<4x16x96xf32> to vector<4x16x8xf32>
    %23 = vector.extract_strided_slice %6 {offsets = [0, 0, 40], sizes = [4, 16, 8], strides = [1, 1, 1]} : vector<4x16x96xf32> to vector<4x16x8xf32>
    %24 = vector.extract_strided_slice %6 {offsets = [0, 0, 72], sizes = [4, 16, 8], strides = [1, 1, 1]} : vector<4x16x96xf32> to vector<4x16x8xf32>
    "tpu.trace_start"() <{level = 10 : i32, message = "bld,bmd->blm"}> : () -> ()
    %cst_9 = arith.constant dense<0.000000e+00> : vector<4x16x16xf32>
    %25 = tpu.matmul %22, %23, %cst_9 {dimension_numbers = #tpu.dot_dimension_numbers<[2], [2], [1], [1], [0, 0, 0, 1, 1, 1], [0], [0]>} : vector<4x16x8xf32>, vector<4x16x8xf32>, vector<4x16x16xf32> -> vector<4x16x16xf32>
    "tpu.trace_stop"() : () -> ()
    %cst_10 = arith.constant dense<0xFF800000> : vector<4x16xf32>
    %26 = vector.multi_reduction <maximumf>, %25, %cst_10 [2] : vector<4x16x16xf32> to vector<4x16xf32>
    %27 = vector.shape_cast %26 : vector<4x16xf32> to vector<4x16x1xf32>
    %28 = vector.broadcast %27 : vector<4x16x1xf32> to vector<4x16x16xf32>
    %29 = arith.subf %25, %28 : vector<4x16x16xf32>
    %30 = math.exp %29 : vector<4x16x16xf32>
    %cst_11 = arith.constant dense<0.000000e+00> : vector<4x16xf32>
    %31 = vector.multi_reduction <add>, %30, %cst_11 [2] : vector<4x16x16xf32> to vector<4x16xf32>
    %32 = vector.shape_cast %31 : vector<4x16xf32> to vector<4x16x1xf32>
    %33 = tpu.reciprocal %32 : vector<4x16x1xf32> -> vector<4x16x1xf32>
    %34 = vector.broadcast %33 : vector<4x16x1xf32> to vector<4x16x16xf32>
    %35 = arith.mulf %30, %34 : vector<4x16x16xf32>
    "tpu.trace_start"() <{level = 10 : i32, message = "blm,bmd->bld"}> : () -> ()
    %cst_12 = arith.constant dense<0.000000e+00> : vector<4x16x8xf32>
    %36 = tpu.matmul %35, %24, %cst_12 {dimension_numbers = #tpu.dot_dimension_numbers<[2], [1], [1], [2], [0, 0, 0, 1, 1, 2], [0], [0]>} : vector<4x16x16xf32>, vector<4x16x8xf32>, vector<4x16x8xf32> -> vector<4x16x8xf32>
    "tpu.trace_stop"() : () -> ()
    %37 = vector.extract_strided_slice %6 {offsets = [0, 0, 16], sizes = [4, 16, 8], strides = [1, 1, 1]} : vector<4x16x96xf32> to vector<4x16x8xf32>
    %38 = vector.extract_strided_slice %6 {offsets = [0, 0, 48], sizes = [4, 16, 8], strides = [1, 1, 1]} : vector<4x16x96xf32> to vector<4x16x8xf32>
    %39 = vector.extract_strided_slice %6 {offsets = [0, 0, 80], sizes = [4, 16, 8], strides = [1, 1, 1]} : vector<4x16x96xf32> to vector<4x16x8xf32>
    "tpu.trace_start"() <{level = 10 : i32, message = "bld,bmd->blm"}> : () -> ()
    %cst_13 = arith.constant dense<0.000000e+00> : vector<4x16x16xf32>
    %40 = tpu.matmul %37, %38, %cst_13 {dimension_numbers = #tpu.dot_dimension_numbers<[2], [2], [1], [1], [0, 0, 0, 1, 1, 1], [0], [0]>} : vector<4x16x8xf32>, vector<4x16x8xf32>, vector<4x16x16xf32> -> vector<4x16x16xf32>
    "tpu.trace_stop"() : () -> ()
    %cst_14 = arith.constant dense<0xFF800000> : vector<4x16xf32>
    %41 = vector.multi_reduction <maximumf>, %40, %cst_14 [2] : vector<4x16x16xf32> to vector<4x16xf32>
    %42 = vector.shape_cast %41 : vector<4x16xf32> to vector<4x16x1xf32>
    %43 = vector.broadcast %42 : vector<4x16x1xf32> to vector<4x16x16xf32>
    %44 = arith.subf %40, %43 : vector<4x16x16xf32>
    %45 = math.exp %44 : vector<4x16x16xf32>
    %cst_15 = arith.constant dense<0.000000e+00> : vector<4x16xf32>
    %46 = vector.multi_reduction <add>, %45, %cst_15 [2] : vector<4x16x16xf32> to vector<4x16xf32>
    %47 = vector.shape_cast %46 : vector<4x16xf32> to vector<4x16x1xf32>
    %48 = tpu.reciprocal %47 : vector<4x16x1xf32> -> vector<4x16x1xf32>
    %49 = vector.broadcast %48 : vector<4x16x1xf32> to vector<4x16x16xf32>
    %50 = arith.mulf %45, %49 : vector<4x16x16xf32>
    "tpu.trace_start"() <{level = 10 : i32, message = "blm,bmd->bld"}> : () -> ()
    %cst_16 = arith.constant dense<0.000000e+00> : vector<4x16x8xf32>
    %51 = tpu.matmul %50, %39, %cst_16 {dimension_numbers = #tpu.dot_dimension_numbers<[2], [1], [1], [2], [0, 0, 0, 1, 1, 2], [0], [0]>} : vector<4x16x16xf32>, vector<4x16x8xf32>, vector<4x16x8xf32> -> vector<4x16x8xf32>
    "tpu.trace_stop"() : () -> ()
    %52 = vector.extract_strided_slice %6 {offsets = [0, 0, 24], sizes = [4, 16, 8], strides = [1, 1, 1]} : vector<4x16x96xf32> to vector<4x16x8xf32>
    %53 = vector.extract_strided_slice %6 {offsets = [0, 0, 56], sizes = [4, 16, 8], strides = [1, 1, 1]} : vector<4x16x96xf32> to vector<4x16x8xf32>
    %54 = vector.extract_strided_slice %6 {offsets = [0, 0, 88], sizes = [4, 16, 8], strides = [1, 1, 1]} : vector<4x16x96xf32> to vector<4x16x8xf32>
    "tpu.trace_start"() <{level = 10 : i32, message = "bld,bmd->blm"}> : () -> ()
    %cst_17 = arith.constant dense<0.000000e+00> : vector<4x16x16xf32>
    %55 = tpu.matmul %52, %53, %cst_17 {dimension_numbers = #tpu.dot_dimension_numbers<[2], [2], [1], [1], [0, 0, 0, 1, 1, 1], [0], [0]>} : vector<4x16x8xf32>, vector<4x16x8xf32>, vector<4x16x16xf32> -> vector<4x16x16xf32>
    "tpu.trace_stop"() : () -> ()
    %cst_18 = arith.constant dense<0xFF800000> : vector<4x16xf32>
    %56 = vector.multi_reduction <maximumf>, %55, %cst_18 [2] : vector<4x16x16xf32> to vector<4x16xf32>
    %57 = vector.shape_cast %56 : vector<4x16xf32> to vector<4x16x1xf32>
    %58 = vector.broadcast %57 : vector<4x16x1xf32> to vector<4x16x16xf32>
    %59 = arith.subf %55, %58 : vector<4x16x16xf32>
    %60 = math.exp %59 : vector<4x16x16xf32>
    %cst_19 = arith.constant dense<0.000000e+00> : vector<4x16xf32>
    %61 = vector.multi_reduction <add>, %60, %cst_19 [2] : vector<4x16x16xf32> to vector<4x16xf32>
    %62 = vector.shape_cast %61 : vector<4x16xf32> to vector<4x16x1xf32>
    %63 = tpu.reciprocal %62 : vector<4x16x1xf32> -> vector<4x16x1xf32>
    %64 = vector.broadcast %63 : vector<4x16x1xf32> to vector<4x16x16xf32>
    %65 = arith.mulf %60, %64 : vector<4x16x16xf32>
    "tpu.trace_start"() <{level = 10 : i32, message = "blm,bmd->bld"}> : () -> ()
    %cst_20 = arith.constant dense<0.000000e+00> : vector<4x16x8xf32>
    %66 = tpu.matmul %65, %54, %cst_20 {dimension_numbers = #tpu.dot_dimension_numbers<[2], [1], [1], [2], [0, 0, 0, 1, 1, 2], [0], [0]>} : vector<4x16x16xf32>, vector<4x16x8xf32>, vector<4x16x8xf32> -> vector<4x16x8xf32>
    "tpu.trace_stop"() : () -> ()
    %67 = tpu.concatenate %21, %36, %51, %66 in 2 : vector<4x16x8xf32>, vector<4x16x8xf32>, vector<4x16x8xf32>, vector<4x16x8xf32> -> vector<4x16x32xf32>
    %68 = vector.shape_cast %67 : vector<4x16x32xf32> to vector<64x32xf32>
    %c0_21 = arith.constant 0 : index
    %c0_22 = arith.constant 0 : index
    %69 = vector.load %arg4[%c0_21, %c0_22] : memref<32x32xf32, #tpu.memory_space<vmem>>, vector<32x32xf32>
    %cst_23 = arith.constant dense<0.000000e+00> : vector<64x32xf32>
    %70 = tpu.matmul %68, %69, %cst_23 {dimension_numbers = #tpu.dot_dimension_numbers<[1], [0], [0], [1], [0, 0, 1, 1], [], []>} : vector<64x32xf32>, vector<32x32xf32>, vector<64x32xf32> -> vector<64x32xf32>
    %c0_24 = arith.constant 0 : index
    %c0_25 = arith.constant 0 : index
    %71 = vector.load %arg5[%c0_24, %c0_25] : memref<1x32xf32, #tpu.memory_space<vmem>>, vector<1x32xf32>
    %72 = vector.broadcast %71 : vector<1x32xf32> to vector<64x32xf32>
    %73 = arith.addf %70, %72 : vector<64x32xf32>
    %c0_26 = arith.constant 0 : index
    %c0_27 = arith.constant 0 : index
    %74 = vector.load %arg6[%c0_26, %c0_27] : memref<64x32xf32, #tpu.memory_space<vmem>>, vector<64x32xf32>
    tpu.vector_store %arg6[%c0_26, %c0_27], %73 {strides = array<i32>} : memref<64x32xf32, #tpu.memory_space<vmem>>, vector<64x32xf32>,
    return
  }
  func.func @transform_0(%arg0: i32) -> (i32, i32) {
    %c0_i32 = arith.constant 0 : i32
    %c0_i32_0 = arith.constant 0 : i32
    %c0_i32_1 = arith.constant 0 : i32
    return %c0_i32, %c0_i32_0 : i32, i32
  }
  func.func @transform_1(%arg0: i32) -> (i32, i32) {
    %c0_i32 = arith.constant 0 : i32
    %c0_i32_0 = arith.constant 0 : i32
    %c0_i32_1 = arith.constant 0 : i32
    return %c0_i32, %c0_i32_0 : i32, i32
  }
  func.func @transform_2(%arg0: i32) -> (i32, i32) {
    %c0_i32 = arith.constant 0 : i32
    %c0_i32_0 = arith.constant 0 : i32
    %c0_i32_1 = arith.constant 0 : i32
    return %c0_i32, %c0_i32_0 : i32, i32
  }
  func.func @transform_3(%arg0: i32) -> (i32, i32) {
    %c0_i32 = arith.constant 0 : i32
    %c0_i32_0 = arith.constant 0 : i32
    %c0_i32_1 = arith.constant 0 : i32
    return %c0_i32, %c0_i32_0 : i32, i32
  }
  func.func @transform_4(%arg0: i32) -> (i32, i32) {
    %c0_i32 = arith.constant 0 : i32
    %c0_i32_0 = arith.constant 0 : i32
    %c0_i32_1 = arith.constant 0 : i32
    return %c0_i32, %c0_i32_0 : i32, i32
  }
  func.func @transform_5(%arg0: i32) -> (i32, i32) {
    %c0_i32 = arith.constant 0 : i32
    %c0_i32_0 = arith.constant 0 : i32
    %c0_i32_1 = arith.constant 0 : i32
    return %c0_i32, %c0_i32_0 : i32, i32
  }
}

</mosaic_0001>

<llo_original>
// kernel: tpu_custom_call.1
$region0: #{tpu_custom_call.1}
  #allocation0 [shape = 'u32[]', space=smem, size = 0x4, offset = 0x4, fixed_abs, tag = 'smem constant byte address 0x4 - core index']
  #allocation1 [shape = 'u32[144,128]{1,0:T(1,128)}', space=vmem, size = 0x12000, scoped, tag = 'internal scratch']
  %s0 = inlined_call_operand.vmem [shape: f32[64,32], index: 0, kind: input, shape index: {}]
  %s1 = inlined_call_operand.vmem [shape: f32[32,96], index: 1, kind: input, shape index: {}]
  %s2 = inlined_call_operand.vmem [shape: f32[1,96], index: 2, kind: input, shape index: {}]
  %s3 = inlined_call_operand.vmem [shape: f32[32,32], index: 3, kind: input, shape index: {}]
  %s4 = inlined_call_operand.vmem [shape: f32[1,32], index: 4, kind: input, shape index: {}]
  %s5 = inlined_call_operand.vmem [shape: f32[64,32], index: 5, kind: output, shape index: {}]
  %s6 = sld [smem:[#allocation0]]
  $region30: #{tpu_custom_call.1} parent=0
    _
  %s8 = ssub.s32 1, %s6
  %s9 = scalar_select 0, %s8, %s6
  // Predicated region
  $region2: #{tpu_custom_call.1} parent=0 // pred_check
    _
  $region3: #{tpu_custom_call.1} parent=0 // pred_check_branch
    %11 = sbr.rel (0) target = $region5
  $region4: #{tpu_custom_call.1} parent=0 // pred_region
    _
  $region5: #{tpu_custom_call.1} parent=0 // pred_fallthru
    _
  // Predicated region
  $region6: #{tpu_custom_call.1} parent=0 // pred_check
    _
  $region7: #{tpu_custom_call.1} parent=0 // pred_check_branch
    %13 = sbr.rel (0) target = $region9
  $region8: #{tpu_custom_call.1} parent=0 // pred_region
    _
  $region9: #{tpu_custom_call.1} parent=0 // pred_fallthru
    _
  // Predicated region
  $region10: #{tpu_custom_call.1} parent=0 // pred_check
    _
  $region11: #{tpu_custom_call.1} parent=0 // pred_check_branch
    %15 = sbr.rel (0) target = $region13
  $region12: #{tpu_custom_call.1} parent=0 // pred_region
    _
  $region13: #{tpu_custom_call.1} parent=0 // pred_fallthru
    _
  // Predicated region
  $region14: #{tpu_custom_call.1} parent=0 // pred_check
    _
  $region15: #{tpu_custom_call.1} parent=0 // pred_check_branch
    %17 = sbr.rel (0) target = $region17
  $region16: #{tpu_custom_call.1} parent=0 // pred_region
    _
  $region17: #{tpu_custom_call.1} parent=0 // pred_fallthru
    _
  // Predicated region
  $region18: #{tpu_custom_call.1} parent=0 // pred_check
    _
  $region19: #{tpu_custom_call.1} parent=0 // pred_check_branch
    %19 = sbr.rel (0) target = $region21
  $region20: #{tpu_custom_call.1} parent=0 // pred_region
    _
  $region21: #{tpu_custom_call.1} parent=0 // pred_fallthru
    _
  %v20 = vld [vmem:[%s0] sm:$0xff]
  %v21 = vld [vmem:[%s0 + $0x8] sm:$0xff]
  %v22 = vld [vmem:[%s0 + $0x10] sm:$0xff]
  %v23 = vld [vmem:[%s0 + $0x18] sm:$0xff]
  %v24 = vld [vmem:[%s0 + $0x20] sm:$0xff]
  %v25 = vld [vmem:[%s0 + $0x28] sm:$0xff]
  %v26 = vld [vmem:[%s0 + $0x30] sm:$0xff]
  %v27 = vld [vmem:[%s0 + $0x38] sm:$0xff]
  %v28 = vld [vmem:[%s1] sm:$0xff]
  %v29 = vld [vmem:[%s1 + $0x8] sm:$0xff]
  %v30 = vld [vmem:[%s1 + $0x10] sm:$0xff]
  %v31 = vld [vmem:[%s1 + $0x18] sm:$0xff]
  %v32 = vld [vmem:[%s2] sm:$0x1]
  %v34 = vlaneseq
  %v35 = vshrl.u32 %v34, 7
  %v36 = vsub.s32 0, %v35
  %v37 = vrot.slane %v32, %v36
  %vm39 = vcmask 261120
  %v41 = vsel %vm39, %v20, 0
  %v44 = vsel %vm39, %v21, 0
  %v47 = vsel %vm39, %v22, 0
  %v50 = vsel %vm39, %v23, 0
  %v53 = vsel %vm39, %v24, 0
  %v56 = vsel %vm39, %v25, 0
  %v59 = vsel %vm39, %v26, 0
  %v62 = vsel %vm39, %v27, 0
  %64 = vmatprep.subr.mxu0 0.0
  %65 = vmatpush1.msra.mxu0 %v28
  %66 = vmatprep.subr.mxu0 0.0
  %67 = vmatpush1.msra.mxu0 %v29
  %68 = vmatprep.subr.mxu0 0.0
  %69 = vmatpush1.msra.mxu0 %v30
  %70 = vmatprep.subr.mxu0 0.0
  %71 = vmatpush1.msra.mxu0 %v31
  %72 = vmatprep.subr.mxu0 0.0
  %73 = vmatpush1.msra.mxu0 0.0
  %74 = vmatprep.subr.mxu0 0.0
  %75 = vmatpush1.msra.mxu0 0.0
  %76 = vmatprep.subr.mxu0 0.0
  %77 = vmatpush1.msra.mxu0 0.0
  %78 = vmatprep.subr.mxu0 0.0
  %79 = vmatpush1.msra.mxu0 0.0
  %80 = vmatprep.subr.mxu0 0.0
  %81 = vmatpush1.msra.mxu0 0.0
  %82 = vmatprep.subr.mxu0 0.0
  %83 = vmatpush1.msra.mxu0 0.0
  %84 = vmatprep.subr.mxu0 0.0
  %85 = vmatpush1.msra.mxu0 0.0
  %86 = vmatprep.subr.mxu0 0.0
  %87 = vmatpush1.msra.mxu0 0.0
  %88 = vmatprep.subr.mxu0 0.0
  %89 = vmatpush1.msra.mxu0 0.0
  %90 = vmatprep.subr.mxu0 0.0
  %91 = vmatpush1.msra.mxu0 0.0
  %92 = vmatprep.subr.mxu0 0.0
  %93 = vmatpush1.msra.mxu0 0.0
  %94 = vmatprep.subr.mxu0 0.0
  %95 = vmatpush1.msra.mxu0 0.0
  %96 = vmatprep.subr.mxu0 0.0
  %97 = vmatpush1.msra.mxu0 0.0
  %98 = vmatprep.subr.mxu0 0.0
  %99 = vmatpush1.msra.mxu0 0.0
  %100 = vmatprep.subr.mxu0 0.0
  %101 = vmatpush1.msra.mxu0 0.0
  %102 = vmatprep.subr.mxu0 0.0
  %103 = vmatpush1.msra.mxu0 0.0
  %104 = vmatprep.subr.mxu0 0.0
  %105 = vmatpush1.msra.mxu0 0.0
  %106 = vmatprep.subr.mxu0 0.0
  %107 = vmatpush1.msra.mxu0 0.0
  %108 = vmatprep.subr.mxu0 0.0
  %109 = vmatpush1.msra.mxu0 0.0
  %110 = vmatprep.subr.mxu0 0.0
  %111 = vmatpush1.msra.mxu0 0.0
  %112 = vmatprep.subr.mxu0 0.0
  %113 = vmatpush1.msra.mxu0 0.0
  %114 = vmatprep.subr.mxu0 0.0
  %115 = vmatpush1.msra.mxu0 0.0
  %116 = vmatprep.subr.mxu0 0.0
  %117 = vmatpush1.msra.mxu0 0.0
  %118 = vmatprep.subr.mxu0 0.0
  %119 = vmatpush1.msra.mxu0 0.0
  %120 = vmatprep.subr.mxu0 0.0
  %121 = vmatpush1.msra.mxu0 0.0
  %122 = vmatprep.subr.mxu0 0.0
  %123 = vmatpush1.msra.mxu0 0.0
  %124 = vmatprep.subr.mxu0 0.0
  %125 = vmatpush1.msra.mxu0 0.0
  %126 = vmatprep.subr.mxu0 0.0
  %127 = vmatpush1.msra.mxu0 0.0
  %128 = vmatprep.mubr.f32.mxu0 0.0
  %129 = vmatmul.mubr.f32.gmra.mrb[0].mxu0 %v41
  %v130 = vpop.f32.mrb[0].mxu0
  %v131 = vadd.f32 %v37, %v130
  %v132 = vpop.f32.mrb[0].mxu0
  %133 = vmatprep.mubr.f32.mxu0 0.0
  %134 = vmatmul.mubr.f32.gmra.mrb[0].mxu0 %v44
  %v135 = vpop.f32.mrb[0].mxu0
  %v136 = vadd.f32 %v37, %v135
  %v137 = vpop.f32.mrb[0].mxu0
  %138 = vmatprep.mubr.f32.mxu0 0.0
  %139 = vmatmul.mubr.f32.gmra.mrb[0].mxu0 %v47
  %v140 = vpop.f32.mrb[0].mxu0
  %v141 = vadd.f32 %v37, %v140
  %v142 = vpop.f32.mrb[0].mxu0
  %143 = vmatprep.mubr.f32.mxu0 0.0
  %144 = vmatmul.mubr.f32.gmra.mrb[0].mxu0 %v50
  %v145 = vpop.f32.mrb[0].mxu0
  %v146 = vadd.f32 %v37, %v145
  %v147 = vpop.f32.mrb[0].mxu0
  %148 = vmatprep.mubr.f32.mxu0 0.0
  %149 = vmatmul.mubr.f32.gmra.mrb[0].mxu0 %v53
  %v150 = vpop.f32.mrb[0].mxu0
  %v151 = vadd.f32 %v37, %v150
  %v152 = vpop.f32.mrb[0].mxu0
  %153 = vmatprep.mubr.f32.mxu0 0.0
  %154 = vmatmul.mubr.f32.gmra.mrb[0].mxu0 %v56
  %v155 = vpop.f32.mrb[0].mxu0
  %v156 = vadd.f32 %v37, %v155
  %v157 = vpop.f32.mrb[0].mxu0
  %158 = vmatprep.mubr.f32.mxu0 0.0
  %159 = vmatmul.mubr.f32.gmra.mrb[0].mxu0 %v59
  %v160 = vpop.f32.mrb[0].mxu0
  %v161 = vadd.f32 %v37, %v160
  %v162 = vpop.f32.mrb[0].mxu0
  %163 = vmatprep.mubr.f32.mxu0 0.0
  %164 = vmatmul.mubr.f32.gmra.mrb[0].mxu0 %v62
  %v165 = vpop.f32.mrb[0].mxu0
  %v166 = vadd.f32 %v37, %v165
  %v167 = vpop.f32.mrb[0].mxu0
  %168 = vdwg.mxu0
  %171 = vrot.lane.b32.xlu0 %v131, 96
  %v172 = vpop.permute.xlu0 %171
  %173 = vrot.lane.b32.xlu0 %v136, 96
  %v174 = vpop.permute.xlu0 %173
  %vm175 = vcmask 64512
  %v176 = vsel %vm175, %v131, 0
  %v178 = vsel %vm175, %v136, 0
  %v180 = vsel %vm175, %v172, 0
  %v182 = vsel %vm175, %v174, 0
  %184 = vmatprep.subr.mxu0 0.0
  %185 = vmatpush1.xpose.msra.mxu0 %v180
  %186 = vmatprep.subr.mxu0 0.0
  %187 = vmatpush1.xpose.msra.mxu0 %v182
  %188 = vmatprep.subr.mxu0 0.0
  %189 = vmatpush1.xpose.msra.mxu0 0.0
  %190 = vmatprep.subr.mxu0 0.0
  %191 = vmatpush1.xpose.msra.mxu0 0.0
  %192 = vmatprep.subr.mxu0 0.0
  %193 = vmatpush1.xpose.msra.mxu0 0.0
  %194 = vmatprep.subr.mxu0 0.0
  %195 = vmatpush1.xpose.msra.mxu0 0.0
  %196 = vmatprep.subr.mxu0 0.0
  %197 = vmatpush1.xpose.msra.mxu0 0.0
  %198 = vmatprep.subr.mxu0 0.0
  %199 = vmatpush1.xpose.msra.mxu0 0.0
  %200 = vmatprep.subr.mxu0 0.0
  %201 = vmatpush1.xpose.msra.mxu0 0.0
  %202 = vmatprep.subr.mxu0 0.0
  %203 = vmatpush1.xpose.msra.mxu0 0.0
  %204 = vmatprep.subr.mxu0 0.0
  %205 = vmatpush1.xpose.msra.mxu0 0.0
  %206 = vmatprep.subr.mxu0 0.0
  %207 = vmatpush1.xpose.msra.mxu0 0.0
  %208 = vmatprep.subr.mxu0 0.0
  %209 = vmatpush1.xpose.msra.mxu0 0.0
  %210 = vmatprep.subr.mxu0 0.0
  %211 = vmatpush1.xpose.msra.mxu0 0.0
  %212 = vmatprep.subr.mxu0 0.0
  %213 = vmatpush1.xpose.msra.mxu0 0.0
  %214 = vmatprep.subr.mxu0 0.0
  %215 = vmatpush1.xpose.msra.mxu0 0.0
  %216 = vmatprep.subr.mxu0 0.0
  %217 = vmatpush1.xpose.msra.mxu0 0.0
  %218 = vmatprep.subr.mxu0 0.0
  %219 = vmatpush1.xpose.msra.mxu0 0.0
  %220 = vmatprep.subr.mxu0 0.0
  %221 = vmatpush1.xpose.msra.mxu0 0.0
  %222 = vmatprep.subr.mxu0 0.0
  %223 = vmatpush1.xpose.msra.mxu0 0.0
  %224 = vmatprep.subr.mxu0 0.0
  %225 = vmatpush1.xpose.msra.mxu0 0.0
  %226 = vmatprep.subr.mxu0 0.0
  %227 = vmatpush1.xpose.msra.mxu0 0.0
  %228 = vmatprep.subr.mxu0 0.0
  %229 = vmatpush1.xpose.msra.mxu0 0.0
  %230 = vmatprep.subr.mxu0 0.0
  %231 = vmatpush1.xpose.msra.mxu0 0.0
  %232 = vmatprep.subr.mxu0 0.0
  %233 = vmatpush1.xpose.msra.mxu0 0.0
  %234 = vmatprep.subr.mxu0 0.0
  %235 = vmatpush1.xpose.msra.mxu0 0.0
  %236 = vmatprep.subr.mxu0 0.0
  %237 = vmatpush1.xpose.msra.mxu0 0.0
  %238 = vmatprep.subr.mxu0 0.0
  %239 = vmatpush1.xpose.msra.mxu0 0.0
  %240 = vmatprep.subr.mxu0 0.0
  %241 = vmatpush1.xpose.msra.mxu0 0.0
  %242 = vmatprep.subr.mxu0 0.0
  %243 = vmatpush1.xpose.msra.mxu0 0.0
  %244 = vmatprep.subr.mxu0 0.0
  %245 = vmatpush1.xpose.msra.mxu0 0.0
  %246 = vmatprep.subr.mxu0 0.0
  %247 = vmatpush1.xpose.msra.mxu0 0.0
  %248 = vmatprep.mubr.f32.mxu0 0.0
  %249 = vmatmul.mubr.f32.gmra.mrb[0].mxu0 %v176
  %v250 = vpop.f32.mrb[0].mxu0
  %v251 = vadd.f32 0.0, %v250
  %v252 = vpop.f32.mrb[0].mxu0
  %253 = vmatprep.mubr.f32.mxu0 0.0
  %254 = vmatmul.mubr.f32.gmra.mrb[0].mxu0 %v178
  %v255 = vpop.f32.mrb[0].mxu0
  %v256 = vadd.f32 0.0, %v255
  %v257 = vpop.f32.mrb[0].mxu0
  %258 = vdwg.mxu0
  %261 = vrot.lane.b32.xlu0 %v141, 96
  %v262 = vpop.permute.xlu0 %261
  %263 = vrot.lane.b32.xlu0 %v146, 96
  %v264 = vpop.permute.xlu0 %263
  %v265 = vsel %vm175, %v141, 0
  %v267 = vsel %vm175, %v146, 0
  %v269 = vsel %vm175, %v262, 0
  %v271 = vsel %vm175, %v264, 0
  %273 = vmatprep.subr.mxu0 0.0
  %274 = vmatpush1.xpose.msra.mxu0 %v269
  %275 = vmatprep.subr.mxu0 0.0
  %276 = vmatpush1.xpose.msra.mxu0 %v271
  %277 = vmatprep.subr.mxu0 0.0
  %278 = vmatpush1.xpose.msra.mxu0 0.0
  %279 = vmatprep.subr.mxu0 0.0
  %280 = vmatpush1.xpose.msra.mxu0 0.0
  %281 = vmatprep.subr.mxu0 0.0
  %282 = vmatpush1.xpose.msra.mxu0 0.0
  %283 = vmatprep.subr.mxu0 0.0
  %284 = vmatpush1.xpose.msra.mxu0 0.0
  %285 = vmatprep.subr.mxu0 0.0
  %286 = vmatpush1.xpose.msra.mxu0 0.0
  %287 = vmatprep.subr.mxu0 0.0
  %288 = vmatpush1.xpose.msra.mxu0 0.0
  %289 = vmatprep.subr.mxu0 0.0
  %290 = vmatpush1.xpose.msra.mxu0 0.0
  %291 = vmatprep.subr.mxu0 0.0
  %292 = vmatpush1.xpose.msra.mxu0 0.0
  %293 = vmatprep.subr.mxu0 0.0
  %294 = vmatpush1.xpose.msra.mxu0 0.0
  %295 = vmatprep.subr.mxu0 0.0
  %296 = vmatpush1.xpose.msra.mxu0 0.0
  %297 = vmatprep.subr.mxu0 0.0
  %298 = vmatpush1.xpose.msra.mxu0 0.0
  %299 = vmatprep.subr.mxu0 0.0
  %300 = vmatpush1.xpose.msra.mxu0 0.0
  %301 = vmatprep.subr.mxu0 0.0
  %302 = vmatpush1.xpose.msra.mxu0 0.0
  %303 = vmatprep.subr.mxu0 0.0
  %304 = vmatpush1.xpose.msra.mxu0 0.0
  %305 = vmatprep.subr.mxu0 0.0
  %306 = vmatpush1.xpose.msra.mxu0 0.0
  %307 = vmatprep.subr.mxu0 0.0
  %308 = vmatpush1.xpose.msra.mxu0 0.0
  %309 = vmatprep.subr.mxu0 0.0
  %310 = vmatpush1.xpose.msra.mxu0 0.0
  %311 = vmatprep.subr.mxu0 0.0
  %312 = vmatpush1.xpose.msra.mxu0 0.0
  %313 = vmatprep.subr.mxu0 0.0
  %314 = vmatpush1.xpose.msra.mxu0 0.0
  %315 = vmatprep.subr.mxu0 0.0
  %316 = vmatpush1.xpose.msra.mxu0 0.0
  %317 = vmatprep.subr.mxu0 0.0
  %318 = vmatpush1.xpose.msra.mxu0 0.0
  %319 = vmatprep.subr.mxu0 0.0
  %320 = vmatpush1.xpose.msra.mxu0 0.0
  %321 = vmatprep.subr.mxu0 0.0
  %322 = vmatpush1.xpose.msra.mxu0 0.0
  %323 = vmatprep.subr.mxu0 0.0
  %324 = vmatpush1.xpose.msra.mxu0 0.0
  %325 = vmatprep.subr.mxu0 0.0
  %326 = vmatpush1.xpose.msra.mxu0 0.0
  %327 = vmatprep.subr.mxu0 0.0
  %328 = vmatpush1.xpose.msra.mxu0 0.0
  %329 = vmatprep.subr.mxu0 0.0
  %330 = vmatpush1.xpose.msra.mxu0 0.0
  %331 = vmatprep.subr.mxu0 0.0
  %332 = vmatpush1.xpose.msra.mxu0 0.0
  %333 = vmatprep.subr.mxu0 0.0
  %334 = vmatpush1.xpose.msra.mxu0 0.0
  %335 = vmatprep.subr.mxu0 0.0
  %336 = vmatpush1.xpose.msra.mxu0 0.0
  %337 = vmatprep.mubr.f32.mxu0 0.0
  %338 = vmatmul.mubr.f32.gmra.mrb[0].mxu0 %v265
  %v339 = vpop.f32.mrb[0].mxu0
  %v340 = vadd.f32 0.0, %v339
  %v341 = vpop.f32.mrb[0].mxu0
  %342 = vmatprep.mubr.f32.mxu0 0.0
  %343 = vmatmul.mubr.f32.gmra.mrb[0].mxu0 %v267
  %v344 = vpop.f32.mrb[0].mxu0
  %v345 = vadd.f32 0.0, %v344
  %v346 = vpop.f32.mrb[0].mxu0
  %347 = vdwg.mxu0
  %350 = vrot.lane.b32.xlu0 %v151, 96
  %v351 = vpop.permute.xlu0 %350
  %352 = vrot.lane.b32.xlu0 %v156, 96
  %v353 = vpop.permute.xlu0 %352
  %v354 = vsel %vm175, %v151, 0
  %v356 = vsel %vm175, %v156, 0
  %v358 = vsel %vm175, %v351, 0
  %v360 = vsel %vm175, %v353, 0
  %362 = vmatprep.subr.mxu0 0.0
  %363 = vmatpush1.xpose.msra.mxu0 %v358
  %364 = vmatprep.subr.mxu0 0.0
  %365 = vmatpush1.xpose.msra.mxu0 %v360
  %366 = vmatprep.subr.mxu0 0.0
  %367 = vmatpush1.xpose.msra.mxu0 0.0
  %368 = vmatprep.subr.mxu0 0.0
  %369 = vmatpush1.xpose.msra.mxu0 0.0
  %370 = vmatprep.subr.mxu0 0.0
  %371 = vmatpush1.xpose.msra.mxu0 0.0
  %372 = vmatprep.subr.mxu0 0.0
  %373 = vmatpush1.xpose.msra.mxu0 0.0
  %374 = vmatprep.subr.mxu0 0.0
  %375 = vmatpush1.xpose.msra.mxu0 0.0
  %376 = vmatprep.subr.mxu0 0.0
  %377 = vmatpush1.xpose.msra.mxu0 0.0
  %378 = vmatprep.subr.mxu0 0.0
  %379 = vmatpush1.xpose.msra.mxu0 0.0
  %380 = vmatprep.subr.mxu0 0.0
  %381 = vmatpush1.xpose.msra.mxu0 0.0
  %382 = vmatprep.subr.mxu0 0.0
  %383 = vmatpush1.xpose.msra.mxu0 0.0
  %384 = vmatprep.subr.mxu0 0.0
  %385 = vmatpush1.xpose.msra.mxu0 0.0
  %386 = vmatprep.subr.mxu0 0.0
  %387 = vmatpush1.xpose.msra.mxu0 0.0
  %388 = vmatprep.subr.mxu0 0.0
  %389 = vmatpush1.xpose.msra.mxu0 0.0
  %390 = vmatprep.subr.mxu0 0.0
  %391 = vmatpush1.xpose.msra.mxu0 0.0
  %392 = vmatprep.subr.mxu0 0.0
  %393 = vmatpush1.xpose.msra.mxu0 0.0
  %394 = vmatprep.subr.mxu0 0.0
  %395 = vmatpush1.xpose.msra.mxu0 0.0
  %396 = vmatprep.subr.mxu0 0.0
  %397 = vmatpush1.xpose.msra.mxu0 0.0
  %398 = vmatprep.subr.mxu0 0.0
  %399 = vmatpush1.xpose.msra.mxu0 0.0
  %400 = vmatprep.subr.mxu0 0.0
  %401 = vmatpush1.xpose.msra.mxu0 0.0
  %402 = vmatprep.subr.mxu0 0.0
  %403 = vmatpush1.xpose.msra.mxu0 0.0
  %404 = vmatprep.subr.mxu0 0.0
  %405 = vmatpush1.xpose.msra.mxu0 0.0
  %406 = vmatprep.subr.mxu0 0.0
  %407 = vmatpush1.xpose.msra.mxu0 0.0
  %408 = vmatprep.subr.mxu0 0.0
  %409 = vmatpush1.xpose.msra.mxu0 0.0
  %410 = vmatprep.subr.mxu0 0.0
  %411 = vmatpush1.xpose.msra.mxu0 0.0
  %412 = vmatprep.subr.mxu0 0.0
  %413 = vmatpush1.xpose.msra.mxu0 0.0
  %414 = vmatprep.subr.mxu0 0.0
  %415 = vmatpush1.xpose.msra.mxu0 0.0
  %416 = vmatprep.subr.mxu0 0.0
  %417 = vmatpush1.xpose.msra.mxu0 0.0
  %418 = vmatprep.subr.mxu0 0.0
  %419 = vmatpush1.xpose.msra.mxu0 0.0
  %420 = vmatprep.subr.mxu0 0.0
  %421 = vmatpush1.xpose.msra.mxu0 0.0
  %422 = vmatprep.subr.mxu0 0.0
  %423 = vmatpush1.xpose.msra.mxu0 0.0
  %424 = vmatprep.subr.mxu0 0.0
  %425 = vmatpush1.xpose.msra.mxu0 0.0
  %426 = vmatprep.mubr.f32.mxu0 0.0
  %427 = vmatmul.mubr.f32.gmra.mrb[0].mxu0 %v354
  %v428 = vpop.f32.mrb[0].mxu0
  %v429 = vadd.f32 0.0, %v428
  %v430 = vpop.f32.mrb[0].mxu0
  %431 = vmatprep.mubr.f32.mxu0 0.0
  %432 = vmatmul.mubr.f32.gmra.mrb[0].mxu0 %v356
  %v433 = vpop.f32.mrb[0].mxu0
  %v434 = vadd.f32 0.0, %v433
  %v435 = vpop.f32.mrb[0].mxu0
  %436 = vdwg.mxu0
  %439 = vrot.lane.b32.xlu0 %v161, 96
  %v440 = vpop.permute.xlu0 %439
  %441 = vrot.lane.b32.xlu0 %v166, 96
  %v442 = vpop.permute.xlu0 %441
  %v443 = vsel %vm175, %v161, 0
  %v445 = vsel %vm175, %v166, 0
  %v447 = vsel %vm175, %v440, 0
  %v449 = vsel %vm175, %v442, 0
  %451 = vmatprep.subr.mxu0 0.0
  %452 = vmatpush1.xpose.msra.mxu0 %v447
  %453 = vmatprep.subr.mxu0 0.0
  %454 = vmatpush1.xpose.msra.mxu0 %v449
  %455 = vmatprep.subr.mxu0 0.0
  %456 = vmatpush1.xpose.msra.mxu0 0.0
  %457 = vmatprep.subr.mxu0 0.0
  %458 = vmatpush1.xpose.msra.mxu0 0.0
  %459 = vmatprep.subr.mxu0 0.0
  %460 = vmatpush1.xpose.msra.mxu0 0.0
  %461 = vmatprep.subr.mxu0 0.0
  %462 = vmatpush1.xpose.msra.mxu0 0.0
  %463 = vmatprep.subr.mxu0 0.0
  %464 = vmatpush1.xpose.msra.mxu0 0.0
  %465 = vmatprep.subr.mxu0 0.0
  %466 = vmatpush1.xpose.msra.mxu0 0.0
  %467 = vmatprep.subr.mxu0 0.0
  %468 = vmatpush1.xpose.msra.mxu0 0.0
  %469 = vmatprep.subr.mxu0 0.0
  %470 = vmatpush1.xpose.msra.mxu0 0.0
  %471 = vmatprep.subr.mxu0 0.0
  %472 = vmatpush1.xpose.msra.mxu0 0.0
  %473 = vmatprep.subr.mxu0 0.0
  %474 = vmatpush1.xpose.msra.mxu0 0.0
  %475 = vmatprep.subr.mxu0 0.0
  %476 = vmatpush1.xpose.msra.mxu0 0.0
  %477 = vmatprep.subr.mxu0 0.0
  %478 = vmatpush1.xpose.msra.mxu0 0.0
  %479 = vmatprep.subr.mxu0 0.0
  %480 = vmatpush1.xpose.msra.mxu0 0.0
  %481 = vmatprep.subr.mxu0 0.0
  %482 = vmatpush1.xpose.msra.mxu0 0.0
  %483 = vmatprep.subr.mxu0 0.0
  %484 = vmatpush1.xpose.msra.mxu0 0.0
  %485 = vmatprep.subr.mxu0 0.0
  %486 = vmatpush1.xpose.msra.mxu0 0.0
  %487 = vmatprep.subr.mxu0 0.0
  %488 = vmatpush1.xpose.msra.mxu0 0.0
  %489 = vmatprep.subr.mxu0 0.0
  %490 = vmatpush1.xpose.msra.mxu0 0.0
  %491 = vmatprep.subr.mxu0 0.0
  %492 = vmatpush1.xpose.msra.mxu0 0.0
  %493 = vmatprep.subr.mxu0 0.0
  %494 = vmatpush1.xpose.msra.mxu0 0.0
  %495 = vmatprep.subr.mxu0 0.0
  %496 = vmatpush1.xpose.msra.mxu0 0.0
  %497 = vmatprep.subr.mxu0 0.0
  %498 = vmatpush1.xpose.msra.mxu0 0.0
  %499 = vmatprep.subr.mxu0 0.0
  %500 = vmatpush1.xpose.msra.mxu0 0.0
  %501 = vmatprep.subr.mxu0 0.0
  %502 = vmatpush1.xpose.msra.mxu0 0.0
  %503 = vmatprep.subr.mxu0 0.0
  %504 = vmatpush1.xpose.msra.mxu0 0.0
  %505 = vmatprep.subr.mxu0 0.0
  %506 = vmatpush1.xpose.msra.mxu0 0.0
  %507 = vmatprep.subr.mxu0 0.0
  %508 = vmatpush1.xpose.msra.mxu0 0.0
  %509 = vmatprep.subr.mxu0 0.0
  %510 = vmatpush1.xpose.msra.mxu0 0.0
  %511 = vmatprep.subr.mxu0 0.0
  %512 = vmatpush1.xpose.msra.mxu0 0.0
  %513 = vmatprep.subr.mxu0 0.0
  %514 = vmatpush1.xpose.msra.mxu0 0.0
  %515 = vmatprep.mubr.f32.mxu0 0.0
  %516 = vmatmul.mubr.f32.gmra.mrb[0].mxu0 %v443
  %v517 = vpop.f32.mrb[0].mxu0
  %v518 = vadd.f32 0.0, %v517
  %v519 = vpop.f32.mrb[0].mxu0
  %520 = vmatprep.mubr.f32.mxu0 0.0
  %521 = vmatmul.mubr.f32.gmra.mrb[0].mxu0 %v445
  %v522 = vpop.f32.mrb[0].mxu0
  %v523 = vadd.f32 0.0, %v522
  %v524 = vpop.f32.mrb[0].mxu0
  %525 = vdwg.mxu0
  %vm526 = vcmask 130048
  %v527 = vsel %vm526, %v251, -inf
  %528 = vmax.xlane.f32.xlu0 %v527
  %v529 = vpop.xlane.xlu0 %528
  %v530 = vsel %vm526, %v256, -inf
  %531 = vmax.xlane.f32.xlu0 %v530
  %v532 = vpop.xlane.xlu0 %531
  %v533 = vsel %vm526, %v340, -inf
  %534 = vmax.xlane.f32.xlu0 %v533
  %v535 = vpop.xlane.xlu0 %534
  %v536 = vsel %vm526, %v345, -inf
  %537 = vmax.xlane.f32.xlu0 %v536
  %v538 = vpop.xlane.xlu0 %537
  %v539 = vsel %vm526, %v429, -inf
  %540 = vmax.xlane.f32.xlu0 %v539
  %v541 = vpop.xlane.xlu0 %540
  %v542 = vsel %vm526, %v434, -inf
  %543 = vmax.xlane.f32.xlu0 %v542
  %v544 = vpop.xlane.xlu0 %543
  %v545 = vsel %vm526, %v518, -inf
  %546 = vmax.xlane.f32.xlu0 %v545
  %v547 = vpop.xlane.xlu0 %546
  %v548 = vsel %vm526, %v523, -inf
  %549 = vmax.xlane.f32.xlu0 %v548
  %v550 = vpop.xlane.xlu0 %549
  %v551 = vsub.f32 %v251, %v529
  %v552 = vsub.f32 %v256, %v532
  %v553 = vsub.f32 %v340, %v535
  %v554 = vsub.f32 %v345, %v538
  %v555 = vsub.f32 %v429, %v541
  %v556 = vsub.f32 %v434, %v544
  %v557 = vsub.f32 %v518, %v547
  %v558 = vsub.f32 %v523, %v550
  %v559 = vmul.f32 %v551, 1.442695
  %v560 = vpow.pop %v559
  %v561 = vmul.f32 %v552, 1.442695
  %v562 = vpow.pop %v561
  %v563 = vmul.f32 %v553, 1.442695
  %v564 = vpow.pop %v563
  %v565 = vmul.f32 %v554, 1.442695
  %v566 = vpow.pop %v565
  %v567 = vmul.f32 %v555, 1.442695
  %v568 = vpow.pop %v567
  %v569 = vmul.f32 %v556, 1.442695
  %v570 = vpow.pop %v569
  %v571 = vmul.f32 %v557, 1.442695
  %v572 = vpow.pop %v571
  %v573 = vmul.f32 %v558, 1.442695
  %v574 = vpow.pop %v573
  %v575 = vsel %vm526, %v560, 0.0
  %576 = vadd.xlane.f32.xlu0 %v575
  %v577 = vpop.xlane.xlu0 %576
  %v578 = vsel %vm526, %v562, 0.0
  %579 = vadd.xlane.f32.xlu0 %v578
  %v580 = vpop.xlane.xlu0 %579
  %v581 = vsel %vm526, %v564, 0.0
  %582 = vadd.xlane.f32.xlu0 %v581
  %v583 = vpop.xlane.xlu0 %582
  %v584 = vsel %vm526, %v566, 0.0
  %585 = vadd.xlane.f32.xlu0 %v584
  %v586 = vpop.xlane.xlu0 %585
  %v587 = vsel %vm526, %v568, 0.0
  %588 = vadd.xlane.f32.xlu0 %v587
  %v589 = vpop.xlane.xlu0 %588
  %v590 = vsel %vm526, %v570, 0.0
  %591 = vadd.xlane.f32.xlu0 %v590
  %v592 = vpop.xlane.xlu0 %591
  %v593 = vsel %vm526, %v572, 0.0
  %594 = vadd.xlane.f32.xlu0 %v593
  %v595 = vpop.xlane.xlu0 %594
  %v596 = vsel %vm526, %v574, 0.0
  %597 = vadd.xlane.f32.xlu0 %v596
  %v598 = vpop.xlane.xlu0 %597
  %v599 = vrcp.pop %v577
  %v600 = vrcp.pop %v580
  %v601 = vrcp.pop %v583
  %v602 = vrcp.pop %v586
  %v603 = vrcp.pop %v589
  %v604 = vrcp.pop %v592
  %v605 = vrcp.pop %v595
  %v606 = vrcp.pop %v598
  %v607 = vmul.f32 %v560, %v599
  %v608 = vmul.f32 %v562, %v600
  %v609 = vmul.f32 %v564, %v601
  %v610 = vmul.f32 %v566, %v602
  %v611 = vmul.f32 %v568, %v603
  %v612 = vmul.f32 %v570, %v604
  %v613 = vmul.f32 %v572, %v605
  %v614 = vmul.f32 %v574, %v606
  %615 = vrot.lane.b32.xlu0 %v131, 64
  %v616 = vpop.permute.xlu0 %615
  %617 = vrot.lane.b32.xlu0 %v136, 64
  %v618 = vpop.permute.xlu0 %617
  %v622 = vsel %vm526, %v607, 0
  %v625 = vsel %vm526, %v608, 0
  %627 = vmatprep.subr.mxu0 0.0
  %628 = vmatpush1.msra.mxu0 %v616
  %629 = vmatprep.subr.mxu0 0.0
  %630 = vmatpush1.msra.mxu0 %v618
  %631 = vmatprep.subr.mxu0 0.0
  %632 = vmatpush1.msra.mxu0 0.0
  %633 = vmatprep.subr.mxu0 0.0
  %634 = vmatpush1.msra.mxu0 0.0
  %635 = vmatprep.subr.mxu0 0.0
  %636 = vmatpush1.msra.mxu0 0.0
  %637 = vmatprep.subr.mxu0 0.0
  %638 = vmatpush1.msra.mxu0 0.0
  %639 = vmatprep.subr.mxu0 0.0
  %640 = vmatpush1.msra.mxu0 0.0
  %641 = vmatprep.subr.mxu0 0.0
  %642 = vmatpush1.msra.mxu0 0.0
  %643 = vmatprep.subr.mxu0 0.0
  %644 = vmatpush1.msra.mxu0 0.0
  %645 = vmatprep.subr.mxu0 0.0
  %646 = vmatpush1.msra.mxu0 0.0
  %647 = vmatprep.subr.mxu0 0.0
  %648 = vmatpush1.msra.mxu0 0.0
  %649 = vmatprep.subr.mxu0 0.0
  %650 = vmatpush1.msra.mxu0 0.0
  %651 = vmatprep.subr.mxu0 0.0
  %652 = vmatpush1.msra.mxu0 0.0
  %653 = vmatprep.subr.mxu0 0.0
  %654 = vmatpush1.msra.mxu0 0.0
  %655 = vmatprep.subr.mxu0 0.0
  %656 = vmatpush1.msra.mxu0 0.0
  %657 = vmatprep.subr.mxu0 0.0
  %658 = vmatpush1.msra.mxu0 0.0
  %659 = vmatprep.subr.mxu0 0.0
  %660 = vmatpush1.msra.mxu0 0.0
  %661 = vmatprep.subr.mxu0 0.0
  %662 = vmatpush1.msra.mxu0 0.0
  %663 = vmatprep.subr.mxu0 0.0
  %664 = vmatpush1.msra.mxu0 0.0
  %665 = vmatprep.subr.mxu0 0.0
  %666 = vmatpush1.msra.mxu0 0.0
  %667 = vmatprep.subr.mxu0 0.0
  %668 = vmatpush1.msra.mxu0 0.0
  %669 = vmatprep.subr.mxu0 0.0
  %670 = vmatpush1.msra.mxu0 0.0
  %671 = vmatprep.subr.mxu0 0.0
  %672 = vmatpush1.msra.mxu0 0.0
  %673 = vmatprep.subr.mxu0 0.0
  %674 = vmatpush1.msra.mxu0 0.0
  %675 = vmatprep.subr.mxu0 0.0
  %676 = vmatpush1.msra.mxu0 0.0
  %677 = vmatprep.subr.mxu0 0.0
  %678 = vmatpush1.msra.mxu0 0.0
  %679 = vmatprep.subr.mxu0 0.0
  %680 = vmatpush1.msra.mxu0 0.0
  %681 = vmatprep.subr.mxu0 0.0
  %682 = vmatpush1.msra.mxu0 0.0
  %683 = vmatprep.subr.mxu0 0.0
  %684 = vmatpush1.msra.mxu0 0.0
  %685 = vmatprep.subr.mxu0 0.0
  %686 = vmatpush1.msra.mxu0 0.0
  %687 = vmatprep.subr.mxu0 0.0
  %688 = vmatpush1.msra.mxu0 0.0
  %689 = vmatprep.subr.mxu0 0.0
  %690 = vmatpush1.msra.mxu0 0.0
  %691 = vmatprep.mubr.f32.mxu0 0.0
  %692 = vmatmul.mubr.f32.gmra.mrb[0].mxu0 %v622
  %v693 = vpop.f32.mrb[0].mxu0
  %v694 = vadd.f32 0.0, %v693
  %v695 = vpop.f32.mrb[0].mxu0
  %696 = vmatprep.mubr.f32.mxu0 0.0
  %697 = vmatmul.mubr.f32.gmra.mrb[0].mxu0 %v625
  %v698 = vpop.f32.mrb[0].mxu0
  %v699 = vadd.f32 0.0, %v698
  %v700 = vpop.f32.mrb[0].mxu0
  %701 = vdwg.mxu0
  %702 = vrot.lane.b32.xlu0 %v141, 64
  %v703 = vpop.permute.xlu0 %702
  %704 = vrot.lane.b32.xlu0 %v146, 64
  %v705 = vpop.permute.xlu0 %704
  %v709 = vsel %vm526, %v609, 0
  %v712 = vsel %vm526, %v610, 0
  %714 = vmatprep.subr.mxu0 0.0
  %715 = vmatpush1.msra.mxu0 %v703
  %716 = vmatprep.subr.mxu0 0.0
  %717 = vmatpush1.msra.mxu0 %v705
  %718 = vmatprep.subr.mxu0 0.0
  %719 = vmatpush1.msra.mxu0 0.0
  %720 = vmatprep.subr.mxu0 0.0
  %721 = vmatpush1.msra.mxu0 0.0
  %722 = vmatprep.subr.mxu0 0.0
  %723 = vmatpush1.msra.mxu0 0.0
  %724 = vmatprep.subr.mxu0 0.0
  %725 = vmatpush1.msra.mxu0 0.0
  %726 = vmatprep.subr.mxu0 0.0
  %727 = vmatpush1.msra.mxu0 0.0
  %728 = vmatprep.subr.mxu0 0.0
  %729 = vmatpush1.msra.mxu0 0.0
  %730 = vmatprep.subr.mxu0 0.0
  %731 = vmatpush1.msra.mxu0 0.0
  %732 = vmatprep.subr.mxu0 0.0
  %733 = vmatpush1.msra.mxu0 0.0
  %734 = vmatprep.subr.mxu0 0.0
  %735 = vmatpush1.msra.mxu0 0.0
  %736 = vmatprep.subr.mxu0 0.0
  %737 = vmatpush1.msra.mxu0 0.0
  %738 = vmatprep.subr.mxu0 0.0
  %739 = vmatpush1.msra.mxu0 0.0
  %740 = vmatprep.subr.mxu0 0.0
  %741 = vmatpush1.msra.mxu0 0.0
  %742 = vmatprep.subr.mxu0 0.0
  %743 = vmatpush1.msra.mxu0 0.0
  %744 = vmatprep.subr.mxu0 0.0
  %745 = vmatpush1.msra.mxu0 0.0
  %746 = vmatprep.subr.mxu0 0.0
  %747 = vmatpush1.msra.mxu0 0.0
  %748 = vmatprep.subr.mxu0 0.0
  %749 = vmatpush1.msra.mxu0 0.0
  %750 = vmatprep.subr.mxu0 0.0
  %751 = vmatpush1.msra.mxu0 0.0
  %752 = vmatprep.subr.mxu0 0.0
  %753 = vmatpush1.msra.mxu0 0.0
  %754 = vmatprep.subr.mxu0 0.0
  %755 = vmatpush1.msra.mxu0 0.0
  %756 = vmatprep.subr.mxu0 0.0
  %757 = vmatpush1.msra.mxu0 0.0
  %758 = vmatprep.subr.mxu0 0.0
  %759 = vmatpush1.msra.mxu0 0.0
  %760 = vmatprep.subr.mxu0 0.0
  %761 = vmatpush1.msra.mxu0 0.0
  %762 = vmatprep.subr.mxu0 0.0
  %763 = vmatpush1.msra.mxu0 0.0
  %764 = vmatprep.subr.mxu0 0.0
  %765 = vmatpush1.msra.mxu0 0.0
  %766 = vmatprep.subr.mxu0 0.0
  %767 = vmatpush1.msra.mxu0 0.0
  %768 = vmatprep.subr.mxu0 0.0
  %769 = vmatpush1.msra.mxu0 0.0
  %770 = vmatprep.subr.mxu0 0.0
  %771 = vmatpush1.msra.mxu0 0.0
  %772 = vmatprep.subr.mxu0 0.0
  %773 = vmatpush1.msra.mxu0 0.0
  %774 = vmatprep.subr.mxu0 0.0
  %775 = vmatpush1.msra.mxu0 0.0
  %776 = vmatprep.subr.mxu0 0.0
  %777 = vmatpush1.msra.mxu0 0.0
  %778 = vmatprep.mubr.f32.mxu0 0.0
  %779 = vmatmul.mubr.f32.gmra.mrb[0].mxu0 %v709
  %v780 = vpop.f32.mrb[0].mxu0
  %v781 = vadd.f32 0.0, %v780
  %v782 = vpop.f32.mrb[0].mxu0
  %783 = vmatprep.mubr.f32.mxu0 0.0
  %784 = vmatmul.mubr.f32.gmra.mrb[0].mxu0 %v712
  %v785 = vpop.f32.mrb[0].mxu0
  %v786 = vadd.f32 0.0, %v785
  %v787 = vpop.f32.mrb[0].mxu0
  %788 = vdwg.mxu0
  %789 = vrot.lane.b32.xlu0 %v151, 64
  %v790 = vpop.permute.xlu0 %789
  %791 = vrot.lane.b32.xlu0 %v156, 64
  %v792 = vpop.permute.xlu0 %791
  %v796 = vsel %vm526, %v611, 0
  %v799 = vsel %vm526, %v612, 0
  %801 = vmatprep.subr.mxu0 0.0
  %802 = vmatpush1.msra.mxu0 %v790
  %803 = vmatprep.subr.mxu0 0.0
  %804 = vmatpush1.msra.mxu0 %v792
  %805 = vmatprep.subr.mxu0 0.0
  %806 = vmatpush1.msra.mxu0 0.0
  %807 = vmatprep.subr.mxu0 0.0
  %808 = vmatpush1.msra.mxu0 0.0
  %809 = vmatprep.subr.mxu0 0.0
  %810 = vmatpush1.msra.mxu0 0.0
  %811 = vmatprep.subr.mxu0 0.0
  %812 = vmatpush1.msra.mxu0 0.0
  %813 = vmatprep.subr.mxu0 0.0
  %814 = vmatpush1.msra.mxu0 0.0
  %815 = vmatprep.subr.mxu0 0.0
  %816 = vmatpush1.msra.mxu0 0.0
  %817 = vmatprep.subr.mxu0 0.0
  %818 = vmatpush1.msra.mxu0 0.0
  %819 = vmatprep.subr.mxu0 0.0
  %820 = vmatpush1.msra.mxu0 0.0
  %821 = vmatprep.subr.mxu0 0.0
  %822 = vmatpush1.msra.mxu0 0.0
  %823 = vmatprep.subr.mxu0 0.0
  %824 = vmatpush1.msra.mxu0 0.0
  %825 = vmatprep.subr.mxu0 0.0
  %826 = vmatpush1.msra.mxu0 0.0
  %827 = vmatprep.subr.mxu0 0.0
  %828 = vmatpush1.msra.mxu0 0.0
  %829 = vmatprep.subr.mxu0 0.0
  %830 = vmatpush1.msra.mxu0 0.0
  %831 = vmatprep.subr.mxu0 0.0
  %832 = vmatpush1.msra.mxu0 0.0
  %833 = vmatprep.subr.mxu0 0.0
  %834 = vmatpush1.msra.mxu0 0.0
  %835 = vmatprep.subr.mxu0 0.0
  %836 = vmatpush1.msra.mxu0 0.0
  %837 = vmatprep.subr.mxu0 0.0
  %838 = vmatpush1.msra.mxu0 0.0
  %839 = vmatprep.subr.mxu0 0.0
  %840 = vmatpush1.msra.mxu0 0.0
  %841 = vmatprep.subr.mxu0 0.0
  %842 = vmatpush1.msra.mxu0 0.0
  %843 = vmatprep.subr.mxu0 0.0
  %844 = vmatpush1.msra.mxu0 0.0
  %845 = vmatprep.subr.mxu0 0.0
  %846 = vmatpush1.msra.mxu0 0.0
  %847 = vmatprep.subr.mxu0 0.0
  %848 = vmatpush1.msra.mxu0 0.0
  %849 = vmatprep.subr.mxu0 0.0
  %850 = vmatpush1.msra.mxu0 0.0
  %851 = vmatprep.subr.mxu0 0.0
  %852 = vmatpush1.msra.mxu0 0.0
  %853 = vmatprep.subr.mxu0 0.0
  %854 = vmatpush1.msra.mxu0 0.0
  %855 = vmatprep.subr.mxu0 0.0
  %856 = vmatpush1.msra.mxu0 0.0
  %857 = vmatprep.subr.mxu0 0.0
  %858 = vmatpush1.msra.mxu0 0.0
  %859 = vmatprep.subr.mxu0 0.0
  %860 = vmatpush1.msra.mxu0 0.0
  %861 = vmatprep.subr.mxu0 0.0
  %862 = vmatpush1.msra.mxu0 0.0
  %863 = vmatprep.subr.mxu0 0.0
  %864 = vmatpush1.msra.mxu0 0.0
  %865 = vmatprep.mubr.f32.mxu0 0.0
  %866 = vmatmul.mubr.f32.gmra.mrb[0].mxu0 %v796
  %v867 = vpop.f32.mrb[0].mxu0
  %v868 = vadd.f32 0.0, %v867
  %v869 = vpop.f32.mrb[0].mxu0
  %870 = vmatprep.mubr.f32.mxu0 0.0
  %871 = vmatmul.mubr.f32.gmra.mrb[0].mxu0 %v799
  %v872 = vpop.f32.mrb[0].mxu0
  %v873 = vadd.f32 0.0, %v872
  %v874 = vpop.f32.mrb[0].mxu0
  %875 = vdwg.mxu0
  %876 = vrot.lane.b32.xlu0 %v161, 64
  %v877 = vpop.permute.xlu0 %876
  %878 = vrot.lane.b32.xlu0 %v166, 64
  %v879 = vpop.permute.xlu0 %878
  %v883 = vsel %vm526, %v613, 0
  %v886 = vsel %vm526, %v614, 0
  %888 = vmatprep.subr.mxu0 0.0
  %889 = vmatpush1.msra.mxu0 %v877
  %890 = vmatprep.subr.mxu0 0.0
  %891 = vmatpush1.msra.mxu0 %v879
  %892 = vmatprep.subr.mxu0 0.0
  %893 = vmatpush1.msra.mxu0 0.0
  %894 = vmatprep.subr.mxu0 0.0
  %895 = vmatpush1.msra.mxu0 0.0
  %896 = vmatprep.subr.mxu0 0.0
  %897 = vmatpush1.msra.mxu0 0.0
  %898 = vmatprep.subr.mxu0 0.0
  %899 = vmatpush1.msra.mxu0 0.0
  %900 = vmatprep.subr.mxu0 0.0
  %901 = vmatpush1.msra.mxu0 0.0
  %902 = vmatprep.subr.mxu0 0.0
  %903 = vmatpush1.msra.mxu0 0.0
  %904 = vmatprep.subr.mxu0 0.0
  %905 = vmatpush1.msra.mxu0 0.0
  %906 = vmatprep.subr.mxu0 0.0
  %907 = vmatpush1.msra.mxu0 0.0
  %908 = vmatprep.subr.mxu0 0.0
  %909 = vmatpush1.msra.mxu0 0.0
  %910 = vmatprep.subr.mxu0 0.0
  %911 = vmatpush1.msra.mxu0 0.0
  %912 = vmatprep.subr.mxu0 0.0
  %913 = vmatpush1.msra.mxu0 0.0
  %914 = vmatprep.subr.mxu0 0.0
  %915 = vmatpush1.msra.mxu0 0.0
  %916 = vmatprep.subr.mxu0 0.0
  %917 = vmatpush1.msra.mxu0 0.0
  %918 = vmatprep.subr.mxu0 0.0
  %919 = vmatpush1.msra.mxu0 0.0
  %920 = vmatprep.subr.mxu0 0.0
  %921 = vmatpush1.msra.mxu0 0.0
  %922 = vmatprep.subr.mxu0 0.0
  %923 = vmatpush1.msra.mxu0 0.0
  %924 = vmatprep.subr.mxu0 0.0
  %925 = vmatpush1.msra.mxu0 0.0
  %926 = vmatprep.subr.mxu0 0.0
  %927 = vmatpush1.msra.mxu0 0.0
  %928 = vmatprep.subr.mxu0 0.0
  %929 = vmatpush1.msra.mxu0 0.0
  %930 = vmatprep.subr.mxu0 0.0
  %931 = vmatpush1.msra.mxu0 0.0
  %932 = vmatprep.subr.mxu0 0.0
  %933 = vmatpush1.msra.mxu0 0.0
  %934 = vmatprep.subr.mxu0 0.0
  %935 = vmatpush1.msra.mxu0 0.0
  %936 = vmatprep.subr.mxu0 0.0
  %937 = vmatpush1.msra.mxu0 0.0
  %938 = vmatprep.subr.mxu0 0.0
  %939 = vmatpush1.msra.mxu0 0.0
  %940 = vmatprep.subr.mxu0 0.0
  %941 = vmatpush1.msra.mxu0 0.0
  %942 = vmatprep.subr.mxu0 0.0
  %943 = vmatpush1.msra.mxu0 0.0
  %944 = vmatprep.subr.mxu0 0.0
  %945 = vmatpush1.msra.mxu0 0.0
  %946 = vmatprep.subr.mxu0 0.0
  %947 = vmatpush1.msra.mxu0 0.0
  %948 = vmatprep.subr.mxu0 0.0
  %949 = vmatpush1.msra.mxu0 0.0
  %950 = vmatprep.subr.mxu0 0.0
  %951 = vmatpush1.msra.mxu0 0.0
  %952 = vmatprep.mubr.f32.mxu0 0.0
  %953 = vmatmul.mubr.f32.gmra.mrb[0].mxu0 %v883
  %v954 = vpop.f32.mrb[0].mxu0
  %v955 = vadd.f32 0.0, %v954
  %v956 = vpop.f32.mrb[0].mxu0
  %957 = vmatprep.mubr.f32.mxu0 0.0
  %958 = vmatmul.mubr.f32.gmra.mrb[0].mxu0 %v886
  %v959 = vpop.f32.mrb[0].mxu0
  %v960 = vadd.f32 0.0, %v959
  %v961 = vpop.f32.mrb[0].mxu0
  %962 = vdwg.mxu0
  %963 = vrot.lane.b32.xlu0 %v131, 120
  %v964 = vpop.permute.xlu0 %963
  %965 = vrot.lane.b32.xlu0 %v136, 120
  %v966 = vpop.permute.xlu0 %965
  %967 = vrot.lane.b32.xlu0 %v131, 88
  %v968 = vpop.permute.xlu0 %967
  %969 = vrot.lane.b32.xlu0 %v136, 88
  %v970 = vpop.permute.xlu0 %969
  %v971 = vsel %vm175, %v964, 0
  %v973 = vsel %vm175, %v966, 0
  %v975 = vsel %vm175, %v968, 0
  %v977 = vsel %vm175, %v970, 0
  %979 = vmatprep.subr.mxu0 0.0
  %980 = vmatpush1.xpose.msra.mxu0 %v975
  %981 = vmatprep.subr.mxu0 0.0
  %982 = vmatpush1.xpose.msra.mxu0 %v977
  %983 = vmatprep.subr.mxu0 0.0
  %984 = vmatpush1.xpose.msra.mxu0 0.0
  %985 = vmatprep.subr.mxu0 0.0
  %986 = vmatpush1.xpose.msra.mxu0 0.0
  %987 = vmatprep.subr.mxu0 0.0
  %988 = vmatpush1.xpose.msra.mxu0 0.0
  %989 = vmatprep.subr.mxu0 0.0
  %990 = vmatpush1.xpose.msra.mxu0 0.0
  %991 = vmatprep.subr.mxu0 0.0
  %992 = vmatpush1.xpose.msra.mxu0 0.0
  %993 = vmatprep.subr.mxu0 0.0
  %994 = vmatpush1.xpose.msra.mxu0 0.0
  %995 = vmatprep.subr.mxu0 0.0
  %996 = vmatpush1.xpose.msra.mxu0 0.0
  %997 = vmatprep.subr.mxu0 0.0
  %998 = vmatpush1.xpose.msra.mxu0 0.0
  %999 = vmatprep.subr.mxu0 0.0
  %1000 = vmatpush1.xpose.msra.mxu0 0.0
  %1001 = vmatprep.subr.mxu0 0.0
  %1002 = vmatpush1.xpose.msra.mxu0 0.0
  %1003 = vmatprep.subr.mxu0 0.0
  %1004 = vmatpush1.xpose.msra.mxu0 0.0
  %1005 = vmatprep.subr.mxu0 0.0
  %1006 = vmatpush1.xpose.msra.mxu0 0.0
  %1007 = vmatprep.subr.mxu0 0.0
  %1008 = vmatpush1.xpose.msra.mxu0 0.0
  %1009 = vmatprep.subr.mxu0 0.0
  %1010 = vmatpush1.xpose.msra.mxu0 0.0
  %1011 = vmatprep.subr.mxu0 0.0
  %1012 = vmatpush1.xpose.msra.mxu0 0.0
  %1013 = vmatprep.subr.mxu0 0.0
  %1014 = vmatpush1.xpose.msra.mxu0 0.0
  %1015 = vmatprep.subr.mxu0 0.0
  %1016 = vmatpush1.xpose.msra.mxu0 0.0
  %1017 = vmatprep.subr.mxu0 0.0
  %1018 = vmatpush1.xpose.msra.mxu0 0.0
  %1019 = vmatprep.subr.mxu0 0.0
  %1020 = vmatpush1.xpose.msra.mxu0 0.0
  %1021 = vmatprep.subr.mxu0 0.0
  %1022 = vmatpush1.xpose.msra.mxu0 0.0
  %1023 = vmatprep.subr.mxu0 0.0
  %1024 = vmatpush1.xpose.msra.mxu0 0.0
  %1025 = vmatprep.subr.mxu0 0.0
  %1026 = vmatpush1.xpose.msra.mxu0 0.0
  %1027 = vmatprep.subr.mxu0 0.0
  %1028 = vmatpush1.xpose.msra.mxu0 0.0
  %1029 = vmatprep.subr.mxu0 0.0
  %1030 = vmatpush1.xpose.msra.mxu0 0.0
  %1031 = vmatprep.subr.mxu0 0.0
  %1032 = vmatpush1.xpose.msra.mxu0 0.0
  %1033 = vmatprep.subr.mxu0 0.0
  %1034 = vmatpush1.xpose.msra.mxu0 0.0
  %1035 = vmatprep.subr.mxu0 0.0
  %1036 = vmatpush1.xpose.msra.mxu0 0.0
  %1037 = vmatprep.subr.mxu0 0.0
  %1038 = vmatpush1.xpose.msra.mxu0 0.0
  %1039 = vmatprep.subr.mxu0 0.0
  %1040 = vmatpush1.xpose.msra.mxu0 0.0
  %1041 = vmatprep.subr.mxu0 0.0
  %1042 = vmatpush1.xpose.msra.mxu0 0.0
  %1043 = vmatprep.mubr.f32.mxu0 0.0
  %1044 = vmatmul.mubr.f32.gmra.mrb[0].mxu0 %v971
  %v1045 = vpop.f32.mrb[0].mxu0
  %v1046 = vadd.f32 0.0, %v1045
  %v1047 = vpop.f32.mrb[0].mxu0
  %1048 = vmatprep.mubr.f32.mxu0 0.0
  %1049 = vmatmul.mubr.f32.gmra.mrb[0].mxu0 %v973
  %v1050 = vpop.f32.mrb[0].mxu0
  %v1051 = vadd.f32 0.0, %v1050
  %v1052 = vpop.f32.mrb[0].mxu0
  %1053 = vdwg.mxu0
  %1054 = vrot.lane.b32.xlu0 %v141, 120
  %v1055 = vpop.permute.xlu0 %1054
  %1056 = vrot.lane.b32.xlu0 %v146, 120
  %v1057 = vpop.permute.xlu0 %1056
  %1058 = vrot.lane.b32.xlu0 %v141, 88
  %v1059 = vpop.permute.xlu0 %1058
  %1060 = vrot.lane.b32.xlu0 %v146, 88
  %v1061 = vpop.permute.xlu0 %1060
  %v1062 = vsel %vm175, %v1055, 0
  %v1064 = vsel %vm175, %v1057, 0
  %v1066 = vsel %vm175, %v1059, 0
  %v1068 = vsel %vm175, %v1061, 0
  %1070 = vmatprep.subr.mxu0 0.0
  %1071 = vmatpush1.xpose.msra.mxu0 %v1066
  %1072 = vmatprep.subr.mxu0 0.0
  %1073 = vmatpush1.xpose.msra.mxu0 %v1068
  %1074 = vmatprep.subr.mxu0 0.0
  %1075 = vmatpush1.xpose.msra.mxu0 0.0
  %1076 = vmatprep.subr.mxu0 0.0
  %1077 = vmatpush1.xpose.msra.mxu0 0.0
  %1078 = vmatprep.subr.mxu0 0.0
  %1079 = vmatpush1.xpose.msra.mxu0 0.0
  %1080 = vmatprep.subr.mxu0 0.0
  %1081 = vmatpush1.xpose.msra.mxu0 0.0
  %1082 = vmatprep.subr.mxu0 0.0
  %1083 = vmatpush1.xpose.msra.mxu0 0.0
  %1084 = vmatprep.subr.mxu0 0.0
  %1085 = vmatpush1.xpose.msra.mxu0 0.0
  %1086 = vmatprep.subr.mxu0 0.0
  %1087 = vmatpush1.xpose.msra.mxu0 0.0
  %1088 = vmatprep.subr.mxu0 0.0
  %1089 = vmatpush1.xpose.msra.mxu0 0.0
  %1090 = vmatprep.subr.mxu0 0.0
  %1091 = vmatpush1.xpose.msra.mxu0 0.0
  %1092 = vmatprep.subr.mxu0 0.0
  %1093 = vmatpush1.xpose.msra.mxu0 0.0
  %1094 = vmatprep.subr.mxu0 0.0
  %1095 = vmatpush1.xpose.msra.mxu0 0.0
  %1096 = vmatprep.subr.mxu0 0.0
  %1097 = vmatpush1.xpose.msra.mxu0 0.0
  %1098 = vmatprep.subr.mxu0 0.0
  %1099 = vmatpush1.xpose.msra.mxu0 0.0
  %1100 = vmatprep.subr.mxu0 0.0
  %1101 = vmatpush1.xpose.msra.mxu0 0.0
  %1102 = vmatprep.subr.mxu0 0.0
  %1103 = vmatpush1.xpose.msra.mxu0 0.0
  %1104 = vmatprep.subr.mxu0 0.0
  %1105 = vmatpush1.xpose.msra.mxu0 0.0
  %1106 = vmatprep.subr.mxu0 0.0
  %1107 = vmatpush1.xpose.msra.mxu0 0.0
  %1108 = vmatprep.subr.mxu0 0.0
  %1109 = vmatpush1.xpose.msra.mxu0 0.0
  %1110 = vmatprep.subr.mxu0 0.0
  %1111 = vmatpush1.xpose.msra.mxu0 0.0
  %1112 = vmatprep.subr.mxu0 0.0
  %1113 = vmatpush1.xpose.msra.mxu0 0.0
  %1114 = vmatprep.subr.mxu0 0.0
  %1115 = vmatpush1.xpose.msra.mxu0 0.0
  %1116 = vmatprep.subr.mxu0 0.0
  %1117 = vmatpush1.xpose.msra.mxu0 0.0
  %1118 = vmatprep.subr.mxu0 0.0
  %1119 = vmatpush1.xpose.msra.mxu0 0.0
  %1120 = vmatprep.subr.mxu0 0.0
  %1121 = vmatpush1.xpose.msra.mxu0 0.0
  %1122 = vmatprep.subr.mxu0 0.0
  %1123 = vmatpush1.xpose.msra.mxu0 0.0
  %1124 = vmatprep.subr.mxu0 0.0
  %1125 = vmatpush1.xpose.msra.mxu0 0.0
  %1126 = vmatprep.subr.mxu0 0.0
  %1127 = vmatpush1.xpose.msra.mxu0 0.0
  %1128 = vmatprep.subr.mxu0 0.0
  %1129 = vmatpush1.xpose.msra.mxu0 0.0
  %1130 = vmatprep.subr.mxu0 0.0
  %1131 = vmatpush1.xpose.msra.mxu0 0.0
  %1132 = vmatprep.subr.mxu0 0.0
  %1133 = vmatpush1.xpose.msra.mxu0 0.0
  %1134 = vmatprep.mubr.f32.mxu0 0.0
  %1135 = vmatmul.mubr.f32.gmra.mrb[0].mxu0 %v1062
  %v1136 = vpop.f32.mrb[0].mxu0
  %v1137 = vadd.f32 0.0, %v1136
  %v1138 = vpop.f32.mrb[0].mxu0
  %1139 = vmatprep.mubr.f32.mxu0 0.0
  %1140 = vmatmul.mubr.f32.gmra.mrb[0].mxu0 %v1064
  %v1141 = vpop.f32.mrb[0].mxu0
  %v1142 = vadd.f32 0.0, %v1141
  %v1143 = vpop.f32.mrb[0].mxu0
  %1144 = vdwg.mxu0
  %1145 = vrot.lane.b32.xlu0 %v151, 120
  %v1146 = vpop.permute.xlu0 %1145
  %1147 = vrot.lane.b32.xlu0 %v156, 120
  %v1148 = vpop.permute.xlu0 %1147
  %1149 = vrot.lane.b32.xlu0 %v151, 88
  %v1150 = vpop.permute.xlu0 %1149
  %1151 = vrot.lane.b32.xlu0 %v156, 88
  %v1152 = vpop.permute.xlu0 %1151
  %v1153 = vsel %vm175, %v1146, 0
  %v1155 = vsel %vm175, %v1148, 0
  %v1157 = vsel %vm175, %v1150, 0
  %v1159 = vsel %vm175, %v1152, 0
  %1161 = vmatprep.subr.mxu0 0.0
  %1162 = vmatpush1.xpose.msra.mxu0 %v1157
  %1163 = vmatprep.subr.mxu0 0.0
  %1164 = vmatpush1.xpose.msra.mxu0 %v1159
  %1165 = vmatprep.subr.mxu0 0.0
  %1166 = vmatpush1.xpose.msra.mxu0 0.0
  %1167 = vmatprep.subr.mxu0 0.0
  %1168 = vmatpush1.xpose.msra.mxu0 0.0
  %1169 = vmatprep.subr.mxu0 0.0
  %1170 = vmatpush1.xpose.msra.mxu0 0.0
  %1171 = vmatprep.subr.mxu0 0.0
  %1172 = vmatpush1.xpose.msra.mxu0 0.0
  %1173 = vmatprep.subr.mxu0 0.0
  %1174 = vmatpush1.xpose.msra.mxu0 0.0
  %1175 = vmatprep.subr.mxu0 0.0
  %1176 = vmatpush1.xpose.msra.mxu0 0.0
  %1177 = vmatprep.subr.mxu0 0.0
  %1178 = vmatpush1.xpose.msra.mxu0 0.0
  %1179 = vmatprep.subr.mxu0 0.0
  %1180 = vmatpush1.xpose.msra.mxu0 0.0
  %1181 = vmatprep.subr.mxu0 0.0
  %1182 = vmatpush1.xpose.msra.mxu0 0.0
  %1183 = vmatprep.subr.mxu0 0.0
  %1184 = vmatpush1.xpose.msra.mxu0 0.0
  %1185 = vmatprep.subr.mxu0 0.0
  %1186 = vmatpush1.xpose.msra.mxu0 0.0
  %1187 = vmatprep.subr.mxu0 0.0
  %1188 = vmatpush1.xpose.msra.mxu0 0.0
  %1189 = vmatprep.subr.mxu0 0.0
  %1190 = vmatpush1.xpose.msra.mxu0 0.0
  %1191 = vmatprep.subr.mxu0 0.0
  %1192 = vmatpush1.xpose.msra.mxu0 0.0
  %1193 = vmatprep.subr.mxu0 0.0
  %1194 = vmatpush1.xpose.msra.mxu0 0.0
  %1195 = vmatprep.subr.mxu0 0.0
  %1196 = vmatpush1.xpose.msra.mxu0 0.0
  %1197 = vmatprep.subr.mxu0 0.0
  %1198 = vmatpush1.xpose.msra.mxu0 0.0
  %1199 = vmatprep.subr.mxu0 0.0
  %1200 = vmatpush1.xpose.msra.mxu0 0.0
  %1201 = vmatprep.subr.mxu0 0.0
  %1202 = vmatpush1.xpose.msra.mxu0 0.0
  %1203 = vmatprep.subr.mxu0 0.0
  %1204 = vmatpush1.xpose.msra.mxu0 0.0
  %1205 = vmatprep.subr.mxu0 0.0
  %1206 = vmatpush1.xpose.msra.mxu0 0.0
  %1207 = vmatprep.subr.mxu0 0.0
  %1208 = vmatpush1.xpose.msra.mxu0 0.0
  %1209 = vmatprep.subr.mxu0 0.0
  %1210 = vmatpush1.xpose.msra.mxu0 0.0
  %1211 = vmatprep.subr.mxu0 0.0
  %1212 = vmatpush1.xpose.msra.mxu0 0.0
  %1213 = vmatprep.subr.mxu0 0.0
  %1214 = vmatpush1.xpose.msra.mxu0 0.0
  %1215 = vmatprep.subr.mxu0 0.0
  %1216 = vmatpush1.xpose.msra.mxu0 0.0
  %1217 = vmatprep.subr.mxu0 0.0
  %1218 = vmatpush1.xpose.msra.mxu0 0.0
  %1219 = vmatprep.subr.mxu0 0.0
  %1220 = vmatpush1.xpose.msra.mxu0 0.0
  %1221 = vmatprep.subr.mxu0 0.0
  %1222 = vmatpush1.xpose.msra.mxu0 0.0
  %1223 = vmatprep.subr.mxu0 0.0
  %1224 = vmatpush1.xpose.msra.mxu0 0.0
  %1225 = vmatprep.mubr.f32.mxu0 0.0
  %1226 = vmatmul.mubr.f32.gmra.mrb[0].mxu0 %v1153
  %v1227 = vpop.f32.mrb[0].mxu0
  %v1228 = vadd.f32 0.0, %v1227
  %v1229 = vpop.f32.mrb[0].mxu0
  %1230 = vmatprep.mubr.f32.mxu0 0.0
  %1231 = vmatmul.mubr.f32.gmra.mrb[0].mxu0 %v1155
  %v1232 = vpop.f32.mrb[0].mxu0
  %v1233 = vadd.f32 0.0, %v1232
  %v1234 = vpop.f32.mrb[0].mxu0
  %1235 = vdwg.mxu0
  %1236 = vrot.lane.b32.xlu0 %v161, 120
  %v1237 = vpop.permute.xlu0 %1236
  %1238 = vrot.lane.b32.xlu0 %v166, 120
  %v1239 = vpop.permute.xlu0 %1238
  %1240 = vrot.lane.b32.xlu0 %v161, 88
  %v1241 = vpop.permute.xlu0 %1240
  %1242 = vrot.lane.b32.xlu0 %v166, 88
  %v1243 = vpop.permute.xlu0 %1242
  %v1244 = vsel %vm175, %v1237, 0
  %v1246 = vsel %vm175, %v1239, 0
  %v1248 = vsel %vm175, %v1241, 0
  %v1250 = vsel %vm175, %v1243, 0
  %1252 = vmatprep.subr.mxu0 0.0
  %1253 = vmatpush1.xpose.msra.mxu0 %v1248
  %1254 = vmatprep.subr.mxu0 0.0
  %1255 = vmatpush1.xpose.msra.mxu0 %v1250
  %1256 = vmatprep.subr.mxu0 0.0
  %1257 = vmatpush1.xpose.msra.mxu0 0.0
  %1258 = vmatprep.subr.mxu0 0.0
  %1259 = vmatpush1.xpose.msra.mxu0 0.0
  %1260 = vmatprep.subr.mxu0 0.0
  %1261 = vmatpush1.xpose.msra.mxu0 0.0
  %1262 = vmatprep.subr.mxu0 0.0
  %1263 = vmatpush1.xpose.msra.mxu0 0.0
  %1264 = vmatprep.subr.mxu0 0.0
  %1265 = vmatpush1.xpose.msra.mxu0 0.0
  %1266 = vmatprep.subr.mxu0 0.0
  %1267 = vmatpush1.xpose.msra.mxu0 0.0
  %1268 = vmatprep.subr.mxu0 0.0
  %1269 = vmatpush1.xpose.msra.mxu0 0.0
  %1270 = vmatprep.subr.mxu0 0.0
  %1271 = vmatpush1.xpose.msra.mxu0 0.0
  %1272 = vmatprep.subr.mxu0 0.0
  %1273 = vmatpush1.xpose.msra.mxu0 0.0
  %1274 = vmatprep.subr.mxu0 0.0
  %1275 = vmatpush1.xpose.msra.mxu0 0.0
  %1276 = vmatprep.subr.mxu0 0.0
  %1277 = vmatpush1.xpose.msra.mxu0 0.0
  %1278 = vmatprep.subr.mxu0 0.0
  %1279 = vmatpush1.xpose.msra.mxu0 0.0
  %1280 = vmatprep.subr.mxu0 0.0
  %1281 = vmatpush1.xpose.msra.mxu0 0.0
  %1282 = vmatprep.subr.mxu0 0.0
  %1283 = vmatpush1.xpose.msra.mxu0 0.0
  %1284 = vmatprep.subr.mxu0 0.0
  %1285 = vmatpush1.xpose.msra.mxu0 0.0
  %1286 = vmatprep.subr.mxu0 0.0
  %1287 = vmatpush1.xpose.msra.mxu0 0.0
  %1288 = vmatprep.subr.mxu0 0.0
  %1289 = vmatpush1.xpose.msra.mxu0 0.0
  %1290 = vmatprep.subr.mxu0 0.0
  %1291 = vmatpush1.xpose.msra.mxu0 0.0
  %1292 = vmatprep.subr.mxu0 0.0
  %1293 = vmatpush1.xpose.msra.mxu0 0.0
  %1294 = vmatprep.subr.mxu0 0.0
  %1295 = vmatpush1.xpose.msra.mxu0 0.0
  %1296 = vmatprep.subr.mxu0 0.0
  %1297 = vmatpush1.xpose.msra.mxu0 0.0
  %1298 = vmatprep.subr.mxu0 0.0
  %1299 = vmatpush1.xpose.msra.mxu0 0.0
  %1300 = vmatprep.subr.mxu0 0.0
  %1301 = vmatpush1.xpose.msra.mxu0 0.0
  %1302 = vmatprep.subr.mxu0 0.0
  %1303 = vmatpush1.xpose.msra.mxu0 0.0
  %1304 = vmatprep.subr.mxu0 0.0
  %1305 = vmatpush1.xpose.msra.mxu0 0.0
  %1306 = vmatprep.subr.mxu0 0.0
  %1307 = vmatpush1.xpose.msra.mxu0 0.0
  %1308 = vmatprep.subr.mxu0 0.0
  %1309 = vmatpush1.xpose.msra.mxu0 0.0
  %1310 = vmatprep.subr.mxu0 0.0
  %1311 = vmatpush1.xpose.msra.mxu0 0.0
  %1312 = vmatprep.subr.mxu0 0.0
  %1313 = vmatpush1.xpose.msra.mxu0 0.0
  %1314 = vmatprep.subr.mxu0 0.0
  %1315 = vmatpush1.xpose.msra.mxu0 0.0
  %1316 = vmatprep.mubr.f32.mxu0 0.0
  %1317 = vmatmul.mubr.f32.gmra.mrb[0].mxu0 %v1244
  %v1318 = vpop.f32.mrb[0].mxu0
  %v1319 = vadd.f32 0.0, %v1318
  %v1320 = vpop.f32.mrb[0].mxu0
  %1321 = vmatprep.mubr.f32.mxu0 0.0
  %1322 = vmatmul.mubr.f32.gmra.mrb[0].mxu0 %v1246
  %v1323 = vpop.f32.mrb[0].mxu0
  %v1324 = vadd.f32 0.0, %v1323
  %v1325 = vpop.f32.mrb[0].mxu0
  %1326 = vdwg.mxu0
  %v1327 = vsel %vm526, %v1046, -inf
  %1328 = vmax.xlane.f32.xlu0 %v1327
  %v1329 = vpop.xlane.xlu0 %1328
  %v1330 = vsel %vm526, %v1051, -inf
  %1331 = vmax.xlane.f32.xlu0 %v1330
  %v1332 = vpop.xlane.xlu0 %1331
  %v1333 = vsel %vm526, %v1137, -inf
  %1334 = vmax.xlane.f32.xlu0 %v1333
  %v1335 = vpop.xlane.xlu0 %1334
  %v1336 = vsel %vm526, %v1142, -inf
  %1337 = vmax.xlane.f32.xlu0 %v1336
  %v1338 = vpop.xlane.xlu0 %1337
  %v1339 = vsel %vm526, %v1228, -inf
  %1340 = vmax.xlane.f32.xlu0 %v1339
  %v1341 = vpop.xlane.xlu0 %1340
  %v1342 = vsel %vm526, %v1233, -inf
  %1343 = vmax.xlane.f32.xlu0 %v1342
  %v1344 = vpop.xlane.xlu0 %1343
  %v1345 = vsel %vm526, %v1319, -inf
  %1346 = vmax.xlane.f32.xlu0 %v1345
  %v1347 = vpop.xlane.xlu0 %1346
  %v1348 = vsel %vm526, %v1324, -inf
  %1349 = vmax.xlane.f32.xlu0 %v1348
  %v1350 = vpop.xlane.xlu0 %1349
  %v1351 = vsub.f32 %v1046, %v1329
  %v1352 = vsub.f32 %v1051, %v1332
  %v1353 = vsub.f32 %v1137, %v1335
  %v1354 = vsub.f32 %v1142, %v1338
  %v1355 = vsub.f32 %v1228, %v1341
  %v1356 = vsub.f32 %v1233, %v1344
  %v1357 = vsub.f32 %v1319, %v1347
  %v1358 = vsub.f32 %v1324, %v1350
  %v1359 = vmul.f32 %v1351, 1.442695
  %v1360 = vpow.pop %v1359
  %v1361 = vmul.f32 %v1352, 1.442695
  %v1362 = vpow.pop %v1361
  %v1363 = vmul.f32 %v1353, 1.442695
  %v1364 = vpow.pop %v1363
  %v1365 = vmul.f32 %v1354, 1.442695
  %v1366 = vpow.pop %v1365
  %v1367 = vmul.f32 %v1355, 1.442695
  %v1368 = vpow.pop %v1367
  %v1369 = vmul.f32 %v1356, 1.442695
  %v1370 = vpow.pop %v1369
  %v1371 = vmul.f32 %v1357, 1.442695
  %v1372 = vpow.pop %v1371
  %v1373 = vmul.f32 %v1358, 1.442695
  %v1374 = vpow.pop %v1373
  %v1375 = vsel %vm526, %v1360, 0.0
  %1376 = vadd.xlane.f32.xlu0 %v1375
  %v1377 = vpop.xlane.xlu0 %1376
  %v1378 = vsel %vm526, %v1362, 0.0
  %1379 = vadd.xlane.f32.xlu0 %v1378
  %v1380 = vpop.xlane.xlu0 %1379
  %v1381 = vsel %vm526, %v1364, 0.0
  %1382 = vadd.xlane.f32.xlu0 %v1381
  %v1383 = vpop.xlane.xlu0 %1382
  %v1384 = vsel %vm526, %v1366, 0.0
  %1385 = vadd.xlane.f32.xlu0 %v1384
  %v1386 = vpop.xlane.xlu0 %1385
  %v1387 = vsel %vm526, %v1368, 0.0
  %1388 = vadd.xlane.f32.xlu0 %v1387
  %v1389 = vpop.xlane.xlu0 %1388
  %v1390 = vsel %vm526, %v1370, 0.0
  %1391 = vadd.xlane.f32.xlu0 %v1390
  %v1392 = vpop.xlane.xlu0 %1391
  %v1393 = vsel %vm526, %v1372, 0.0
  %1394 = vadd.xlane.f32.xlu0 %v1393
  %v1395 = vpop.xlane.xlu0 %1394
  %v1396 = vsel %vm526, %v1374, 0.0
  %1397 = vadd.xlane.f32.xlu0 %v1396
  %v1398 = vpop.xlane.xlu0 %1397
  %v1399 = vrcp.pop %v1377
  %v1400 = vrcp.pop %v1380
  %v1401 = vrcp.pop %v1383
  %v1402 = vrcp.pop %v1386
  %v1403 = vrcp.pop %v1389
  %v1404 = vrcp.pop %v1392
  %v1405 = vrcp.pop %v1395
  %v1406 = vrcp.pop %v1398
  %v1407 = vmul.f32 %v1360, %v1399
  %v1408 = vmul.f32 %v1362, %v1400
  %v1409 = vmul.f32 %v1364, %v1401
  %v1410 = vmul.f32 %v1366, %v1402
  %v1411 = vmul.f32 %v1368, %v1403
  %v1412 = vmul.f32 %v1370, %v1404
  %v1413 = vmul.f32 %v1372, %v1405
  %v1414 = vmul.f32 %v1374, %v1406
  %1415 = vrot.lane.b32.xlu0 %v131, 56
  %v1416 = vpop.permute.xlu0 %1415
  %1417 = vrot.lane.b32.xlu0 %v136, 56
  %v1418 = vpop.permute.xlu0 %1417
  %v1422 = vsel %vm526, %v1407, 0
  %v1425 = vsel %vm526, %v1408, 0
  %1427 = vmatprep.subr.mxu0 0.0
  %1428 = vmatpush1.msra.mxu0 %v1416
  %1429 = vmatprep.subr.mxu0 0.0
  %1430 = vmatpush1.msra.mxu0 %v1418
  %1431 = vmatprep.subr.mxu0 0.0
  %1432 = vmatpush1.msra.mxu0 0.0
  %1433 = vmatprep.subr.mxu0 0.0
  %1434 = vmatpush1.msra.mxu0 0.0
  %1435 = vmatprep.subr.mxu0 0.0
  %1436 = vmatpush1.msra.mxu0 0.0
  %1437 = vmatprep.subr.mxu0 0.0
  %1438 = vmatpush1.msra.mxu0 0.0
  %1439 = vmatprep.subr.mxu0 0.0
  %1440 = vmatpush1.msra.mxu0 0.0
  %1441 = vmatprep.subr.mxu0 0.0
  %1442 = vmatpush1.msra.mxu0 0.0
  %1443 = vmatprep.subr.mxu0 0.0
  %1444 = vmatpush1.msra.mxu0 0.0
  %1445 = vmatprep.subr.mxu0 0.0
  %1446 = vmatpush1.msra.mxu0 0.0
  %1447 = vmatprep.subr.mxu0 0.0
  %1448 = vmatpush1.msra.mxu0 0.0
  %1449 = vmatprep.subr.mxu0 0.0
  %1450 = vmatpush1.msra.mxu0 0.0
  %1451 = vmatprep.subr.mxu0 0.0
  %1452 = vmatpush1.msra.mxu0 0.0
  %1453 = vmatprep.subr.mxu0 0.0
  %1454 = vmatpush1.msra.mxu0 0.0
  %1455 = vmatprep.subr.mxu0 0.0
  %1456 = vmatpush1.msra.mxu0 0.0
  %1457 = vmatprep.subr.mxu0 0.0
  %1458 = vmatpush1.msra.mxu0 0.0
  %1459 = vmatprep.subr.mxu0 0.0
  %1460 = vmatpush1.msra.mxu0 0.0
  %1461 = vmatprep.subr.mxu0 0.0
  %1462 = vmatpush1.msra.mxu0 0.0
  %1463 = vmatprep.subr.mxu0 0.0
  %1464 = vmatpush1.msra.mxu0 0.0
  %1465 = vmatprep.subr.mxu0 0.0
  %1466 = vmatpush1.msra.mxu0 0.0
  %1467 = vmatprep.subr.mxu0 0.0
  %1468 = vmatpush1.msra.mxu0 0.0
  %1469 = vmatprep.subr.mxu0 0.0
  %1470 = vmatpush1.msra.mxu0 0.0
  %1471 = vmatprep.subr.mxu0 0.0
  %1472 = vmatpush1.msra.mxu0 0.0
  %1473 = vmatprep.subr.mxu0 0.0
  %1474 = vmatpush1.msra.mxu0 0.0
  %1475 = vmatprep.subr.mxu0 0.0
  %1476 = vmatpush1.msra.mxu0 0.0
  %1477 = vmatprep.subr.mxu0 0.0
  %1478 = vmatpush1.msra.mxu0 0.0
  %1479 = vmatprep.subr.mxu0 0.0
  %1480 = vmatpush1.msra.mxu0 0.0
  %1481 = vmatprep.subr.mxu0 0.0
  %1482 = vmatpush1.msra.mxu0 0.0
  %1483 = vmatprep.subr.mxu0 0.0
  %1484 = vmatpush1.msra.mxu0 0.0
  %1485 = vmatprep.subr.mxu0 0.0
  %1486 = vmatpush1.msra.mxu0 0.0
  %1487 = vmatprep.subr.mxu0 0.0
  %1488 = vmatpush1.msra.mxu0 0.0
  %1489 = vmatprep.subr.mxu0 0.0
  %1490 = vmatpush1.msra.mxu0 0.0
  %1491 = vmatprep.mubr.f32.mxu0 0.0
  %1492 = vmatmul.mubr.f32.gmra.mrb[0].mxu0 %v1422
  %v1493 = vpop.f32.mrb[0].mxu0
  %v1494 = vadd.f32 0.0, %v1493
  %v1495 = vpop.f32.mrb[0].mxu0
  %1496 = vmatprep.mubr.f32.mxu0 0.0
  %1497 = vmatmul.mubr.f32.gmra.mrb[0].mxu0 %v1425
  %v1498 = vpop.f32.mrb[0].mxu0
  %v1499 = vadd.f32 0.0, %v1498
  %v1500 = vpop.f32.mrb[0].mxu0
  %1501 = vdwg.mxu0
  %1502 = vrot.lane.b32.xlu0 %v141, 56
  %v1503 = vpop.permute.xlu0 %1502
  %1504 = vrot.lane.b32.xlu0 %v146, 56
  %v1505 = vpop.permute.xlu0 %1504
  %v1509 = vsel %vm526, %v1409, 0
  %v1512 = vsel %vm526, %v1410, 0
  %1514 = vmatprep.subr.mxu0 0.0
  %1515 = vmatpush1.msra.mxu0 %v1503
  %1516 = vmatprep.subr.mxu0 0.0
  %1517 = vmatpush1.msra.mxu0 %v1505
  %1518 = vmatprep.subr.mxu0 0.0
  %1519 = vmatpush1.msra.mxu0 0.0
  %1520 = vmatprep.subr.mxu0 0.0
  %1521 = vmatpush1.msra.mxu0 0.0
  %1522 = vmatprep.subr.mxu0 0.0
  %1523 = vmatpush1.msra.mxu0 0.0
  %1524 = vmatprep.subr.mxu0 0.0
  %1525 = vmatpush1.msra.mxu0 0.0
  %1526 = vmatprep.subr.mxu0 0.0
  %1527 = vmatpush1.msra.mxu0 0.0
  %1528 = vmatprep.subr.mxu0 0.0
  %1529 = vmatpush1.msra.mxu0 0.0
  %1530 = vmatprep.subr.mxu0 0.0
  %1531 = vmatpush1.msra.mxu0 0.0
  %1532 = vmatprep.subr.mxu0 0.0
  %1533 = vmatpush1.msra.mxu0 0.0
  %1534 = vmatprep.subr.mxu0 0.0
  %1535 = vmatpush1.msra.mxu0 0.0
  %1536 = vmatprep.subr.mxu0 0.0
  %1537 = vmatpush1.msra.mxu0 0.0
  %1538 = vmatprep.subr.mxu0 0.0
  %1539 = vmatpush1.msra.mxu0 0.0
  %1540 = vmatprep.subr.mxu0 0.0
  %1541 = vmatpush1.msra.mxu0 0.0
  %1542 = vmatprep.subr.mxu0 0.0
  %1543 = vmatpush1.msra.mxu0 0.0
  %1544 = vmatprep.subr.mxu0 0.0
  %1545 = vmatpush1.msra.mxu0 0.0
  %1546 = vmatprep.subr.mxu0 0.0
  %1547 = vmatpush1.msra.mxu0 0.0
  %1548 = vmatprep.subr.mxu0 0.0
  %1549 = vmatpush1.msra.mxu0 0.0
  %1550 = vmatprep.subr.mxu0 0.0
  %1551 = vmatpush1.msra.mxu0 0.0
  %1552 = vmatprep.subr.mxu0 0.0
  %1553 = vmatpush1.msra.mxu0 0.0
  %1554 = vmatprep.subr.mxu0 0.0
  %1555 = vmatpush1.msra.mxu0 0.0
  %1556 = vmatprep.subr.mxu0 0.0
  %1557 = vmatpush1.msra.mxu0 0.0
  %1558 = vmatprep.subr.mxu0 0.0
  %1559 = vmatpush1.msra.mxu0 0.0
  %1560 = vmatprep.subr.mxu0 0.0
  %1561 = vmatpush1.msra.mxu0 0.0
  %1562 = vmatprep.subr.mxu0 0.0
  %1563 = vmatpush1.msra.mxu0 0.0
  %1564 = vmatprep.subr.mxu0 0.0
  %1565 = vmatpush1.msra.mxu0 0.0
  %1566 = vmatprep.subr.mxu0 0.0
  %1567 = vmatpush1.msra.mxu0 0.0
  %1568 = vmatprep.subr.mxu0 0.0
  %1569 = vmatpush1.msra.mxu0 0.0
  %1570 = vmatprep.subr.mxu0 0.0
  %1571 = vmatpush1.msra.mxu0 0.0
  %1572 = vmatprep.subr.mxu0 0.0
  %1573 = vmatpush1.msra.mxu0 0.0
  %1574 = vmatprep.subr.mxu0 0.0
  %1575 = vmatpush1.msra.mxu0 0.0
  %1576 = vmatprep.subr.mxu0 0.0
  %1577 = vmatpush1.msra.mxu0 0.0
  %1578 = vmatprep.mubr.f32.mxu0 0.0
  %1579 = vmatmul.mubr.f32.gmra.mrb[0].mxu0 %v1509
  %v1580 = vpop.f32.mrb[0].mxu0
  %v1581 = vadd.f32 0.0, %v1580
  %v1582 = vpop.f32.mrb[0].mxu0
  %1583 = vmatprep.mubr.f32.mxu0 0.0
  %1584 = vmatmul.mubr.f32.gmra.mrb[0].mxu0 %v1512
  %v1585 = vpop.f32.mrb[0].mxu0
  %v1586 = vadd.f32 0.0, %v1585
  %v1587 = vpop.f32.mrb[0].mxu0
  %1588 = vdwg.mxu0
  %1589 = vrot.lane.b32.xlu0 %v151, 56
  %v1590 = vpop.permute.xlu0 %1589
  %1591 = vrot.lane.b32.xlu0 %v156, 56
  %v1592 = vpop.permute.xlu0 %1591
  %v1596 = vsel %vm526, %v1411, 0
  %v1599 = vsel %vm526, %v1412, 0
  %1601 = vmatprep.subr.mxu0 0.0
  %1602 = vmatpush1.msra.mxu0 %v1590
  %1603 = vmatprep.subr.mxu0 0.0
  %1604 = vmatpush1.msra.mxu0 %v1592
  %1605 = vmatprep.subr.mxu0 0.0
  %1606 = vmatpush1.msra.mxu0 0.0
  %1607 = vmatprep.subr.mxu0 0.0
  %1608 = vmatpush1.msra.mxu0 0.0
  %1609 = vmatprep.subr.mxu0 0.0
  %1610 = vmatpush1.msra.mxu0 0.0
  %1611 = vmatprep.subr.mxu0 0.0
  %1612 = vmatpush1.msra.mxu0 0.0
  %1613 = vmatprep.subr.mxu0 0.0
  %1614 = vmatpush1.msra.mxu0 0.0
  %1615 = vmatprep.subr.mxu0 0.0
  %1616 = vmatpush1.msra.mxu0 0.0
  %1617 = vmatprep.subr.mxu0 0.0
  %1618 = vmatpush1.msra.mxu0 0.0
  %1619 = vmatprep.subr.mxu0 0.0
  %1620 = vmatpush1.msra.mxu0 0.0
  %1621 = vmatprep.subr.mxu0 0.0
  %1622 = vmatpush1.msra.mxu0 0.0
  %1623 = vmatprep.subr.mxu0 0.0
  %1624 = vmatpush1.msra.mxu0 0.0
  %1625 = vmatprep.subr.mxu0 0.0
  %1626 = vmatpush1.msra.mxu0 0.0
  %1627 = vmatprep.subr.mxu0 0.0
  %1628 = vmatpush1.msra.mxu0 0.0
  %1629 = vmatprep.subr.mxu0 0.0
  %1630 = vmatpush1.msra.mxu0 0.0
  %1631 = vmatprep.subr.mxu0 0.0
  %1632 = vmatpush1.msra.mxu0 0.0
  %1633 = vmatprep.subr.mxu0 0.0
  %1634 = vmatpush1.msra.mxu0 0.0
  %1635 = vmatprep.subr.mxu0 0.0
  %1636 = vmatpush1.msra.mxu0 0.0
  %1637 = vmatprep.subr.mxu0 0.0
  %1638 = vmatpush1.msra.mxu0 0.0
  %1639 = vmatprep.subr.mxu0 0.0
  %1640 = vmatpush1.msra.mxu0 0.0
  %1641 = vmatprep.subr.mxu0 0.0
  %1642 = vmatpush1.msra.mxu0 0.0
  %1643 = vmatprep.subr.mxu0 0.0
  %1644 = vmatpush1.msra.mxu0 0.0
  %1645 = vmatprep.subr.mxu0 0.0
  %1646 = vmatpush1.msra.mxu0 0.0
  %1647 = vmatprep.subr.mxu0 0.0
  %1648 = vmatpush1.msra.mxu0 0.0
  %1649 = vmatprep.subr.mxu0 0.0
  %1650 = vmatpush1.msra.mxu0 0.0
  %1651 = vmatprep.subr.mxu0 0.0
  %1652 = vmatpush1.msra.mxu0 0.0
  %1653 = vmatprep.subr.mxu0 0.0
  %1654 = vmatpush1.msra.mxu0 0.0
  %1655 = vmatprep.subr.mxu0 0.0
  %1656 = vmatpush1.msra.mxu0 0.0
  %1657 = vmatprep.subr.mxu0 0.0
  %1658 = vmatpush1.msra.mxu0 0.0
  %1659 = vmatprep.subr.mxu0 0.0
  %1660 = vmatpush1.msra.mxu0 0.0
  %1661 = vmatprep.subr.mxu0 0.0
  %1662 = vmatpush1.msra.mxu0 0.0
  %1663 = vmatprep.subr.mxu0 0.0
  %1664 = vmatpush1.msra.mxu0 0.0
  %1665 = vmatprep.mubr.f32.mxu0 0.0
  %1666 = vmatmul.mubr.f32.gmra.mrb[0].mxu0 %v1596
  %v1667 = vpop.f32.mrb[0].mxu0
  %v1668 = vadd.f32 0.0, %v1667
  %v1669 = vpop.f32.mrb[0].mxu0
  %1670 = vmatprep.mubr.f32.mxu0 0.0
  %1671 = vmatmul.mubr.f32.gmra.mrb[0].mxu0 %v1599
  %v1672 = vpop.f32.mrb[0].mxu0
  %v1673 = vadd.f32 0.0, %v1672
  %v1674 = vpop.f32.mrb[0].mxu0
  %1675 = vdwg.mxu0
  %1676 = vrot.lane.b32.xlu0 %v161, 56
  %v1677 = vpop.permute.xlu0 %1676
  %1678 = vrot.lane.b32.xlu0 %v166, 56
  %v1679 = vpop.permute.xlu0 %1678
  %v1683 = vsel %vm526, %v1413, 0
  %v1686 = vsel %vm526, %v1414, 0
  %1688 = vmatprep.subr.mxu0 0.0
  %1689 = vmatpush1.msra.mxu0 %v1677
  %1690 = vmatprep.subr.mxu0 0.0
  %1691 = vmatpush1.msra.mxu0 %v1679
  %1692 = vmatprep.subr.mxu0 0.0
  %1693 = vmatpush1.msra.mxu0 0.0
  %1694 = vmatprep.subr.mxu0 0.0
  %1695 = vmatpush1.msra.mxu0 0.0
  %1696 = vmatprep.subr.mxu0 0.0
  %1697 = vmatpush1.msra.mxu0 0.0
  %1698 = vmatprep.subr.mxu0 0.0
  %1699 = vmatpush1.msra.mxu0 0.0
  %1700 = vmatprep.subr.mxu0 0.0
  %1701 = vmatpush1.msra.mxu0 0.0
  %1702 = vmatprep.subr.mxu0 0.0
  %1703 = vmatpush1.msra.mxu0 0.0
  %1704 = vmatprep.subr.mxu0 0.0
  %1705 = vmatpush1.msra.mxu0 0.0
  %1706 = vmatprep.subr.mxu0 0.0
  %1707 = vmatpush1.msra.mxu0 0.0
  %1708 = vmatprep.subr.mxu0 0.0
  %1709 = vmatpush1.msra.mxu0 0.0
  %1710 = vmatprep.subr.mxu0 0.0
  %1711 = vmatpush1.msra.mxu0 0.0
  %1712 = vmatprep.subr.mxu0 0.0
  %1713 = vmatpush1.msra.mxu0 0.0
  %1714 = vmatprep.subr.mxu0 0.0
  %1715 = vmatpush1.msra.mxu0 0.0
  %1716 = vmatprep.subr.mxu0 0.0
  %1717 = vmatpush1.msra.mxu0 0.0
  %1718 = vmatprep.subr.mxu0 0.0
  %1719 = vmatpush1.msra.mxu0 0.0
  %1720 = vmatprep.subr.mxu0 0.0
  %1721 = vmatpush1.msra.mxu0 0.0
  %1722 = vmatprep.subr.mxu0 0.0
  %1723 = vmatpush1.msra.mxu0 0.0
  %1724 = vmatprep.subr.mxu0 0.0
  %1725 = vmatpush1.msra.mxu0 0.0
  %1726 = vmatprep.subr.mxu0 0.0
  %1727 = vmatpush1.msra.mxu0 0.0
  %1728 = vmatprep.subr.mxu0 0.0
  %1729 = vmatpush1.msra.mxu0 0.0
  %1730 = vmatprep.subr.mxu0 0.0
  %1731 = vmatpush1.msra.mxu0 0.0
  %1732 = vmatprep.subr.mxu0 0.0
  %1733 = vmatpush1.msra.mxu0 0.0
  %1734 = vmatprep.subr.mxu0 0.0
  %1735 = vmatpush1.msra.mxu0 0.0
  %1736 = vmatprep.subr.mxu0 0.0
  %1737 = vmatpush1.msra.mxu0 0.0
  %1738 = vmatprep.subr.mxu0 0.0
  %1739 = vmatpush1.msra.mxu0 0.0
  %1740 = vmatprep.subr.mxu0 0.0
  %1741 = vmatpush1.msra.mxu0 0.0
  %1742 = vmatprep.subr.mxu0 0.0
  %1743 = vmatpush1.msra.mxu0 0.0
  %1744 = vmatprep.subr.mxu0 0.0
  %1745 = vmatpush1.msra.mxu0 0.0
  %1746 = vmatprep.subr.mxu0 0.0
  %1747 = vmatpush1.msra.mxu0 0.0
  %1748 = vmatprep.subr.mxu0 0.0
  %1749 = vmatpush1.msra.mxu0 0.0
  %1750 = vmatprep.subr.mxu0 0.0
  %1751 = vmatpush1.msra.mxu0 0.0
  %1752 = vmatprep.mubr.f32.mxu0 0.0
  %1753 = vmatmul.mubr.f32.gmra.mrb[0].mxu0 %v1683
  %v1754 = vpop.f32.mrb[0].mxu0
  %v1755 = vadd.f32 0.0, %v1754
  %v1756 = vpop.f32.mrb[0].mxu0
  %1757 = vmatprep.mubr.f32.mxu0 0.0
  %1758 = vmatmul.mubr.f32.gmra.mrb[0].mxu0 %v1686
  %v1759 = vpop.f32.mrb[0].mxu0
  %v1760 = vadd.f32 0.0, %v1759
  %v1761 = vpop.f32.mrb[0].mxu0
  %1762 = vdwg.mxu0
  %1763 = vrot.lane.b32.xlu0 %v131, 112
  %v1764 = vpop.permute.xlu0 %1763
  %1765 = vrot.lane.b32.xlu0 %v136, 112
  %v1766 = vpop.permute.xlu0 %1765
  %1767 = vrot.lane.b32.xlu0 %v131, 80
  %v1768 = vpop.permute.xlu0 %1767
  %1769 = vrot.lane.b32.xlu0 %v136, 80
  %v1770 = vpop.permute.xlu0 %1769
  %v1771 = vsel %vm175, %v1764, 0
  %v1773 = vsel %vm175, %v1766, 0
  %v1775 = vsel %vm175, %v1768, 0
  %v1777 = vsel %vm175, %v1770, 0
  %1779 = vmatprep.subr.mxu0 0.0
  %1780 = vmatpush1.xpose.msra.mxu0 %v1775
  %1781 = vmatprep.subr.mxu0 0.0
  %1782 = vmatpush1.xpose.msra.mxu0 %v1777
  %1783 = vmatprep.subr.mxu0 0.0
  %1784 = vmatpush1.xpose.msra.mxu0 0.0
  %1785 = vmatprep.subr.mxu0 0.0
  %1786 = vmatpush1.xpose.msra.mxu0 0.0
  %1787 = vmatprep.subr.mxu0 0.0
  %1788 = vmatpush1.xpose.msra.mxu0 0.0
  %1789 = vmatprep.subr.mxu0 0.0
  %1790 = vmatpush1.xpose.msra.mxu0 0.0
  %1791 = vmatprep.subr.mxu0 0.0
  %1792 = vmatpush1.xpose.msra.mxu0 0.0
  %1793 = vmatprep.subr.mxu0 0.0
  %1794 = vmatpush1.xpose.msra.mxu0 0.0
  %1795 = vmatprep.subr.mxu0 0.0
  %1796 = vmatpush1.xpose.msra.mxu0 0.0
  %1797 = vmatprep.subr.mxu0 0.0
  %1798 = vmatpush1.xpose.msra.mxu0 0.0
  %1799 = vmatprep.subr.mxu0 0.0
  %1800 = vmatpush1.xpose.msra.mxu0 0.0
  %1801 = vmatprep.subr.mxu0 0.0
  %1802 = vmatpush1.xpose.msra.mxu0 0.0
  %1803 = vmatprep.subr.mxu0 0.0
  %1804 = vmatpush1.xpose.msra.mxu0 0.0
  %1805 = vmatprep.subr.mxu0 0.0
  %1806 = vmatpush1.xpose.msra.mxu0 0.0
  %1807 = vmatprep.subr.mxu0 0.0
  %1808 = vmatpush1.xpose.msra.mxu0 0.0
  %1809 = vmatprep.subr.mxu0 0.0
  %1810 = vmatpush1.xpose.msra.mxu0 0.0
  %1811 = vmatprep.subr.mxu0 0.0
  %1812 = vmatpush1.xpose.msra.mxu0 0.0
  %1813 = vmatprep.subr.mxu0 0.0
  %1814 = vmatpush1.xpose.msra.mxu0 0.0
  %1815 = vmatprep.subr.mxu0 0.0
  %1816 = vmatpush1.xpose.msra.mxu0 0.0
  %1817 = vmatprep.subr.mxu0 0.0
  %1818 = vmatpush1.xpose.msra.mxu0 0.0
  %1819 = vmatprep.subr.mxu0 0.0
  %1820 = vmatpush1.xpose.msra.mxu0 0.0
  %1821 = vmatprep.subr.mxu0 0.0
  %1822 = vmatpush1.xpose.msra.mxu0 0.0
  %1823 = vmatprep.subr.mxu0 0.0
  %1824 = vmatpush1.xpose.msra.mxu0 0.0
  %1825 = vmatprep.subr.mxu0 0.0
  %1826 = vmatpush1.xpose.msra.mxu0 0.0
  %1827 = vmatprep.subr.mxu0 0.0
  %1828 = vmatpush1.xpose.msra.mxu0 0.0
  %1829 = vmatprep.subr.mxu0 0.0
  %1830 = vmatpush1.xpose.msra.mxu0 0.0
  %1831 = vmatprep.subr.mxu0 0.0
  %1832 = vmatpush1.xpose.msra.mxu0 0.0
  %1833 = vmatprep.subr.mxu0 0.0
  %1834 = vmatpush1.xpose.msra.mxu0 0.0
  %1835 = vmatprep.subr.mxu0 0.0
  %1836 = vmatpush1.xpose.msra.mxu0 0.0
  %1837 = vmatprep.subr.mxu0 0.0
  %1838 = vmatpush1.xpose.msra.mxu0 0.0
  %1839 = vmatprep.subr.mxu0 0.0
  %1840 = vmatpush1.xpose.msra.mxu0 0.0
  %1841 = vmatprep.subr.mxu0 0.0
  %1842 = vmatpush1.xpose.msra.mxu0 0.0
  %1843 = vmatprep.mubr.f32.mxu0 0.0
  %1844 = vmatmul.mubr.f32.gmra.mrb[0].mxu0 %v1771
  %v1845 = vpop.f32.mrb[0].mxu0
  %v1846 = vadd.f32 0.0, %v1845
  %v1847 = vpop.f32.mrb[0].mxu0
  %1848 = vmatprep.mubr.f32.mxu0 0.0
  %1849 = vmatmul.mubr.f32.gmra.mrb[0].mxu0 %v1773
  %v1850 = vpop.f32.mrb[0].mxu0
  %v1851 = vadd.f32 0.0, %v1850
  %v1852 = vpop.f32.mrb[0].mxu0
  %1853 = vdwg.mxu0
  %1854 = vrot.lane.b32.xlu0 %v141, 112
  %v1855 = vpop.permute.xlu0 %1854
  %1856 = vrot.lane.b32.xlu0 %v146, 112
  %v1857 = vpop.permute.xlu0 %1856
  %1858 = vrot.lane.b32.xlu0 %v141, 80
  %v1859 = vpop.permute.xlu0 %1858
  %1860 = vrot.lane.b32.xlu0 %v146, 80
  %v1861 = vpop.permute.xlu0 %1860
  %v1862 = vsel %vm175, %v1855, 0
  %v1864 = vsel %vm175, %v1857, 0
  %v1866 = vsel %vm175, %v1859, 0
  %v1868 = vsel %vm175, %v1861, 0
  %1870 = vmatprep.subr.mxu0 0.0
  %1871 = vmatpush1.xpose.msra.mxu0 %v1866
  %1872 = vmatprep.subr.mxu0 0.0
  %1873 = vmatpush1.xpose.msra.mxu0 %v1868
  %1874 = vmatprep.subr.mxu0 0.0
  %1875 = vmatpush1.xpose.msra.mxu0 0.0
  %1876 = vmatprep.subr.mxu0 0.0
  %1877 = vmatpush1.xpose.msra.mxu0 0.0
  %1878 = vmatprep.subr.mxu0 0.0
  %1879 = vmatpush1.xpose.msra.mxu0 0.0
  %1880 = vmatprep.subr.mxu0 0.0
  %1881 = vmatpush1.xpose.msra.mxu0 0.0
  %1882 = vmatprep.subr.mxu0 0.0
  %1883 = vmatpush1.xpose.msra.mxu0 0.0
  %1884 = vmatprep.subr.mxu0 0.0
  %1885 = vmatpush1.xpose.msra.mxu0 0.0
  %1886 = vmatprep.subr.mxu0 0.0
  %1887 = vmatpush1.xpose.msra.mxu0 0.0
  %1888 = vmatprep.subr.mxu0 0.0
  %1889 = vmatpush1.xpose.msra.mxu0 0.0
  %1890 = vmatprep.subr.mxu0 0.0
  %1891 = vmatpush1.xpose.msra.mxu0 0.0
  %1892 = vmatprep.subr.mxu0 0.0
  %1893 = vmatpush1.xpose.msra.mxu0 0.0
  %1894 = vmatprep.subr.mxu0 0.0
  %1895 = vmatpush1.xpose.msra.mxu0 0.0
  %1896 = vmatprep.subr.mxu0 0.0
  %1897 = vmatpush1.xpose.msra.mxu0 0.0
  %1898 = vmatprep.subr.mxu0 0.0
  %1899 = vmatpush1.xpose.msra.mxu0 0.0
  %1900 = vmatprep.subr.mxu0 0.0
  %1901 = vmatpush1.xpose.msra.mxu0 0.0
  %1902 = vmatprep.subr.mxu0 0.0
  %1903 = vmatpush1.xpose.msra.mxu0 0.0
  %1904 = vmatprep.subr.mxu0 0.0
  %1905 = vmatpush1.xpose.msra.mxu0 0.0
  %1906 = vmatprep.subr.mxu0 0.0
  %1907 = vmatpush1.xpose.msra.mxu0 0.0
  %1908 = vmatprep.subr.mxu0 0.0
  %1909 = vmatpush1.xpose.msra.mxu0 0.0
  %1910 = vmatprep.subr.mxu0 0.0
  %1911 = vmatpush1.xpose.msra.mxu0 0.0
  %1912 = vmatprep.subr.mxu0 0.0
  %1913 = vmatpush1.xpose.msra.mxu0 0.0
  %1914 = vmatprep.subr.mxu0 0.0
  %1915 = vmatpush1.xpose.msra.mxu0 0.0
  %1916 = vmatprep.subr.mxu0 0.0
  %1917 = vmatpush1.xpose.msra.mxu0 0.0
  %1918 = vmatprep.subr.mxu0 0.0
  %1919 = vmatpush1.xpose.msra.mxu0 0.0
  %1920 = vmatprep.subr.mxu0 0.0
  %1921 = vmatpush1.xpose.msra.mxu0 0.0
  %1922 = vmatprep.subr.mxu0 0.0
  %1923 = vmatpush1.xpose.msra.mxu0 0.0
  %1924 = vmatprep.subr.mxu0 0.0
  %1925 = vmatpush1.xpose.msra.mxu0 0.0
  %1926 = vmatprep.subr.mxu0 0.0
  %1927 = vmatpush1.xpose.msra.mxu0 0.0
  %1928 = vmatprep.subr.mxu0 0.0
  %1929 = vmatpush1.xpose.msra.mxu0 0.0
  %1930 = vmatprep.subr.mxu0 0.0
  %1931 = vmatpush1.xpose.msra.mxu0 0.0
  %1932 = vmatprep.subr.mxu0 0.0
  %1933 = vmatpush1.xpose.msra.mxu0 0.0
  %1934 = vmatprep.mubr.f32.mxu0 0.0
  %1935 = vmatmul.mubr.f32.gmra.mrb[0].mxu0 %v1862
  %v1936 = vpop.f32.mrb[0].mxu0
  %v1937 = vadd.f32 0.0, %v1936
  %v1938 = vpop.f32.mrb[0].mxu0
  %1939 = vmatprep.mubr.f32.mxu0 0.0
  %1940 = vmatmul.mubr.f32.gmra.mrb[0].mxu0 %v1864
  %v1941 = vpop.f32.mrb[0].mxu0
  %v1942 = vadd.f32 0.0, %v1941
  %v1943 = vpop.f32.mrb[0].mxu0
  %1944 = vdwg.mxu0
  %1945 = vrot.lane.b32.xlu0 %v151, 112
  %v1946 = vpop.permute.xlu0 %1945
  %1947 = vrot.lane.b32.xlu0 %v156, 112
  %v1948 = vpop.permute.xlu0 %1947
  %1949 = vrot.lane.b32.xlu0 %v151, 80
  %v1950 = vpop.permute.xlu0 %1949
  %1951 = vrot.lane.b32.xlu0 %v156, 80
  %v1952 = vpop.permute.xlu0 %1951
  %v1953 = vsel %vm175, %v1946, 0
  %v1955 = vsel %vm175, %v1948, 0
  %v1957 = vsel %vm175, %v1950, 0
  %v1959 = vsel %vm175, %v1952, 0
  %1961 = vmatprep.subr.mxu0 0.0
  %1962 = vmatpush1.xpose.msra.mxu0 %v1957
  %1963 = vmatprep.subr.mxu0 0.0
  %1964 = vmatpush1.xpose.msra.mxu0 %v1959
  %1965 = vmatprep.subr.mxu0 0.0
  %1966 = vmatpush1.xpose.msra.mxu0 0.0
  %1967 = vmatprep.subr.mxu0 0.0
  %1968 = vmatpush1.xpose.msra.mxu0 0.0
  %1969 = vmatprep.subr.mxu0 0.0
  %1970 = vmatpush1.xpose.msra.mxu0 0.0
  %1971 = vmatprep.subr.mxu0 0.0
  %1972 = vmatpush1.xpose.msra.mxu0 0.0
  %1973 = vmatprep.subr.mxu0 0.0
  %1974 = vmatpush1.xpose.msra.mxu0 0.0
  %1975 = vmatprep.subr.mxu0 0.0
  %1976 = vmatpush1.xpose.msra.mxu0 0.0
  %1977 = vmatprep.subr.mxu0 0.0
  %1978 = vmatpush1.xpose.msra.mxu0 0.0
  %1979 = vmatprep.subr.mxu0 0.0
  %1980 = vmatpush1.xpose.msra.mxu0 0.0
  %1981 = vmatprep.subr.mxu0 0.0
  %1982 = vmatpush1.xpose.msra.mxu0 0.0
  %1983 = vmatprep.subr.mxu0 0.0
  %1984 = vmatpush1.xpose.msra.mxu0 0.0
  %1985 = vmatprep.subr.mxu0 0.0
  %1986 = vmatpush1.xpose.msra.mxu0 0.0
  %1987 = vmatprep.subr.mxu0 0.0
  %1988 = vmatpush1.xpose.msra.mxu0 0.0
  %1989 = vmatprep.subr.mxu0 0.0
  %1990 = vmatpush1.xpose.msra.mxu0 0.0
  %1991 = vmatprep.subr.mxu0 0.0
  %1992 = vmatpush1.xpose.msra.mxu0 0.0
  %1993 = vmatprep.subr.mxu0 0.0
  %1994 = vmatpush1.xpose.msra.mxu0 0.0
  %1995 = vmatprep.subr.mxu0 0.0
  %1996 = vmatpush1.xpose.msra.mxu0 0.0
  %1997 = vmatprep.subr.mxu0 0.0
  %1998 = vmatpush1.xpose.msra.mxu0 0.0
  %1999 = vmatprep.subr.mxu0 0.0
  %2000 = vmatpush1.xpose.msra.mxu0 0.0
  %2001 = vmatprep.subr.mxu0 0.0
  %2002 = vmatpush1.xpose.msra.mxu0 0.0
  %2003 = vmatprep.subr.mxu0 0.0
  %2004 = vmatpush1.xpose.msra.mxu0 0.0
  %2005 = vmatprep.subr.mxu0 0.0
  %2006 = vmatpush1.xpose.msra.mxu0 0.0
  %2007 = vmatprep.subr.mxu0 0.0
  %2008 = vmatpush1.xpose.msra.mxu0 0.0
  %2009 = vmatprep.subr.mxu0 0.0
  %2010 = vmatpush1.xpose.msra.mxu0 0.0
  %2011 = vmatprep.subr.mxu0 0.0
  %2012 = vmatpush1.xpose.msra.mxu0 0.0
  %2013 = vmatprep.subr.mxu0 0.0
  %2014 = vmatpush1.xpose.msra.mxu0 0.0
  %2015 = vmatprep.subr.mxu0 0.0
  %2016 = vmatpush1.xpose.msra.mxu0 0.0
  %2017 = vmatprep.subr.mxu0 0.0
  %2018 = vmatpush1.xpose.msra.mxu0 0.0
  %2019 = vmatprep.subr.mxu0 0.0
  %2020 = vmatpush1.xpose.msra.mxu0 0.0
  %2021 = vmatprep.subr.mxu0 0.0
  %2022 = vmatpush1.xpose.msra.mxu0 0.0
  %2023 = vmatprep.subr.mxu0 0.0
  %2024 = vmatpush1.xpose.msra.mxu0 0.0
  %2025 = vmatprep.mubr.f32.mxu0 0.0
  %2026 = vmatmul.mubr.f32.gmra.mrb[0].mxu0 %v1953
  %v2027 = vpop.f32.mrb[0].mxu0
  %v2028 = vadd.f32 0.0, %v2027
  %v2029 = vpop.f32.mrb[0].mxu0
  %2030 = vmatprep.mubr.f32.mxu0 0.0
  %2031 = vmatmul.mubr.f32.gmra.mrb[0].mxu0 %v1955
  %v2032 = vpop.f32.mrb[0].mxu0
  %v2033 = vadd.f32 0.0, %v2032
  %v2034 = vpop.f32.mrb[0].mxu0
  %2035 = vdwg.mxu0
  %2036 = vrot.lane.b32.xlu0 %v161, 112
  %v2037 = vpop.permute.xlu0 %2036
  %2038 = vrot.lane.b32.xlu0 %v166, 112
  %v2039 = vpop.permute.xlu0 %2038
  %2040 = vrot.lane.b32.xlu0 %v161, 80
  %v2041 = vpop.permute.xlu0 %2040
  %2042 = vrot.lane.b32.xlu0 %v166, 80
  %v2043 = vpop.permute.xlu0 %2042
  %v2044 = vsel %vm175, %v2037, 0
  %v2046 = vsel %vm175, %v2039, 0
  %v2048 = vsel %vm175, %v2041, 0
  %v2050 = vsel %vm175, %v2043, 0
  %2052 = vmatprep.subr.mxu0 0.0
  %2053 = vmatpush1.xpose.msra.mxu0 %v2048
  %2054 = vmatprep.subr.mxu0 0.0
  %2055 = vmatpush1.xpose.msra.mxu0 %v2050
  %2056 = vmatprep.subr.mxu0 0.0
  %2057 = vmatpush1.xpose.msra.mxu0 0.0
  %2058 = vmatprep.subr.mxu0 0.0
  %2059 = vmatpush1.xpose.msra.mxu0 0.0
  %2060 = vmatprep.subr.mxu0 0.0
  %2061 = vmatpush1.xpose.msra.mxu0 0.0
  %2062 = vmatprep.subr.mxu0 0.0
  %2063 = vmatpush1.xpose.msra.mxu0 0.0
  %2064 = vmatprep.subr.mxu0 0.0
  %2065 = vmatpush1.xpose.msra.mxu0 0.0
  %2066 = vmatprep.subr.mxu0 0.0
  %2067 = vmatpush1.xpose.msra.mxu0 0.0
  %2068 = vmatprep.subr.mxu0 0.0
  %2069 = vmatpush1.xpose.msra.mxu0 0.0
  %2070 = vmatprep.subr.mxu0 0.0
  %2071 = vmatpush1.xpose.msra.mxu0 0.0
  %2072 = vmatprep.subr.mxu0 0.0
  %2073 = vmatpush1.xpose.msra.mxu0 0.0
  %2074 = vmatprep.subr.mxu0 0.0
  %2075 = vmatpush1.xpose.msra.mxu0 0.0
  %2076 = vmatprep.subr.mxu0 0.0
  %2077 = vmatpush1.xpose.msra.mxu0 0.0
  %2078 = vmatprep.subr.mxu0 0.0
  %2079 = vmatpush1.xpose.msra.mxu0 0.0
  %2080 = vmatprep.subr.mxu0 0.0
  %2081 = vmatpush1.xpose.msra.mxu0 0.0
  %2082 = vmatprep.subr.mxu0 0.0
  %2083 = vmatpush1.xpose.msra.mxu0 0.0
  %2084 = vmatprep.subr.mxu0 0.0
  %2085 = vmatpush1.xpose.msra.mxu0 0.0
  %2086 = vmatprep.subr.mxu0 0.0
  %2087 = vmatpush1.xpose.msra.mxu0 0.0
  %2088 = vmatprep.subr.mxu0 0.0
  %2089 = vmatpush1.xpose.msra.mxu0 0.0
  %2090 = vmatprep.subr.mxu0 0.0
  %2091 = vmatpush1.xpose.msra.mxu0 0.0
  %2092 = vmatprep.subr.mxu0 0.0
  %2093 = vmatpush1.xpose.msra.mxu0 0.0
  %2094 = vmatprep.subr.mxu0 0.0
  %2095 = vmatpush1.xpose.msra.mxu0 0.0
  %2096 = vmatprep.subr.mxu0 0.0
  %2097 = vmatpush1.xpose.msra.mxu0 0.0
  %2098 = vmatprep.subr.mxu0 0.0
  %2099 = vmatpush1.xpose.msra.mxu0 0.0
  %2100 = vmatprep.subr.mxu0 0.0
  %2101 = vmatpush1.xpose.msra.mxu0 0.0
  %2102 = vmatprep.subr.mxu0 0.0
  %2103 = vmatpush1.xpose.msra.mxu0 0.0
  %2104 = vmatprep.subr.mxu0 0.0
  %2105 = vmatpush1.xpose.msra.mxu0 0.0
  %2106 = vmatprep.subr.mxu0 0.0
  %2107 = vmatpush1.xpose.msra.mxu0 0.0
  %2108 = vmatprep.subr.mxu0 0.0
  %2109 = vmatpush1.xpose.msra.mxu0 0.0
  %2110 = vmatprep.subr.mxu0 0.0
  %2111 = vmatpush1.xpose.msra.mxu0 0.0
  %2112 = vmatprep.subr.mxu0 0.0
  %2113 = vmatpush1.xpose.msra.mxu0 0.0
  %2114 = vmatprep.subr.mxu0 0.0
  %2115 = vmatpush1.xpose.msra.mxu0 0.0
  %2116 = vmatprep.mubr.f32.mxu0 0.0
  %2117 = vmatmul.mubr.f32.gmra.mrb[0].mxu0 %v2044
  %v2118 = vpop.f32.mrb[0].mxu0
  %v2119 = vadd.f32 0.0, %v2118
  %v2120 = vpop.f32.mrb[0].mxu0
  %2121 = vmatprep.mubr.f32.mxu0 0.0
  %2122 = vmatmul.mubr.f32.gmra.mrb[0].mxu0 %v2046
  %v2123 = vpop.f32.mrb[0].mxu0
  %v2124 = vadd.f32 0.0, %v2123
  %v2125 = vpop.f32.mrb[0].mxu0
  %2126 = vdwg.mxu0
  %v2127 = vsel %vm526, %v1846, -inf
  %2128 = vmax.xlane.f32.xlu0 %v2127
  %v2129 = vpop.xlane.xlu0 %2128
  %v2130 = vsel %vm526, %v1851, -inf
  %2131 = vmax.xlane.f32.xlu0 %v2130
  %v2132 = vpop.xlane.xlu0 %2131
  %v2133 = vsel %vm526, %v1937, -inf
  %2134 = vmax.xlane.f32.xlu0 %v2133
  %v2135 = vpop.xlane.xlu0 %2134
  %v2136 = vsel %vm526, %v1942, -inf
  %2137 = vmax.xlane.f32.xlu0 %v2136
  %v2138 = vpop.xlane.xlu0 %2137
  %v2139 = vsel %vm526, %v2028, -inf
  %2140 = vmax.xlane.f32.xlu0 %v2139
  %v2141 = vpop.xlane.xlu0 %2140
  %v2142 = vsel %vm526, %v2033, -inf
  %2143 = vmax.xlane.f32.xlu0 %v2142
  %v2144 = vpop.xlane.xlu0 %2143
  %v2145 = vsel %vm526, %v2119, -inf
  %2146 = vmax.xlane.f32.xlu0 %v2145
  %v2147 = vpop.xlane.xlu0 %2146
  %v2148 = vsel %vm526, %v2124, -inf
  %2149 = vmax.xlane.f32.xlu0 %v2148
  %v2150 = vpop.xlane.xlu0 %2149
  %v2151 = vsub.f32 %v1846, %v2129
  %v2152 = vsub.f32 %v1851, %v2132
  %v2153 = vsub.f32 %v1937, %v2135
  %v2154 = vsub.f32 %v1942, %v2138
  %v2155 = vsub.f32 %v2028, %v2141
  %v2156 = vsub.f32 %v2033, %v2144
  %v2157 = vsub.f32 %v2119, %v2147
  %v2158 = vsub.f32 %v2124, %v2150
  %v2159 = vmul.f32 %v2151, 1.442695
  %v2160 = vpow.pop %v2159
  %v2161 = vmul.f32 %v2152, 1.442695
  %v2162 = vpow.pop %v2161
  %v2163 = vmul.f32 %v2153, 1.442695
  %v2164 = vpow.pop %v2163
  %v2165 = vmul.f32 %v2154, 1.442695
  %v2166 = vpow.pop %v2165
  %v2167 = vmul.f32 %v2155, 1.442695
  %v2168 = vpow.pop %v2167
  %v2169 = vmul.f32 %v2156, 1.442695
  %v2170 = vpow.pop %v2169
  %v2171 = vmul.f32 %v2157, 1.442695
  %v2172 = vpow.pop %v2171
  %v2173 = vmul.f32 %v2158, 1.442695
  %v2174 = vpow.pop %v2173
  %v2175 = vsel %vm526, %v2160, 0.0
  %2176 = vadd.xlane.f32.xlu0 %v2175
  %v2177 = vpop.xlane.xlu0 %2176
  %v2178 = vsel %vm526, %v2162, 0.0
  %2179 = vadd.xlane.f32.xlu0 %v2178
  %v2180 = vpop.xlane.xlu0 %2179
  %v2181 = vsel %vm526, %v2164, 0.0
  %2182 = vadd.xlane.f32.xlu0 %v2181
  %v2183 = vpop.xlane.xlu0 %2182
  %v2184 = vsel %vm526, %v2166, 0.0
  %2185 = vadd.xlane.f32.xlu0 %v2184
  %v2186 = vpop.xlane.xlu0 %2185
  %v2187 = vsel %vm526, %v2168, 0.0
  %2188 = vadd.xlane.f32.xlu0 %v2187
  %v2189 = vpop.xlane.xlu0 %2188
  %v2190 = vsel %vm526, %v2170, 0.0
  %2191 = vadd.xlane.f32.xlu0 %v2190
  %v2192 = vpop.xlane.xlu0 %2191
  %v2193 = vsel %vm526, %v2172, 0.0
  %2194 = vadd.xlane.f32.xlu0 %v2193
  %v2195 = vpop.xlane.xlu0 %2194
  %v2196 = vsel %vm526, %v2174, 0.0
  %2197 = vadd.xlane.f32.xlu0 %v2196
  %v2198 = vpop.xlane.xlu0 %2197
  %v2199 = vrcp.pop %v2177
  %v2200 = vrcp.pop %v2180
  %v2201 = vrcp.pop %v2183
  %v2202 = vrcp.pop %v2186
  %v2203 = vrcp.pop %v2189
  %v2204 = vrcp.pop %v2192
  %v2205 = vrcp.pop %v2195
  %v2206 = vrcp.pop %v2198
  %v2207 = vmul.f32 %v2160, %v2199
  %v2208 = vmul.f32 %v2162, %v2200
  %v2209 = vmul.f32 %v2164, %v2201
  %v2210 = vmul.f32 %v2166, %v2202
  %v2211 = vmul.f32 %v2168, %v2203
  %v2212 = vmul.f32 %v2170, %v2204
  %v2213 = vmul.f32 %v2172, %v2205
  %v2214 = vmul.f32 %v2174, %v2206
  %2215 = vrot.lane.b32.xlu0 %v131, 48
  %v2216 = vpop.permute.xlu0 %2215
  %2217 = vrot.lane.b32.xlu0 %v136, 48
  %v2218 = vpop.permute.xlu0 %2217
  %v2222 = vsel %vm526, %v2207, 0
  %v2225 = vsel %vm526, %v2208, 0
  %2227 = vmatprep.subr.mxu0 0.0
  %2228 = vmatpush1.msra.mxu0 %v2216
  %2229 = vmatprep.subr.mxu0 0.0
  %2230 = vmatpush1.msra.mxu0 %v2218
  %2231 = vmatprep.subr.mxu0 0.0
  %2232 = vmatpush1.msra.mxu0 0.0
  %2233 = vmatprep.subr.mxu0 0.0
  %2234 = vmatpush1.msra.mxu0 0.0
  %2235 = vmatprep.subr.mxu0 0.0
  %2236 = vmatpush1.msra.mxu0 0.0
  %2237 = vmatprep.subr.mxu0 0.0
  %2238 = vmatpush1.msra.mxu0 0.0
  %2239 = vmatprep.subr.mxu0 0.0
  %2240 = vmatpush1.msra.mxu0 0.0
  %2241 = vmatprep.subr.mxu0 0.0
  %2242 = vmatpush1.msra.mxu0 0.0
  %2243 = vmatprep.subr.mxu0 0.0
  %2244 = vmatpush1.msra.mxu0 0.0
  %2245 = vmatprep.subr.mxu0 0.0
  %2246 = vmatpush1.msra.mxu0 0.0
  %2247 = vmatprep.subr.mxu0 0.0
  %2248 = vmatpush1.msra.mxu0 0.0
  %2249 = vmatprep.subr.mxu0 0.0
  %2250 = vmatpush1.msra.mxu0 0.0
  %2251 = vmatprep.subr.mxu0 0.0
  %2252 = vmatpush1.msra.mxu0 0.0
  %2253 = vmatprep.subr.mxu0 0.0
  %2254 = vmatpush1.msra.mxu0 0.0
  %2255 = vmatprep.subr.mxu0 0.0
  %2256 = vmatpush1.msra.mxu0 0.0
  %2257 = vmatprep.subr.mxu0 0.0
  %2258 = vmatpush1.msra.mxu0 0.0
  %2259 = vmatprep.subr.mxu0 0.0
  %2260 = vmatpush1.msra.mxu0 0.0
  %2261 = vmatprep.subr.mxu0 0.0
  %2262 = vmatpush1.msra.mxu0 0.0
  %2263 = vmatprep.subr.mxu0 0.0
  %2264 = vmatpush1.msra.mxu0 0.0
  %2265 = vmatprep.subr.mxu0 0.0
  %2266 = vmatpush1.msra.mxu0 0.0
  %2267 = vmatprep.subr.mxu0 0.0
  %2268 = vmatpush1.msra.mxu0 0.0
  %2269 = vmatprep.subr.mxu0 0.0
  %2270 = vmatpush1.msra.mxu0 0.0
  %2271 = vmatprep.subr.mxu0 0.0
  %2272 = vmatpush1.msra.mxu0 0.0
  %2273 = vmatprep.subr.mxu0 0.0
  %2274 = vmatpush1.msra.mxu0 0.0
  %2275 = vmatprep.subr.mxu0 0.0
  %2276 = vmatpush1.msra.mxu0 0.0
  %2277 = vmatprep.subr.mxu0 0.0
  %2278 = vmatpush1.msra.mxu0 0.0
  %2279 = vmatprep.subr.mxu0 0.0
  %2280 = vmatpush1.msra.mxu0 0.0
  %2281 = vmatprep.subr.mxu0 0.0
  %2282 = vmatpush1.msra.mxu0 0.0
  %2283 = vmatprep.subr.mxu0 0.0
  %2284 = vmatpush1.msra.mxu0 0.0
  %2285 = vmatprep.subr.mxu0 0.0
  %2286 = vmatpush1.msra.mxu0 0.0
  %2287 = vmatprep.subr.mxu0 0.0
  %2288 = vmatpush1.msra.mxu0 0.0
  %2289 = vmatprep.subr.mxu0 0.0
  %2290 = vmatpush1.msra.mxu0 0.0
  %2291 = vmatprep.mubr.f32.mxu0 0.0
  %2292 = vmatmul.mubr.f32.gmra.mrb[0].mxu0 %v2222
  %v2293 = vpop.f32.mrb[0].mxu0
  %v2294 = vadd.f32 0.0, %v2293
  %v2295 = vpop.f32.mrb[0].mxu0
  %2296 = vmatprep.mubr.f32.mxu0 0.0
  %2297 = vmatmul.mubr.f32.gmra.mrb[0].mxu0 %v2225
  %v2298 = vpop.f32.mrb[0].mxu0
  %v2299 = vadd.f32 0.0, %v2298
  %v2300 = vpop.f32.mrb[0].mxu0
  %2301 = vdwg.mxu0
  %2302 = vrot.lane.b32.xlu0 %v141, 48
  %v2303 = vpop.permute.xlu0 %2302
  %2304 = vrot.lane.b32.xlu0 %v146, 48
  %v2305 = vpop.permute.xlu0 %2304
  %v2309 = vsel %vm526, %v2209, 0
  %v2312 = vsel %vm526, %v2210, 0
  %2314 = vmatprep.subr.mxu0 0.0
  %2315 = vmatpush1.msra.mxu0 %v2303
  %2316 = vmatprep.subr.mxu0 0.0
  %2317 = vmatpush1.msra.mxu0 %v2305
  %2318 = vmatprep.subr.mxu0 0.0
  %2319 = vmatpush1.msra.mxu0 0.0
  %2320 = vmatprep.subr.mxu0 0.0
  %2321 = vmatpush1.msra.mxu0 0.0
  %2322 = vmatprep.subr.mxu0 0.0
  %2323 = vmatpush1.msra.mxu0 0.0
  %2324 = vmatprep.subr.mxu0 0.0
  %2325 = vmatpush1.msra.mxu0 0.0
  %2326 = vmatprep.subr.mxu0 0.0
  %2327 = vmatpush1.msra.mxu0 0.0
  %2328 = vmatprep.subr.mxu0 0.0
  %2329 = vmatpush1.msra.mxu0 0.0
  %2330 = vmatprep.subr.mxu0 0.0
  %2331 = vmatpush1.msra.mxu0 0.0
  %2332 = vmatprep.subr.mxu0 0.0
  %2333 = vmatpush1.msra.mxu0 0.0
  %2334 = vmatprep.subr.mxu0 0.0
  %2335 = vmatpush1.msra.mxu0 0.0
  %2336 = vmatprep.subr.mxu0 0.0
  %2337 = vmatpush1.msra.mxu0 0.0
  %2338 = vmatprep.subr.mxu0 0.0
  %2339 = vmatpush1.msra.mxu0 0.0
  %2340 = vmatprep.subr.mxu0 0.0
  %2341 = vmatpush1.msra.mxu0 0.0
  %2342 = vmatprep.subr.mxu0 0.0
  %2343 = vmatpush1.msra.mxu0 0.0
  %2344 = vmatprep.subr.mxu0 0.0
  %2345 = vmatpush1.msra.mxu0 0.0
  %2346 = vmatprep.subr.mxu0 0.0
  %2347 = vmatpush1.msra.mxu0 0.0
  %2348 = vmatprep.subr.mxu0 0.0
  %2349 = vmatpush1.msra.mxu0 0.0
  %2350 = vmatprep.subr.mxu0 0.0
  %2351 = vmatpush1.msra.mxu0 0.0
  %2352 = vmatprep.subr.mxu0 0.0
  %2353 = vmatpush1.msra.mxu0 0.0
  %2354 = vmatprep.subr.mxu0 0.0
  %2355 = vmatpush1.msra.mxu0 0.0
  %2356 = vmatprep.subr.mxu0 0.0
  %2357 = vmatpush1.msra.mxu0 0.0
  %2358 = vmatprep.subr.mxu0 0.0
  %2359 = vmatpush1.msra.mxu0 0.0
  %2360 = vmatprep.subr.mxu0 0.0
  %2361 = vmatpush1.msra.mxu0 0.0
  %2362 = vmatprep.subr.mxu0 0.0
  %2363 = vmatpush1.msra.mxu0 0.0
  %2364 = vmatprep.subr.mxu0 0.0
  %2365 = vmatpush1.msra.mxu0 0.0
  %2366 = vmatprep.subr.mxu0 0.0
  %2367 = vmatpush1.msra.mxu0 0.0
  %2368 = vmatprep.subr.mxu0 0.0
  %2369 = vmatpush1.msra.mxu0 0.0
  %2370 = vmatprep.subr.mxu0 0.0
  %2371 = vmatpush1.msra.mxu0 0.0
  %2372 = vmatprep.subr.mxu0 0.0
  %2373 = vmatpush1.msra.mxu0 0.0
  %2374 = vmatprep.subr.mxu0 0.0
  %2375 = vmatpush1.msra.mxu0 0.0
  %2376 = vmatprep.subr.mxu0 0.0
  %2377 = vmatpush1.msra.mxu0 0.0
  %2378 = vmatprep.mubr.f32.mxu0 0.0
  %2379 = vmatmul.mubr.f32.gmra.mrb[0].mxu0 %v2309
  %v2380 = vpop.f32.mrb[0].mxu0
  %v2381 = vadd.f32 0.0, %v2380
  %v2382 = vpop.f32.mrb[0].mxu0
  %2383 = vmatprep.mubr.f32.mxu0 0.0
  %2384 = vmatmul.mubr.f32.gmra.mrb[0].mxu0 %v2312
  %v2385 = vpop.f32.mrb[0].mxu0
  %v2386 = vadd.f32 0.0, %v2385
  %v2387 = vpop.f32.mrb[0].mxu0
  %2388 = vdwg.mxu0
  %2389 = vrot.lane.b32.xlu0 %v151, 48
  %v2390 = vpop.permute.xlu0 %2389
  %2391 = vrot.lane.b32.xlu0 %v156, 48
  %v2392 = vpop.permute.xlu0 %2391
  %v2396 = vsel %vm526, %v2211, 0
  %v2399 = vsel %vm526, %v2212, 0
  %2401 = vmatprep.subr.mxu0 0.0
  %2402 = vmatpush1.msra.mxu0 %v2390
  %2403 = vmatprep.subr.mxu0 0.0
  %2404 = vmatpush1.msra.mxu0 %v2392
  %2405 = vmatprep.subr.mxu0 0.0
  %2406 = vmatpush1.msra.mxu0 0.0
  %2407 = vmatprep.subr.mxu0 0.0
  %2408 = vmatpush1.msra.mxu0 0.0
  %2409 = vmatprep.subr.mxu0 0.0
  %2410 = vmatpush1.msra.mxu0 0.0
  %2411 = vmatprep.subr.mxu0 0.0
  %2412 = vmatpush1.msra.mxu0 0.0
  %2413 = vmatprep.subr.mxu0 0.0
  %2414 = vmatpush1.msra.mxu0 0.0
  %2415 = vmatprep.subr.mxu0 0.0
  %2416 = vmatpush1.msra.mxu0 0.0
  %2417 = vmatprep.subr.mxu0 0.0
  %2418 = vmatpush1.msra.mxu0 0.0
  %2419 = vmatprep.subr.mxu0 0.0
  %2420 = vmatpush1.msra.mxu0 0.0
  %2421 = vmatprep.subr.mxu0 0.0
  %2422 = vmatpush1.msra.mxu0 0.0
  %2423 = vmatprep.subr.mxu0 0.0
  %2424 = vmatpush1.msra.mxu0 0.0
  %2425 = vmatprep.subr.mxu0 0.0
  %2426 = vmatpush1.msra.mxu0 0.0
  %2427 = vmatprep.subr.mxu0 0.0
  %2428 = vmatpush1.msra.mxu0 0.0
  %2429 = vmatprep.subr.mxu0 0.0
  %2430 = vmatpush1.msra.mxu0 0.0
  %2431 = vmatprep.subr.mxu0 0.0
  %2432 = vmatpush1.msra.mxu0 0.0
  %2433 = vmatprep.subr.mxu0 0.0
  %2434 = vmatpush1.msra.mxu0 0.0
  %2435 = vmatprep.subr.mxu0 0.0
  %2436 = vmatpush1.msra.mxu0 0.0
  %2437 = vmatprep.subr.mxu0 0.0
  %2438 = vmatpush1.msra.mxu0 0.0
  %2439 = vmatprep.subr.mxu0 0.0
  %2440 = vmatpush1.msra.mxu0 0.0
  %2441 = vmatprep.subr.mxu0 0.0
  %2442 = vmatpush1.msra.mxu0 0.0
  %2443 = vmatprep.subr.mxu0 0.0
  %2444 = vmatpush1.msra.mxu0 0.0
  %2445 = vmatprep.subr.mxu0 0.0
  %2446 = vmatpush1.msra.mxu0 0.0
  %2447 = vmatprep.subr.mxu0 0.0
  %2448 = vmatpush1.msra.mxu0 0.0
  %2449 = vmatprep.subr.mxu0 0.0
  %2450 = vmatpush1.msra.mxu0 0.0
  %2451 = vmatprep.subr.mxu0 0.0
  %2452 = vmatpush1.msra.mxu0 0.0
  %2453 = vmatprep.subr.mxu0 0.0
  %2454 = vmatpush1.msra.mxu0 0.0
  %2455 = vmatprep.subr.mxu0 0.0
  %2456 = vmatpush1.msra.mxu0 0.0
  %2457 = vmatprep.subr.mxu0 0.0
  %2458 = vmatpush1.msra.mxu0 0.0
  %2459 = vmatprep.subr.mxu0 0.0
  %2460 = vmatpush1.msra.mxu0 0.0
  %2461 = vmatprep.subr.mxu0 0.0
  %2462 = vmatpush1.msra.mxu0 0.0
  %2463 = vmatprep.subr.mxu0 0.0
  %2464 = vmatpush1.msra.mxu0 0.0
  %2465 = vmatprep.mubr.f32.mxu0 0.0
  %2466 = vmatmul.mubr.f32.gmra.mrb[0].mxu0 %v2396
  %v2467 = vpop.f32.mrb[0].mxu0
  %v2468 = vadd.f32 0.0, %v2467
  %v2469 = vpop.f32.mrb[0].mxu0
  %2470 = vmatprep.mubr.f32.mxu0 0.0
  %2471 = vmatmul.mubr.f32.gmra.mrb[0].mxu0 %v2399
  %v2472 = vpop.f32.mrb[0].mxu0
  %v2473 = vadd.f32 0.0, %v2472
  %v2474 = vpop.f32.mrb[0].mxu0
  %2475 = vdwg.mxu0
  %2476 = vrot.lane.b32.xlu0 %v161, 48
  %v2477 = vpop.permute.xlu0 %2476
  %2478 = vrot.lane.b32.xlu0 %v166, 48
  %v2479 = vpop.permute.xlu0 %2478
  %v2483 = vsel %vm526, %v2213, 0
  %v2486 = vsel %vm526, %v2214, 0
  %2488 = vmatprep.subr.mxu0 0.0
  %2489 = vmatpush1.msra.mxu0 %v2477
  %2490 = vmatprep.subr.mxu0 0.0
  %2491 = vmatpush1.msra.mxu0 %v2479
  %2492 = vmatprep.subr.mxu0 0.0
  %2493 = vmatpush1.msra.mxu0 0.0
  %2494 = vmatprep.subr.mxu0 0.0
  %2495 = vmatpush1.msra.mxu0 0.0
  %2496 = vmatprep.subr.mxu0 0.0
  %2497 = vmatpush1.msra.mxu0 0.0
  %2498 = vmatprep.subr.mxu0 0.0
  %2499 = vmatpush1.msra.mxu0 0.0
  %2500 = vmatprep.subr.mxu0 0.0
  %2501 = vmatpush1.msra.mxu0 0.0
  %2502 = vmatprep.subr.mxu0 0.0
  %2503 = vmatpush1.msra.mxu0 0.0
  %2504 = vmatprep.subr.mxu0 0.0
  %2505 = vmatpush1.msra.mxu0 0.0
  %2506 = vmatprep.subr.mxu0 0.0
  %2507 = vmatpush1.msra.mxu0 0.0
  %2508 = vmatprep.subr.mxu0 0.0
  %2509 = vmatpush1.msra.mxu0 0.0
  %2510 = vmatprep.subr.mxu0 0.0
  %2511 = vmatpush1.msra.mxu0 0.0
  %2512 = vmatprep.subr.mxu0 0.0
  %2513 = vmatpush1.msra.mxu0 0.0
  %2514 = vmatprep.subr.mxu0 0.0
  %2515 = vmatpush1.msra.mxu0 0.0
  %2516 = vmatprep.subr.mxu0 0.0
  %2517 = vmatpush1.msra.mxu0 0.0
  %2518 = vmatprep.subr.mxu0 0.0
  %2519 = vmatpush1.msra.mxu0 0.0
  %2520 = vmatprep.subr.mxu0 0.0
  %2521 = vmatpush1.msra.mxu0 0.0
  %2522 = vmatprep.subr.mxu0 0.0
  %2523 = vmatpush1.msra.mxu0 0.0
  %2524 = vmatprep.subr.mxu0 0.0
  %2525 = vmatpush1.msra.mxu0 0.0
  %2526 = vmatprep.subr.mxu0 0.0
  %2527 = vmatpush1.msra.mxu0 0.0
  %2528 = vmatprep.subr.mxu0 0.0
  %2529 = vmatpush1.msra.mxu0 0.0
  %2530 = vmatprep.subr.mxu0 0.0
  %2531 = vmatpush1.msra.mxu0 0.0
  %2532 = vmatprep.subr.mxu0 0.0
  %2533 = vmatpush1.msra.mxu0 0.0
  %2534 = vmatprep.subr.mxu0 0.0
  %2535 = vmatpush1.msra.mxu0 0.0
  %2536 = vmatprep.subr.mxu0 0.0
  %2537 = vmatpush1.msra.mxu0 0.0
  %2538 = vmatprep.subr.mxu0 0.0
  %2539 = vmatpush1.msra.mxu0 0.0
  %2540 = vmatprep.subr.mxu0 0.0
  %2541 = vmatpush1.msra.mxu0 0.0
  %2542 = vmatprep.subr.mxu0 0.0
  %2543 = vmatpush1.msra.mxu0 0.0
  %2544 = vmatprep.subr.mxu0 0.0
  %2545 = vmatpush1.msra.mxu0 0.0
  %2546 = vmatprep.subr.mxu0 0.0
  %2547 = vmatpush1.msra.mxu0 0.0
  %2548 = vmatprep.subr.mxu0 0.0
  %2549 = vmatpush1.msra.mxu0 0.0
  %2550 = vmatprep.subr.mxu0 0.0
  %2551 = vmatpush1.msra.mxu0 0.0
  %2552 = vmatprep.mubr.f32.mxu0 0.0
  %2553 = vmatmul.mubr.f32.gmra.mrb[0].mxu0 %v2483
  %v2554 = vpop.f32.mrb[0].mxu0
  %v2555 = vadd.f32 0.0, %v2554
  %v2556 = vpop.f32.mrb[0].mxu0
  %2557 = vmatprep.mubr.f32.mxu0 0.0
  %2558 = vmatmul.mubr.f32.gmra.mrb[0].mxu0 %v2486
  %v2559 = vpop.f32.mrb[0].mxu0
  %v2560 = vadd.f32 0.0, %v2559
  %v2561 = vpop.f32.mrb[0].mxu0
  %2562 = vdwg.mxu0
  %2563 = vrot.lane.b32.xlu0 %v131, 104
  %v2564 = vpop.permute.xlu0 %2563
  %2565 = vrot.lane.b32.xlu0 %v136, 104
  %v2566 = vpop.permute.xlu0 %2565
  %2567 = vrot.lane.b32.xlu0 %v131, 72
  %v2568 = vpop.permute.xlu0 %2567
  %2569 = vrot.lane.b32.xlu0 %v136, 72
  %v2570 = vpop.permute.xlu0 %2569
  %v2571 = vsel %vm175, %v2564, 0
  %v2573 = vsel %vm175, %v2566, 0
  %v2575 = vsel %vm175, %v2568, 0
  %v2577 = vsel %vm175, %v2570, 0
  %2579 = vmatprep.subr.mxu0 0.0
  %2580 = vmatpush1.xpose.msra.mxu0 %v2575
  %2581 = vmatprep.subr.mxu0 0.0
  %2582 = vmatpush1.xpose.msra.mxu0 %v2577
  %2583 = vmatprep.subr.mxu0 0.0
  %2584 = vmatpush1.xpose.msra.mxu0 0.0
  %2585 = vmatprep.subr.mxu0 0.0
  %2586 = vmatpush1.xpose.msra.mxu0 0.0
  %2587 = vmatprep.subr.mxu0 0.0
  %2588 = vmatpush1.xpose.msra.mxu0 0.0
  %2589 = vmatprep.subr.mxu0 0.0
  %2590 = vmatpush1.xpose.msra.mxu0 0.0
  %2591 = vmatprep.subr.mxu0 0.0
  %2592 = vmatpush1.xpose.msra.mxu0 0.0
  %2593 = vmatprep.subr.mxu0 0.0
  %2594 = vmatpush1.xpose.msra.mxu0 0.0
  %2595 = vmatprep.subr.mxu0 0.0
  %2596 = vmatpush1.xpose.msra.mxu0 0.0
  %2597 = vmatprep.subr.mxu0 0.0
  %2598 = vmatpush1.xpose.msra.mxu0 0.0
  %2599 = vmatprep.subr.mxu0 0.0
  %2600 = vmatpush1.xpose.msra.mxu0 0.0
  %2601 = vmatprep.subr.mxu0 0.0
  %2602 = vmatpush1.xpose.msra.mxu0 0.0
  %2603 = vmatprep.subr.mxu0 0.0
  %2604 = vmatpush1.xpose.msra.mxu0 0.0
  %2605 = vmatprep.subr.mxu0 0.0
  %2606 = vmatpush1.xpose.msra.mxu0 0.0
  %2607 = vmatprep.subr.mxu0 0.0
  %2608 = vmatpush1.xpose.msra.mxu0 0.0
  %2609 = vmatprep.subr.mxu0 0.0
  %2610 = vmatpush1.xpose.msra.mxu0 0.0
  %2611 = vmatprep.subr.mxu0 0.0
  %2612 = vmatpush1.xpose.msra.mxu0 0.0
  %2613 = vmatprep.subr.mxu0 0.0
  %2614 = vmatpush1.xpose.msra.mxu0 0.0
  %2615 = vmatprep.subr.mxu0 0.0
  %2616 = vmatpush1.xpose.msra.mxu0 0.0
  %2617 = vmatprep.subr.mxu0 0.0
  %2618 = vmatpush1.xpose.msra.mxu0 0.0
  %2619 = vmatprep.subr.mxu0 0.0
  %2620 = vmatpush1.xpose.msra.mxu0 0.0
  %2621 = vmatprep.subr.mxu0 0.0
  %2622 = vmatpush1.xpose.msra.mxu0 0.0
  %2623 = vmatprep.subr.mxu0 0.0
  %2624 = vmatpush1.xpose.msra.mxu0 0.0
  %2625 = vmatprep.subr.mxu0 0.0
  %2626 = vmatpush1.xpose.msra.mxu0 0.0
  %2627 = vmatprep.subr.mxu0 0.0
  %2628 = vmatpush1.xpose.msra.mxu0 0.0
  %2629 = vmatprep.subr.mxu0 0.0
  %2630 = vmatpush1.xpose.msra.mxu0 0.0
  %2631 = vmatprep.subr.mxu0 0.0
  %2632 = vmatpush1.xpose.msra.mxu0 0.0
  %2633 = vmatprep.subr.mxu0 0.0
  %2634 = vmatpush1.xpose.msra.mxu0 0.0
  %2635 = vmatprep.subr.mxu0 0.0
  %2636 = vmatpush1.xpose.msra.mxu0 0.0
  %2637 = vmatprep.subr.mxu0 0.0
  %2638 = vmatpush1.xpose.msra.mxu0 0.0
  %2639 = vmatprep.subr.mxu0 0.0
  %2640 = vmatpush1.xpose.msra.mxu0 0.0
  %2641 = vmatprep.subr.mxu0 0.0
  %2642 = vmatpush1.xpose.msra.mxu0 0.0
  %2643 = vmatprep.mubr.f32.mxu0 0.0
  %2644 = vmatmul.mubr.f32.gmra.mrb[0].mxu0 %v2571
  %v2645 = vpop.f32.mrb[0].mxu0
  %v2646 = vadd.f32 0.0, %v2645
  %v2647 = vpop.f32.mrb[0].mxu0
  %2648 = vmatprep.mubr.f32.mxu0 0.0
  %2649 = vmatmul.mubr.f32.gmra.mrb[0].mxu0 %v2573
  %v2650 = vpop.f32.mrb[0].mxu0
  %v2651 = vadd.f32 0.0, %v2650
  %v2652 = vpop.f32.mrb[0].mxu0
  %2653 = vdwg.mxu0
  %2654 = vrot.lane.b32.xlu0 %v141, 104
  %v2655 = vpop.permute.xlu0 %2654
  %2656 = vrot.lane.b32.xlu0 %v146, 104
  %v2657 = vpop.permute.xlu0 %2656
  %2658 = vrot.lane.b32.xlu0 %v141, 72
  %v2659 = vpop.permute.xlu0 %2658
  %2660 = vrot.lane.b32.xlu0 %v146, 72
  %v2661 = vpop.permute.xlu0 %2660
  %v2662 = vsel %vm175, %v2655, 0
  %v2664 = vsel %vm175, %v2657, 0
  %v2666 = vsel %vm175, %v2659, 0
  %v2668 = vsel %vm175, %v2661, 0
  %2670 = vmatprep.subr.mxu0 0.0
  %2671 = vmatpush1.xpose.msra.mxu0 %v2666
  %2672 = vmatprep.subr.mxu0 0.0
  %2673 = vmatpush1.xpose.msra.mxu0 %v2668
  %2674 = vmatprep.subr.mxu0 0.0
  %2675 = vmatpush1.xpose.msra.mxu0 0.0
  %2676 = vmatprep.subr.mxu0 0.0
  %2677 = vmatpush1.xpose.msra.mxu0 0.0
  %2678 = vmatprep.subr.mxu0 0.0
  %2679 = vmatpush1.xpose.msra.mxu0 0.0
  %2680 = vmatprep.subr.mxu0 0.0
  %2681 = vmatpush1.xpose.msra.mxu0 0.0
  %2682 = vmatprep.subr.mxu0 0.0
  %2683 = vmatpush1.xpose.msra.mxu0 0.0
  %2684 = vmatprep.subr.mxu0 0.0
  %2685 = vmatpush1.xpose.msra.mxu0 0.0
  %2686 = vmatprep.subr.mxu0 0.0
  %2687 = vmatpush1.xpose.msra.mxu0 0.0
  %2688 = vmatprep.subr.mxu0 0.0
  %2689 = vmatpush1.xpose.msra.mxu0 0.0
  %2690 = vmatprep.subr.mxu0 0.0
  %2691 = vmatpush1.xpose.msra.mxu0 0.0
  %2692 = vmatprep.subr.mxu0 0.0
  %2693 = vmatpush1.xpose.msra.mxu0 0.0
  %2694 = vmatprep.subr.mxu0 0.0
  %2695 = vmatpush1.xpose.msra.mxu0 0.0
  %2696 = vmatprep.subr.mxu0 0.0
  %2697 = vmatpush1.xpose.msra.mxu0 0.0
  %2698 = vmatprep.subr.mxu0 0.0
  %2699 = vmatpush1.xpose.msra.mxu0 0.0
  %2700 = vmatprep.subr.mxu0 0.0
  %2701 = vmatpush1.xpose.msra.mxu0 0.0
  %2702 = vmatprep.subr.mxu0 0.0
  %2703 = vmatpush1.xpose.msra.mxu0 0.0
  %2704 = vmatprep.subr.mxu0 0.0
  %2705 = vmatpush1.xpose.msra.mxu0 0.0
  %2706 = vmatprep.subr.mxu0 0.0
  %2707 = vmatpush1.xpose.msra.mxu0 0.0
  %2708 = vmatprep.subr.mxu0 0.0
  %2709 = vmatpush1.xpose.msra.mxu0 0.0
  %2710 = vmatprep.subr.mxu0 0.0
  %2711 = vmatpush1.xpose.msra.mxu0 0.0
  %2712 = vmatprep.subr.mxu0 0.0
  %2713 = vmatpush1.xpose.msra.mxu0 0.0
  %2714 = vmatprep.subr.mxu0 0.0
  %2715 = vmatpush1.xpose.msra.mxu0 0.0
  %2716 = vmatprep.subr.mxu0 0.0
  %2717 = vmatpush1.xpose.msra.mxu0 0.0
  %2718 = vmatprep.subr.mxu0 0.0
  %2719 = vmatpush1.xpose.msra.mxu0 0.0
  %2720 = vmatprep.subr.mxu0 0.0
  %2721 = vmatpush1.xpose.msra.mxu0 0.0
  %2722 = vmatprep.subr.mxu0 0.0
  %2723 = vmatpush1.xpose.msra.mxu0 0.0
  %2724 = vmatprep.subr.mxu0 0.0
  %2725 = vmatpush1.xpose.msra.mxu0 0.0
  %2726 = vmatprep.subr.mxu0 0.0
  %2727 = vmatpush1.xpose.msra.mxu0 0.0
  %2728 = vmatprep.subr.mxu0 0.0
  %2729 = vmatpush1.xpose.msra.mxu0 0.0
  %2730 = vmatprep.subr.mxu0 0.0
  %2731 = vmatpush1.xpose.msra.mxu0 0.0
  %2732 = vmatprep.subr.mxu0 0.0
  %2733 = vmatpush1.xpose.msra.mxu0 0.0
  %2734 = vmatprep.mubr.f32.mxu0 0.0
  %2735 = vmatmul.mubr.f32.gmra.mrb[0].mxu0 %v2662
  %v2736 = vpop.f32.mrb[0].mxu0
  %v2737 = vadd.f32 0.0, %v2736
  %v2738 = vpop.f32.mrb[0].mxu0
  %2739 = vmatprep.mubr.f32.mxu0 0.0
  %2740 = vmatmul.mubr.f32.gmra.mrb[0].mxu0 %v2664
  %v2741 = vpop.f32.mrb[0].mxu0
  %v2742 = vadd.f32 0.0, %v2741
  %v2743 = vpop.f32.mrb[0].mxu0
  %2744 = vdwg.mxu0
  %2745 = vrot.lane.b32.xlu0 %v151, 104
  %v2746 = vpop.permute.xlu0 %2745
  %2747 = vrot.lane.b32.xlu0 %v156, 104
  %v2748 = vpop.permute.xlu0 %2747
  %2749 = vrot.lane.b32.xlu0 %v151, 72
  %v2750 = vpop.permute.xlu0 %2749
  %2751 = vrot.lane.b32.xlu0 %v156, 72
  %v2752 = vpop.permute.xlu0 %2751
  %v2753 = vsel %vm175, %v2746, 0
  %v2755 = vsel %vm175, %v2748, 0
  %v2757 = vsel %vm175, %v2750, 0
  %v2759 = vsel %vm175, %v2752, 0
  %2761 = vmatprep.subr.mxu0 0.0
  %2762 = vmatpush1.xpose.msra.mxu0 %v2757
  %2763 = vmatprep.subr.mxu0 0.0
  %2764 = vmatpush1.xpose.msra.mxu0 %v2759
  %2765 = vmatprep.subr.mxu0 0.0
  %2766 = vmatpush1.xpose.msra.mxu0 0.0
  %2767 = vmatprep.subr.mxu0 0.0
  %2768 = vmatpush1.xpose.msra.mxu0 0.0
  %2769 = vmatprep.subr.mxu0 0.0
  %2770 = vmatpush1.xpose.msra.mxu0 0.0
  %2771 = vmatprep.subr.mxu0 0.0
  %2772 = vmatpush1.xpose.msra.mxu0 0.0
  %2773 = vmatprep.subr.mxu0 0.0
  %2774 = vmatpush1.xpose.msra.mxu0 0.0
  %2775 = vmatprep.subr.mxu0 0.0
  %2776 = vmatpush1.xpose.msra.mxu0 0.0
  %2777 = vmatprep.subr.mxu0 0.0
  %2778 = vmatpush1.xpose.msra.mxu0 0.0
  %2779 = vmatprep.subr.mxu0 0.0
  %2780 = vmatpush1.xpose.msra.mxu0 0.0
  %2781 = vmatprep.subr.mxu0 0.0
  %2782 = vmatpush1.xpose.msra.mxu0 0.0
  %2783 = vmatprep.subr.mxu0 0.0
  %2784 = vmatpush1.xpose.msra.mxu0 0.0
  %2785 = vmatprep.subr.mxu0 0.0
  %2786 = vmatpush1.xpose.msra.mxu0 0.0
  %2787 = vmatprep.subr.mxu0 0.0
  %2788 = vmatpush1.xpose.msra.mxu0 0.0
  %2789 = vmatprep.subr.mxu0 0.0
  %2790 = vmatpush1.xpose.msra.mxu0 0.0
  %2791 = vmatprep.subr.mxu0 0.0
  %2792 = vmatpush1.xpose.msra.mxu0 0.0
  %2793 = vmatprep.subr.mxu0 0.0
  %2794 = vmatpush1.xpose.msra.mxu0 0.0
  %2795 = vmatprep.subr.mxu0 0.0
  %2796 = vmatpush1.xpose.msra.mxu0 0.0
  %2797 = vmatprep.subr.mxu0 0.0
  %2798 = vmatpush1.xpose.msra.mxu0 0.0
  %2799 = vmatprep.subr.mxu0 0.0
  %2800 = vmatpush1.xpose.msra.mxu0 0.0
  %2801 = vmatprep.subr.mxu0 0.0
  %2802 = vmatpush1.xpose.msra.mxu0 0.0
  %2803 = vmatprep.subr.mxu0 0.0
  %2804 = vmatpush1.xpose.msra.mxu0 0.0
  %2805 = vmatprep.subr.mxu0 0.0
  %2806 = vmatpush1.xpose.msra.mxu0 0.0
  %2807 = vmatprep.subr.mxu0 0.0
  %2808 = vmatpush1.xpose.msra.mxu0 0.0
  %2809 = vmatprep.subr.mxu0 0.0
  %2810 = vmatpush1.xpose.msra.mxu0 0.0
  %2811 = vmatprep.subr.mxu0 0.0
  %2812 = vmatpush1.xpose.msra.mxu0 0.0
  %2813 = vmatprep.subr.mxu0 0.0
  %2814 = vmatpush1.xpose.msra.mxu0 0.0
  %2815 = vmatprep.subr.mxu0 0.0
  %2816 = vmatpush1.xpose.msra.mxu0 0.0
  %2817 = vmatprep.subr.mxu0 0.0
  %2818 = vmatpush1.xpose.msra.mxu0 0.0
  %2819 = vmatprep.subr.mxu0 0.0
  %2820 = vmatpush1.xpose.msra.mxu0 0.0
  %2821 = vmatprep.subr.mxu0 0.0
  %2822 = vmatpush1.xpose.msra.mxu0 0.0
  %2823 = vmatprep.subr.mxu0 0.0
  %2824 = vmatpush1.xpose.msra.mxu0 0.0
  %2825 = vmatprep.mubr.f32.mxu0 0.0
  %2826 = vmatmul.mubr.f32.gmra.mrb[0].mxu0 %v2753
  %v2827 = vpop.f32.mrb[0].mxu0
  %v2828 = vadd.f32 0.0, %v2827
  %v2829 = vpop.f32.mrb[0].mxu0
  %2830 = vmatprep.mubr.f32.mxu0 0.0
  %2831 = vmatmul.mubr.f32.gmra.mrb[0].mxu0 %v2755
  %v2832 = vpop.f32.mrb[0].mxu0
  %v2833 = vadd.f32 0.0, %v2832
  %v2834 = vpop.f32.mrb[0].mxu0
  %2835 = vdwg.mxu0
  %2836 = vrot.lane.b32.xlu0 %v161, 104
  %v2837 = vpop.permute.xlu0 %2836
  %2838 = vrot.lane.b32.xlu0 %v166, 104
  %v2839 = vpop.permute.xlu0 %2838
  %2840 = vrot.lane.b32.xlu0 %v161, 72
  %v2841 = vpop.permute.xlu0 %2840
  %2842 = vrot.lane.b32.xlu0 %v166, 72
  %v2843 = vpop.permute.xlu0 %2842
  %v2844 = vsel %vm175, %v2837, 0
  %v2846 = vsel %vm175, %v2839, 0
  %v2848 = vsel %vm175, %v2841, 0
  %v2850 = vsel %vm175, %v2843, 0
  %2852 = vmatprep.subr.mxu0 0.0
  %2853 = vmatpush1.xpose.msra.mxu0 %v2848
  %2854 = vmatprep.subr.mxu0 0.0
  %2855 = vmatpush1.xpose.msra.mxu0 %v2850
  %2856 = vmatprep.subr.mxu0 0.0
  %2857 = vmatpush1.xpose.msra.mxu0 0.0
  %2858 = vmatprep.subr.mxu0 0.0
  %2859 = vmatpush1.xpose.msra.mxu0 0.0
  %2860 = vmatprep.subr.mxu0 0.0
  %2861 = vmatpush1.xpose.msra.mxu0 0.0
  %2862 = vmatprep.subr.mxu0 0.0
  %2863 = vmatpush1.xpose.msra.mxu0 0.0
  %2864 = vmatprep.subr.mxu0 0.0
  %2865 = vmatpush1.xpose.msra.mxu0 0.0
  %2866 = vmatprep.subr.mxu0 0.0
  %2867 = vmatpush1.xpose.msra.mxu0 0.0
  %2868 = vmatprep.subr.mxu0 0.0
  %2869 = vmatpush1.xpose.msra.mxu0 0.0
  %2870 = vmatprep.subr.mxu0 0.0
  %2871 = vmatpush1.xpose.msra.mxu0 0.0
  %2872 = vmatprep.subr.mxu0 0.0
  %2873 = vmatpush1.xpose.msra.mxu0 0.0
  %2874 = vmatprep.subr.mxu0 0.0
  %2875 = vmatpush1.xpose.msra.mxu0 0.0
  %2876 = vmatprep.subr.mxu0 0.0
  %2877 = vmatpush1.xpose.msra.mxu0 0.0
  %2878 = vmatprep.subr.mxu0 0.0
  %2879 = vmatpush1.xpose.msra.mxu0 0.0
  %2880 = vmatprep.subr.mxu0 0.0
  %2881 = vmatpush1.xpose.msra.mxu0 0.0
  %2882 = vmatprep.subr.mxu0 0.0
  %2883 = vmatpush1.xpose.msra.mxu0 0.0
  %2884 = vmatprep.subr.mxu0 0.0
  %2885 = vmatpush1.xpose.msra.mxu0 0.0
  %2886 = vmatprep.subr.mxu0 0.0
  %2887 = vmatpush1.xpose.msra.mxu0 0.0
  %2888 = vmatprep.subr.mxu0 0.0
  %2889 = vmatpush1.xpose.msra.mxu0 0.0
  %2890 = vmatprep.subr.mxu0 0.0
  %2891 = vmatpush1.xpose.msra.mxu0 0.0
  %2892 = vmatprep.subr.mxu0 0.0
  %2893 = vmatpush1.xpose.msra.mxu0 0.0
  %2894 = vmatprep.subr.mxu0 0.0
  %2895 = vmatpush1.xpose.msra.mxu0 0.0
  %2896 = vmatprep.subr.mxu0 0.0
  %2897 = vmatpush1.xpose.msra.mxu0 0.0
  %2898 = vmatprep.subr.mxu0 0.0
  %2899 = vmatpush1.xpose.msra.mxu0 0.0
  %2900 = vmatprep.subr.mxu0 0.0
  %2901 = vmatpush1.xpose.msra.mxu0 0.0
  %2902 = vmatprep.subr.mxu0 0.0
  %2903 = vmatpush1.xpose.msra.mxu0 0.0
  %2904 = vmatprep.subr.mxu0 0.0
  %2905 = vmatpush1.xpose.msra.mxu0 0.0
  %2906 = vmatprep.subr.mxu0 0.0
  %2907 = vmatpush1.xpose.msra.mxu0 0.0
  %2908 = vmatprep.subr.mxu0 0.0
  %2909 = vmatpush1.xpose.msra.mxu0 0.0
  %2910 = vmatprep.subr.mxu0 0.0
  %2911 = vmatpush1.xpose.msra.mxu0 0.0
  %2912 = vmatprep.subr.mxu0 0.0
  %2913 = vmatpush1.xpose.msra.mxu0 0.0
  %2914 = vmatprep.subr.mxu0 0.0
  %2915 = vmatpush1.xpose.msra.mxu0 0.0
  %2916 = vmatprep.mubr.f32.mxu0 0.0
  %2917 = vmatmul.mubr.f32.gmra.mrb[0].mxu0 %v2844
  %v2918 = vpop.f32.mrb[0].mxu0
  %v2919 = vadd.f32 0.0, %v2918
  %v2920 = vpop.f32.mrb[0].mxu0
  %2921 = vmatprep.mubr.f32.mxu0 0.0
  %2922 = vmatmul.mubr.f32.gmra.mrb[0].mxu0 %v2846
  %v2923 = vpop.f32.mrb[0].mxu0
  %v2924 = vadd.f32 0.0, %v2923
  %v2925 = vpop.f32.mrb[0].mxu0
  %2926 = vdwg.mxu0
  %v2927 = vsel %vm526, %v2646, -inf
  %2928 = vmax.xlane.f32.xlu0 %v2927
  %v2929 = vpop.xlane.xlu0 %2928
  %v2930 = vsel %vm526, %v2651, -inf
  %2931 = vmax.xlane.f32.xlu0 %v2930
  %v2932 = vpop.xlane.xlu0 %2931
  %v2933 = vsel %vm526, %v2737, -inf
  %2934 = vmax.xlane.f32.xlu0 %v2933
  %v2935 = vpop.xlane.xlu0 %2934
  %v2936 = vsel %vm526, %v2742, -inf
  %2937 = vmax.xlane.f32.xlu0 %v2936
  %v2938 = vpop.xlane.xlu0 %2937
  %v2939 = vsel %vm526, %v2828, -inf
  %2940 = vmax.xlane.f32.xlu0 %v2939
  %v2941 = vpop.xlane.xlu0 %2940
  %v2942 = vsel %vm526, %v2833, -inf
  %2943 = vmax.xlane.f32.xlu0 %v2942
  %v2944 = vpop.xlane.xlu0 %2943
  %v2945 = vsel %vm526, %v2919, -inf
  %2946 = vmax.xlane.f32.xlu0 %v2945
  %v2947 = vpop.xlane.xlu0 %2946
  %v2948 = vsel %vm526, %v2924, -inf
  %2949 = vmax.xlane.f32.xlu0 %v2948
  %v2950 = vpop.xlane.xlu0 %2949
  %v2951 = vsub.f32 %v2646, %v2929
  %v2952 = vsub.f32 %v2651, %v2932
  %v2953 = vsub.f32 %v2737, %v2935
  %v2954 = vsub.f32 %v2742, %v2938
  %v2955 = vsub.f32 %v2828, %v2941
  %v2956 = vsub.f32 %v2833, %v2944
  %v2957 = vsub.f32 %v2919, %v2947
  %v2958 = vsub.f32 %v2924, %v2950
  %v2959 = vmul.f32 %v2951, 1.442695
  %v2960 = vpow.pop %v2959
  %v2961 = vmul.f32 %v2952, 1.442695
  %v2962 = vpow.pop %v2961
  %v2963 = vmul.f32 %v2953, 1.442695
  %v2964 = vpow.pop %v2963
  %v2965 = vmul.f32 %v2954, 1.442695
  %v2966 = vpow.pop %v2965
  %v2967 = vmul.f32 %v2955, 1.442695
  %v2968 = vpow.pop %v2967
  %v2969 = vmul.f32 %v2956, 1.442695
  %v2970 = vpow.pop %v2969
  %v2971 = vmul.f32 %v2957, 1.442695
  %v2972 = vpow.pop %v2971
  %v2973 = vmul.f32 %v2958, 1.442695
  %v2974 = vpow.pop %v2973
  %v2975 = vsel %vm526, %v2960, 0.0
  %2976 = vadd.xlane.f32.xlu0 %v2975
  %v2977 = vpop.xlane.xlu0 %2976
  %v2978 = vsel %vm526, %v2962, 0.0
  %2979 = vadd.xlane.f32.xlu0 %v2978
  %v2980 = vpop.xlane.xlu0 %2979
  %v2981 = vsel %vm526, %v2964, 0.0
  %2982 = vadd.xlane.f32.xlu0 %v2981
  %v2983 = vpop.xlane.xlu0 %2982
  %v2984 = vsel %vm526, %v2966, 0.0
  %2985 = vadd.xlane.f32.xlu0 %v2984
  %v2986 = vpop.xlane.xlu0 %2985
  %v2987 = vsel %vm526, %v2968, 0.0
  %2988 = vadd.xlane.f32.xlu0 %v2987
  %v2989 = vpop.xlane.xlu0 %2988
  %v2990 = vsel %vm526, %v2970, 0.0
  %2991 = vadd.xlane.f32.xlu0 %v2990
  %v2992 = vpop.xlane.xlu0 %2991
  %v2993 = vsel %vm526, %v2972, 0.0
  %2994 = vadd.xlane.f32.xlu0 %v2993
  %v2995 = vpop.xlane.xlu0 %2994
  %v2996 = vsel %vm526, %v2974, 0.0
  %2997 = vadd.xlane.f32.xlu0 %v2996
  %v2998 = vpop.xlane.xlu0 %2997
  %v2999 = vrcp.pop %v2977
  %v3000 = vrcp.pop %v2980
  %v3001 = vrcp.pop %v2983
  %v3002 = vrcp.pop %v2986
  %v3003 = vrcp.pop %v2989
  %v3004 = vrcp.pop %v2992
  %v3005 = vrcp.pop %v2995
  %v3006 = vrcp.pop %v2998
  %v3007 = vmul.f32 %v2960, %v2999
  %v3008 = vmul.f32 %v2962, %v3000
  %v3009 = vmul.f32 %v2964, %v3001
  %v3010 = vmul.f32 %v2966, %v3002
  %v3011 = vmul.f32 %v2968, %v3003
  %v3012 = vmul.f32 %v2970, %v3004
  %v3013 = vmul.f32 %v2972, %v3005
  %v3014 = vmul.f32 %v2974, %v3006
  %3015 = vrot.lane.b32.xlu0 %v131, 40
  %v3016 = vpop.permute.xlu0 %3015
  %3017 = vrot.lane.b32.xlu0 %v136, 40
  %v3018 = vpop.permute.xlu0 %3017
  %v3022 = vsel %vm526, %v3007, 0
  %v3025 = vsel %vm526, %v3008, 0
  %3027 = vmatprep.subr.mxu0 0.0
  %3028 = vmatpush1.msra.mxu0 %v3016
  %3029 = vmatprep.subr.mxu0 0.0
  %3030 = vmatpush1.msra.mxu0 %v3018
  %3031 = vmatprep.subr.mxu0 0.0
  %3032 = vmatpush1.msra.mxu0 0.0
  %3033 = vmatprep.subr.mxu0 0.0
  %3034 = vmatpush1.msra.mxu0 0.0
  %3035 = vmatprep.subr.mxu0 0.0
  %3036 = vmatpush1.msra.mxu0 0.0
  %3037 = vmatprep.subr.mxu0 0.0
  %3038 = vmatpush1.msra.mxu0 0.0
  %3039 = vmatprep.subr.mxu0 0.0
  %3040 = vmatpush1.msra.mxu0 0.0
  %3041 = vmatprep.subr.mxu0 0.0
  %3042 = vmatpush1.msra.mxu0 0.0
  %3043 = vmatprep.subr.mxu0 0.0
  %3044 = vmatpush1.msra.mxu0 0.0
  %3045 = vmatprep.subr.mxu0 0.0
  %3046 = vmatpush1.msra.mxu0 0.0
  %3047 = vmatprep.subr.mxu0 0.0
  %3048 = vmatpush1.msra.mxu0 0.0
  %3049 = vmatprep.subr.mxu0 0.0
  %3050 = vmatpush1.msra.mxu0 0.0
  %3051 = vmatprep.subr.mxu0 0.0
  %3052 = vmatpush1.msra.mxu0 0.0
  %3053 = vmatprep.subr.mxu0 0.0
  %3054 = vmatpush1.msra.mxu0 0.0
  %3055 = vmatprep.subr.mxu0 0.0
  %3056 = vmatpush1.msra.mxu0 0.0
  %3057 = vmatprep.subr.mxu0 0.0
  %3058 = vmatpush1.msra.mxu0 0.0
  %3059 = vmatprep.subr.mxu0 0.0
  %3060 = vmatpush1.msra.mxu0 0.0
  %3061 = vmatprep.subr.mxu0 0.0
  %3062 = vmatpush1.msra.mxu0 0.0
  %3063 = vmatprep.subr.mxu0 0.0
  %3064 = vmatpush1.msra.mxu0 0.0
  %3065 = vmatprep.subr.mxu0 0.0
  %3066 = vmatpush1.msra.mxu0 0.0
  %3067 = vmatprep.subr.mxu0 0.0
  %3068 = vmatpush1.msra.mxu0 0.0
  %3069 = vmatprep.subr.mxu0 0.0
  %3070 = vmatpush1.msra.mxu0 0.0
  %3071 = vmatprep.subr.mxu0 0.0
  %3072 = vmatpush1.msra.mxu0 0.0
  %3073 = vmatprep.subr.mxu0 0.0
  %3074 = vmatpush1.msra.mxu0 0.0
  %3075 = vmatprep.subr.mxu0 0.0
  %3076 = vmatpush1.msra.mxu0 0.0
  %3077 = vmatprep.subr.mxu0 0.0
  %3078 = vmatpush1.msra.mxu0 0.0
  %3079 = vmatprep.subr.mxu0 0.0
  %3080 = vmatpush1.msra.mxu0 0.0
  %3081 = vmatprep.subr.mxu0 0.0
  %3082 = vmatpush1.msra.mxu0 0.0
  %3083 = vmatprep.subr.mxu0 0.0
  %3084 = vmatpush1.msra.mxu0 0.0
  %3085 = vmatprep.subr.mxu0 0.0
  %3086 = vmatpush1.msra.mxu0 0.0
  %3087 = vmatprep.subr.mxu0 0.0
  %3088 = vmatpush1.msra.mxu0 0.0
  %3089 = vmatprep.subr.mxu0 0.0
  %3090 = vmatpush1.msra.mxu0 0.0
  %3091 = vmatprep.mubr.f32.mxu0 0.0
  %3092 = vmatmul.mubr.f32.gmra.mrb[0].mxu0 %v3022
  %v3093 = vpop.f32.mrb[0].mxu0
  %v3094 = vadd.f32 0.0, %v3093
  %v3095 = vpop.f32.mrb[0].mxu0
  %3096 = vmatprep.mubr.f32.mxu0 0.0
  %3097 = vmatmul.mubr.f32.gmra.mrb[0].mxu0 %v3025
  %v3098 = vpop.f32.mrb[0].mxu0
  %v3099 = vadd.f32 0.0, %v3098
  %v3100 = vpop.f32.mrb[0].mxu0
  %3101 = vdwg.mxu0
  %3102 = vrot.lane.b32.xlu0 %v141, 40
  %v3103 = vpop.permute.xlu0 %3102
  %3104 = vrot.lane.b32.xlu0 %v146, 40
  %v3105 = vpop.permute.xlu0 %3104
  %v3109 = vsel %vm526, %v3009, 0
  %v3112 = vsel %vm526, %v3010, 0
  %3114 = vmatprep.subr.mxu0 0.0
  %3115 = vmatpush1.msra.mxu0 %v3103
  %3116 = vmatprep.subr.mxu0 0.0
  %3117 = vmatpush1.msra.mxu0 %v3105
  %3118 = vmatprep.subr.mxu0 0.0
  %3119 = vmatpush1.msra.mxu0 0.0
  %3120 = vmatprep.subr.mxu0 0.0
  %3121 = vmatpush1.msra.mxu0 0.0
  %3122 = vmatprep.subr.mxu0 0.0
  %3123 = vmatpush1.msra.mxu0 0.0
  %3124 = vmatprep.subr.mxu0 0.0
  %3125 = vmatpush1.msra.mxu0 0.0
  %3126 = vmatprep.subr.mxu0 0.0
  %3127 = vmatpush1.msra.mxu0 0.0
  %3128 = vmatprep.subr.mxu0 0.0
  %3129 = vmatpush1.msra.mxu0 0.0
  %3130 = vmatprep.subr.mxu0 0.0
  %3131 = vmatpush1.msra.mxu0 0.0
  %3132 = vmatprep.subr.mxu0 0.0
  %3133 = vmatpush1.msra.mxu0 0.0
  %3134 = vmatprep.subr.mxu0 0.0
  %3135 = vmatpush1.msra.mxu0 0.0
  %3136 = vmatprep.subr.mxu0 0.0
  %3137 = vmatpush1.msra.mxu0 0.0
  %3138 = vmatprep.subr.mxu0 0.0
  %3139 = vmatpush1.msra.mxu0 0.0
  %3140 = vmatprep.subr.mxu0 0.0
  %3141 = vmatpush1.msra.mxu0 0.0
  %3142 = vmatprep.subr.mxu0 0.0
  %3143 = vmatpush1.msra.mxu0 0.0
  %3144 = vmatprep.subr.mxu0 0.0
  %3145 = vmatpush1.msra.mxu0 0.0
  %3146 = vmatprep.subr.mxu0 0.0
  %3147 = vmatpush1.msra.mxu0 0.0
  %3148 = vmatprep.subr.mxu0 0.0
  %3149 = vmatpush1.msra.mxu0 0.0
  %3150 = vmatprep.subr.mxu0 0.0
  %3151 = vmatpush1.msra.mxu0 0.0
  %3152 = vmatprep.subr.mxu0 0.0
  %3153 = vmatpush1.msra.mxu0 0.0
  %3154 = vmatprep.subr.mxu0 0.0
  %3155 = vmatpush1.msra.mxu0 0.0
  %3156 = vmatprep.subr.mxu0 0.0
  %3157 = vmatpush1.msra.mxu0 0.0
  %3158 = vmatprep.subr.mxu0 0.0
  %3159 = vmatpush1.msra.mxu0 0.0
  %3160 = vmatprep.subr.mxu0 0.0
  %3161 = vmatpush1.msra.mxu0 0.0
  %3162 = vmatprep.subr.mxu0 0.0
  %3163 = vmatpush1.msra.mxu0 0.0
  %3164 = vmatprep.subr.mxu0 0.0
  %3165 = vmatpush1.msra.mxu0 0.0
  %3166 = vmatprep.subr.mxu0 0.0
  %3167 = vmatpush1.msra.mxu0 0.0
  %3168 = vmatprep.subr.mxu0 0.0
  %3169 = vmatpush1.msra.mxu0 0.0
  %3170 = vmatprep.subr.mxu0 0.0
  %3171 = vmatpush1.msra.mxu0 0.0
  %3172 = vmatprep.subr.mxu0 0.0
  %3173 = vmatpush1.msra.mxu0 0.0
  %3174 = vmatprep.subr.mxu0 0.0
  %3175 = vmatpush1.msra.mxu0 0.0
  %3176 = vmatprep.subr.mxu0 0.0
  %3177 = vmatpush1.msra.mxu0 0.0
  %3178 = vmatprep.mubr.f32.mxu0 0.0
  %3179 = vmatmul.mubr.f32.gmra.mrb[0].mxu0 %v3109
  %v3180 = vpop.f32.mrb[0].mxu0
  %v3181 = vadd.f32 0.0, %v3180
  %v3182 = vpop.f32.mrb[0].mxu0
  %3183 = vmatprep.mubr.f32.mxu0 0.0
  %3184 = vmatmul.mubr.f32.gmra.mrb[0].mxu0 %v3112
  %v3185 = vpop.f32.mrb[0].mxu0
  %v3186 = vadd.f32 0.0, %v3185
  %v3187 = vpop.f32.mrb[0].mxu0
  %3188 = vdwg.mxu0
  %3189 = vrot.lane.b32.xlu0 %v151, 40
  %v3190 = vpop.permute.xlu0 %3189
  %3191 = vrot.lane.b32.xlu0 %v156, 40
  %v3192 = vpop.permute.xlu0 %3191
  %v3196 = vsel %vm526, %v3011, 0
  %v3199 = vsel %vm526, %v3012, 0
  %3201 = vmatprep.subr.mxu0 0.0
  %3202 = vmatpush1.msra.mxu0 %v3190
  %3203 = vmatprep.subr.mxu0 0.0
  %3204 = vmatpush1.msra.mxu0 %v3192
  %3205 = vmatprep.subr.mxu0 0.0
  %3206 = vmatpush1.msra.mxu0 0.0
  %3207 = vmatprep.subr.mxu0 0.0
  %3208 = vmatpush1.msra.mxu0 0.0
  %3209 = vmatprep.subr.mxu0 0.0
  %3210 = vmatpush1.msra.mxu0 0.0
  %3211 = vmatprep.subr.mxu0 0.0
  %3212 = vmatpush1.msra.mxu0 0.0
  %3213 = vmatprep.subr.mxu0 0.0
  %3214 = vmatpush1.msra.mxu0 0.0
  %3215 = vmatprep.subr.mxu0 0.0
  %3216 = vmatpush1.msra.mxu0 0.0
  %3217 = vmatprep.subr.mxu0 0.0
  %3218 = vmatpush1.msra.mxu0 0.0
  %3219 = vmatprep.subr.mxu0 0.0
  %3220 = vmatpush1.msra.mxu0 0.0
  %3221 = vmatprep.subr.mxu0 0.0
  %3222 = vmatpush1.msra.mxu0 0.0
  %3223 = vmatprep.subr.mxu0 0.0
  %3224 = vmatpush1.msra.mxu0 0.0
  %3225 = vmatprep.subr.mxu0 0.0
  %3226 = vmatpush1.msra.mxu0 0.0
  %3227 = vmatprep.subr.mxu0 0.0
  %3228 = vmatpush1.msra.mxu0 0.0
  %3229 = vmatprep.subr.mxu0 0.0
  %3230 = vmatpush1.msra.mxu0 0.0
  %3231 = vmatprep.subr.mxu0 0.0
  %3232 = vmatpush1.msra.mxu0 0.0
  %3233 = vmatprep.subr.mxu0 0.0
  %3234 = vmatpush1.msra.mxu0 0.0
  %3235 = vmatprep.subr.mxu0 0.0
  %3236 = vmatpush1.msra.mxu0 0.0
  %3237 = vmatprep.subr.mxu0 0.0
  %3238 = vmatpush1.msra.mxu0 0.0
  %3239 = vmatprep.subr.mxu0 0.0
  %3240 = vmatpush1.msra.mxu0 0.0
  %3241 = vmatprep.subr.mxu0 0.0
  %3242 = vmatpush1.msra.mxu0 0.0
  %3243 = vmatprep.subr.mxu0 0.0
  %3244 = vmatpush1.msra.mxu0 0.0
  %3245 = vmatprep.subr.mxu0 0.0
  %3246 = vmatpush1.msra.mxu0 0.0
  %3247 = vmatprep.subr.mxu0 0.0
  %3248 = vmatpush1.msra.mxu0 0.0
  %3249 = vmatprep.subr.mxu0 0.0
  %3250 = vmatpush1.msra.mxu0 0.0
  %3251 = vmatprep.subr.mxu0 0.0
  %3252 = vmatpush1.msra.mxu0 0.0
  %3253 = vmatprep.subr.mxu0 0.0
  %3254 = vmatpush1.msra.mxu0 0.0
  %3255 = vmatprep.subr.mxu0 0.0
  %3256 = vmatpush1.msra.mxu0 0.0
  %3257 = vmatprep.subr.mxu0 0.0
  %3258 = vmatpush1.msra.mxu0 0.0
  %3259 = vmatprep.subr.mxu0 0.0
  %3260 = vmatpush1.msra.mxu0 0.0
  %3261 = vmatprep.subr.mxu0 0.0
  %3262 = vmatpush1.msra.mxu0 0.0
  %3263 = vmatprep.subr.mxu0 0.0
  %3264 = vmatpush1.msra.mxu0 0.0
  %3265 = vmatprep.mubr.f32.mxu0 0.0
  %3266 = vmatmul.mubr.f32.gmra.mrb[0].mxu0 %v3196
  %v3267 = vpop.f32.mrb[0].mxu0
  %v3268 = vadd.f32 0.0, %v3267
  %v3269 = vpop.f32.mrb[0].mxu0
  %3270 = vmatprep.mubr.f32.mxu0 0.0
  %3271 = vmatmul.mubr.f32.gmra.mrb[0].mxu0 %v3199
  %v3272 = vpop.f32.mrb[0].mxu0
  %v3273 = vadd.f32 0.0, %v3272
  %v3274 = vpop.f32.mrb[0].mxu0
  %3275 = vdwg.mxu0
  %3276 = vrot.lane.b32.xlu0 %v161, 40
  %v3277 = vpop.permute.xlu0 %3276
  %3278 = vrot.lane.b32.xlu0 %v166, 40
  %v3279 = vpop.permute.xlu0 %3278
  %v3283 = vsel %vm526, %v3013, 0
  %v3286 = vsel %vm526, %v3014, 0
  %3288 = vmatprep.subr.mxu0 0.0
  %3289 = vmatpush1.msra.mxu0 %v3277
  %3290 = vmatprep.subr.mxu0 0.0
  %3291 = vmatpush1.msra.mxu0 %v3279
  %3292 = vmatprep.subr.mxu0 0.0
  %3293 = vmatpush1.msra.mxu0 0.0
  %3294 = vmatprep.subr.mxu0 0.0
  %3295 = vmatpush1.msra.mxu0 0.0
  %3296 = vmatprep.subr.mxu0 0.0
  %3297 = vmatpush1.msra.mxu0 0.0
  %3298 = vmatprep.subr.mxu0 0.0
  %3299 = vmatpush1.msra.mxu0 0.0
  %3300 = vmatprep.subr.mxu0 0.0
  %3301 = vmatpush1.msra.mxu0 0.0
  %3302 = vmatprep.subr.mxu0 0.0
  %3303 = vmatpush1.msra.mxu0 0.0
  %3304 = vmatprep.subr.mxu0 0.0
  %3305 = vmatpush1.msra.mxu0 0.0
  %3306 = vmatprep.subr.mxu0 0.0
  %3307 = vmatpush1.msra.mxu0 0.0
  %3308 = vmatprep.subr.mxu0 0.0
  %3309 = vmatpush1.msra.mxu0 0.0
  %3310 = vmatprep.subr.mxu0 0.0
  %3311 = vmatpush1.msra.mxu0 0.0
  %3312 = vmatprep.subr.mxu0 0.0
  %3313 = vmatpush1.msra.mxu0 0.0
  %3314 = vmatprep.subr.mxu0 0.0
  %3315 = vmatpush1.msra.mxu0 0.0
  %3316 = vmatprep.subr.mxu0 0.0
  %3317 = vmatpush1.msra.mxu0 0.0
  %3318 = vmatprep.subr.mxu0 0.0
  %3319 = vmatpush1.msra.mxu0 0.0
  %3320 = vmatprep.subr.mxu0 0.0
  %3321 = vmatpush1.msra.mxu0 0.0
  %3322 = vmatprep.subr.mxu0 0.0
  %3323 = vmatpush1.msra.mxu0 0.0
  %3324 = vmatprep.subr.mxu0 0.0
  %3325 = vmatpush1.msra.mxu0 0.0
  %3326 = vmatprep.subr.mxu0 0.0
  %3327 = vmatpush1.msra.mxu0 0.0
  %3328 = vmatprep.subr.mxu0 0.0
  %3329 = vmatpush1.msra.mxu0 0.0
  %3330 = vmatprep.subr.mxu0 0.0
  %3331 = vmatpush1.msra.mxu0 0.0
  %3332 = vmatprep.subr.mxu0 0.0
  %3333 = vmatpush1.msra.mxu0 0.0
  %3334 = vmatprep.subr.mxu0 0.0
  %3335 = vmatpush1.msra.mxu0 0.0
  %3336 = vmatprep.subr.mxu0 0.0
  %3337 = vmatpush1.msra.mxu0 0.0
  %3338 = vmatprep.subr.mxu0 0.0
  %3339 = vmatpush1.msra.mxu0 0.0
  %3340 = vmatprep.subr.mxu0 0.0
  %3341 = vmatpush1.msra.mxu0 0.0
  %3342 = vmatprep.subr.mxu0 0.0
  %3343 = vmatpush1.msra.mxu0 0.0
  %3344 = vmatprep.subr.mxu0 0.0
  %3345 = vmatpush1.msra.mxu0 0.0
  %3346 = vmatprep.subr.mxu0 0.0
  %3347 = vmatpush1.msra.mxu0 0.0
  %3348 = vmatprep.subr.mxu0 0.0
  %3349 = vmatpush1.msra.mxu0 0.0
  %3350 = vmatprep.subr.mxu0 0.0
  %3351 = vmatpush1.msra.mxu0 0.0
  %3352 = vmatprep.mubr.f32.mxu0 0.0
  %3353 = vmatmul.mubr.f32.gmra.mrb[0].mxu0 %v3283
  %v3354 = vpop.f32.mrb[0].mxu0
  %v3355 = vadd.f32 0.0, %v3354
  %v3356 = vpop.f32.mrb[0].mxu0
  %3357 = vmatprep.mubr.f32.mxu0 0.0
  %3358 = vmatmul.mubr.f32.gmra.mrb[0].mxu0 %v3286
  %v3359 = vpop.f32.mrb[0].mxu0
  %v3360 = vadd.f32 0.0, %v3359
  %v3361 = vpop.f32.mrb[0].mxu0
  %3362 = vdwg.mxu0
  %3371 = vrot.lane.b32.xlu0 %v1494, 8
  %v3372 = vpop.permute.xlu0 %3371
  %3373 = vrot.lane.b32.xlu0 %v1499, 8
  %v3374 = vpop.permute.xlu0 %3373
  %3375 = vrot.lane.b32.xlu0 %v1581, 8
  %v3376 = vpop.permute.xlu0 %3375
  %3377 = vrot.lane.b32.xlu0 %v1586, 8
  %v3378 = vpop.permute.xlu0 %3377
  %3379 = vrot.lane.b32.xlu0 %v1668, 8
  %v3380 = vpop.permute.xlu0 %3379
  %3381 = vrot.lane.b32.xlu0 %v1673, 8
  %v3382 = vpop.permute.xlu0 %3381
  %3383 = vrot.lane.b32.xlu0 %v1755, 8
  %v3384 = vpop.permute.xlu0 %3383
  %3385 = vrot.lane.b32.xlu0 %v1760, 8
  %v3386 = vpop.permute.xlu0 %3385
  %3403 = vrot.lane.b32.xlu0 %v2294, 16
  %v3404 = vpop.permute.xlu0 %3403
  %3405 = vrot.lane.b32.xlu0 %v2299, 16
  %v3406 = vpop.permute.xlu0 %3405
  %3407 = vrot.lane.b32.xlu0 %v2381, 16
  %v3408 = vpop.permute.xlu0 %3407
  %3409 = vrot.lane.b32.xlu0 %v2386, 16
  %v3410 = vpop.permute.xlu0 %3409
  %3411 = vrot.lane.b32.xlu0 %v2468, 16
  %v3412 = vpop.permute.xlu0 %3411
  %3413 = vrot.lane.b32.xlu0 %v2473, 16
  %v3414 = vpop.permute.xlu0 %3413
  %3415 = vrot.lane.b32.xlu0 %v2555, 16
  %v3416 = vpop.permute.xlu0 %3415
  %3417 = vrot.lane.b32.xlu0 %v2560, 16
  %v3418 = vpop.permute.xlu0 %3417
  %3435 = vrot.lane.b32.xlu0 %v3094, 24
  %v3436 = vpop.permute.xlu0 %3435
  %3437 = vrot.lane.b32.xlu0 %v3099, 24
  %v3438 = vpop.permute.xlu0 %3437
  %3439 = vrot.lane.b32.xlu0 %v3181, 24
  %v3440 = vpop.permute.xlu0 %3439
  %3441 = vrot.lane.b32.xlu0 %v3186, 24
  %v3442 = vpop.permute.xlu0 %3441
  %3443 = vrot.lane.b32.xlu0 %v3268, 24
  %v3444 = vpop.permute.xlu0 %3443
  %3445 = vrot.lane.b32.xlu0 %v3273, 24
  %v3446 = vpop.permute.xlu0 %3445
  %3447 = vrot.lane.b32.xlu0 %v3355, 24
  %v3448 = vpop.permute.xlu0 %3447
  %3449 = vrot.lane.b32.xlu0 %v3360, 24
  %v3450 = vpop.permute.xlu0 %3449
  %v3459 = vsel %vm175, %v694, %v3372
  %v3460 = vsel %vm175, %v699, %v3374
  %v3461 = vsel %vm175, %v781, %v3376
  %v3462 = vsel %vm175, %v786, %v3378
  %v3463 = vsel %vm175, %v868, %v3380
  %v3464 = vsel %vm175, %v873, %v3382
  %v3465 = vsel %vm175, %v955, %v3384
  %v3466 = vsel %vm175, %v960, %v3386
  %v3467 = vsel %vm526, %v3459, %v3404
  %v3468 = vsel %vm526, %v3460, %v3406
  %v3469 = vsel %vm526, %v3461, %v3408
  %v3470 = vsel %vm526, %v3462, %v3410
  %v3471 = vsel %vm526, %v3463, %v3412
  %v3472 = vsel %vm526, %v3464, %v3414
  %v3473 = vsel %vm526, %v3465, %v3416
  %v3474 = vsel %vm526, %v3466, %v3418
  %vm3475 = vcmask 195584
  %v3476 = vsel %vm3475, %v3467, %v3436
  %v3477 = vsel %vm3475, %v3468, %v3438
  %v3478 = vsel %vm3475, %v3469, %v3440
  %v3479 = vsel %vm3475, %v3470, %v3442
  %v3480 = vsel %vm3475, %v3471, %v3444
  %v3481 = vsel %vm3475, %v3472, %v3446
  %v3482 = vsel %vm3475, %v3473, %v3448
  %v3483 = vsel %vm3475, %v3474, %v3450
  %v3484 = vld [vmem:[%s3] sm:$0xff]
  %v3485 = vld [vmem:[%s3 + $0x8] sm:$0xff]
  %v3486 = vld [vmem:[%s3 + $0x10] sm:$0xff]
  %v3487 = vld [vmem:[%s3 + $0x18] sm:$0xff]
  %v3488 = vld [vmem:[%s4] sm:$0x1]
  %v3490 = vlaneseq
  %v3491 = vshrl.u32 %v3490, 7
  %v3492 = vsub.s32 0, %v3491
  %v3493 = vrot.slane %v3488, %v3492
  %v3496 = vsel %vm39, %v3476, 0
  %v3499 = vsel %vm39, %v3477, 0
  %v3502 = vsel %vm39, %v3478, 0
  %v3505 = vsel %vm39, %v3479, 0
  %v3508 = vsel %vm39, %v3480, 0
  %v3511 = vsel %vm39, %v3481, 0
  %v3514 = vsel %vm39, %v3482, 0
  %v3517 = vsel %vm39, %v3483, 0
  %3519 = vmatprep.subr.mxu0 0.0
  %3520 = vmatpush1.msra.mxu0 %v3484
  %3521 = vmatprep.subr.mxu0 0.0
  %3522 = vmatpush1.msra.mxu0 %v3485
  %3523 = vmatprep.subr.mxu0 0.0
  %3524 = vmatpush1.msra.mxu0 %v3486
  %3525 = vmatprep.subr.mxu0 0.0
  %3526 = vmatpush1.msra.mxu0 %v3487
  %3527 = vmatprep.subr.mxu0 0.0
  %3528 = vmatpush1.msra.mxu0 0.0
  %3529 = vmatprep.subr.mxu0 0.0
  %3530 = vmatpush1.msra.mxu0 0.0
  %3531 = vmatprep.subr.mxu0 0.0
  %3532 = vmatpush1.msra.mxu0 0.0
  %3533 = vmatprep.subr.mxu0 0.0
  %3534 = vmatpush1.msra.mxu0 0.0
  %3535 = vmatprep.subr.mxu0 0.0
  %3536 = vmatpush1.msra.mxu0 0.0
  %3537 = vmatprep.subr.mxu0 0.0
  %3538 = vmatpush1.msra.mxu0 0.0
  %3539 = vmatprep.subr.mxu0 0.0
  %3540 = vmatpush1.msra.mxu0 0.0
  %3541 = vmatprep.subr.mxu0 0.0
  %3542 = vmatpush1.msra.mxu0 0.0
  %3543 = vmatprep.subr.mxu0 0.0
  %3544 = vmatpush1.msra.mxu0 0.0
  %3545 = vmatprep.subr.mxu0 0.0
  %3546 = vmatpush1.msra.mxu0 0.0
  %3547 = vmatprep.subr.mxu0 0.0
  %3548 = vmatpush1.msra.mxu0 0.0
  %3549 = vmatprep.subr.mxu0 0.0
  %3550 = vmatpush1.msra.mxu0 0.0
  %3551 = vmatprep.subr.mxu0 0.0
  %3552 = vmatpush1.msra.mxu0 0.0
  %3553 = vmatprep.subr.mxu0 0.0
  %3554 = vmatpush1.msra.mxu0 0.0
  %3555 = vmatprep.subr.mxu0 0.0
  %3556 = vmatpush1.msra.mxu0 0.0
  %3557 = vmatprep.subr.mxu0 0.0
  %3558 = vmatpush1.msra.mxu0 0.0
  %3559 = vmatprep.subr.mxu0 0.0
  %3560 = vmatpush1.msra.mxu0 0.0
  %3561 = vmatprep.subr.mxu0 0.0
  %3562 = vmatpush1.msra.mxu0 0.0
  %3563 = vmatprep.subr.mxu0 0.0
  %3564 = vmatpush1.msra.mxu0 0.0
  %3565 = vmatprep.subr.mxu0 0.0
  %3566 = vmatpush1.msra.mxu0 0.0
  %3567 = vmatprep.subr.mxu0 0.0
  %3568 = vmatpush1.msra.mxu0 0.0
  %3569 = vmatprep.subr.mxu0 0.0
  %3570 = vmatpush1.msra.mxu0 0.0
  %3571 = vmatprep.subr.mxu0 0.0
  %3572 = vmatpush1.msra.mxu0 0.0
  %3573 = vmatprep.subr.mxu0 0.0
  %3574 = vmatpush1.msra.mxu0 0.0
  %3575 = vmatprep.subr.mxu0 0.0
  %3576 = vmatpush1.msra.mxu0 0.0
  %3577 = vmatprep.subr.mxu0 0.0
  %3578 = vmatpush1.msra.mxu0 0.0
  %3579 = vmatprep.subr.mxu0 0.0
  %3580 = vmatpush1.msra.mxu0 0.0
  %3581 = vmatprep.subr.mxu0 0.0
  %3582 = vmatpush1.msra.mxu0 0.0
  %3583 = vmatprep.mubr.f32.mxu0 0.0
  %3584 = vmatmul.mubr.f32.gmra.mrb[0].mxu0 %v3496
  %v3585 = vpop.f32.mrb[0].mxu0
  %v3586 = vadd.f32 %v3493, %v3585
  %v3587 = vpop.f32.mrb[0].mxu0
  %3588 = vmatprep.mubr.f32.mxu0 0.0
  %3589 = vmatmul.mubr.f32.gmra.mrb[0].mxu0 %v3499
  %v3590 = vpop.f32.mrb[0].mxu0
  %v3591 = vadd.f32 %v3493, %v3590
  %v3592 = vpop.f32.mrb[0].mxu0
  %3593 = vmatprep.mubr.f32.mxu0 0.0
  %3594 = vmatmul.mubr.f32.gmra.mrb[0].mxu0 %v3502
  %v3595 = vpop.f32.mrb[0].mxu0
  %v3596 = vadd.f32 %v3493, %v3595
  %v3597 = vpop.f32.mrb[0].mxu0
  %3598 = vmatprep.mubr.f32.mxu0 0.0
  %3599 = vmatmul.mubr.f32.gmra.mrb[0].mxu0 %v3505
  %v3600 = vpop.f32.mrb[0].mxu0
  %v3601 = vadd.f32 %v3493, %v3600
  %v3602 = vpop.f32.mrb[0].mxu0
  %3603 = vmatprep.mubr.f32.mxu0 0.0
  %3604 = vmatmul.mubr.f32.gmra.mrb[0].mxu0 %v3508
  %v3605 = vpop.f32.mrb[0].mxu0
  %v3606 = vadd.f32 %v3493, %v3605
  %v3607 = vpop.f32.mrb[0].mxu0
  %3608 = vmatprep.mubr.f32.mxu0 0.0
  %3609 = vmatmul.mubr.f32.gmra.mrb[0].mxu0 %v3511
  %v3610 = vpop.f32.mrb[0].mxu0
  %v3611 = vadd.f32 %v3493, %v3610
  %v3612 = vpop.f32.mrb[0].mxu0
  %3613 = vmatprep.mubr.f32.mxu0 0.0
  %3614 = vmatmul.mubr.f32.gmra.mrb[0].mxu0 %v3514
  %v3615 = vpop.f32.mrb[0].mxu0
  %v3616 = vadd.f32 %v3493, %v3615
  %v3617 = vpop.f32.mrb[0].mxu0
  %3618 = vmatprep.mubr.f32.mxu0 0.0
  %3619 = vmatmul.mubr.f32.gmra.mrb[0].mxu0 %v3517
  %v3620 = vpop.f32.mrb[0].mxu0
  %v3621 = vadd.f32 %v3493, %v3620
  %v3622 = vpop.f32.mrb[0].mxu0
  %3623 = vdwg.mxu0
  %3624 = vst.msk [vmem:[%s5] sm:$0xff] %vm39, %v3586
  %3625 = vst.msk [vmem:[%s5 + $0x8] sm:$0xff] %vm39, %v3591
  %3626 = vst.msk [vmem:[%s5 + $0x10] sm:$0xff] %vm39, %v3596
  %3627 = vst.msk [vmem:[%s5 + $0x18] sm:$0xff] %vm39, %v3601
  %3628 = vst.msk [vmem:[%s5 + $0x20] sm:$0xff] %vm39, %v3606
  %3629 = vst.msk [vmem:[%s5 + $0x28] sm:$0xff] %vm39, %v3611
  %3630 = vst.msk [vmem:[%s5 + $0x30] sm:$0xff] %vm39, %v3616
  %3631 = vst.msk [vmem:[%s5 + $0x38] sm:$0xff] %vm39, %v3621
  // Predicated region
  $region22: #{tpu_custom_call.1} parent=0 // pred_check
    _
  $region23: #{tpu_custom_call.1} parent=0 // pred_check_branch
    %3633 = sbr.rel (0) target = $region25
  $region24: #{tpu_custom_call.1} parent=0 // pred_region
    _
  $region25: #{tpu_custom_call.1} parent=0 // pred_fallthru
    _
  // Predicated region
  $region26: #{tpu_custom_call.1} parent=0 // pred_check
    _
  $region27: #{tpu_custom_call.1} parent=0 // pred_check_branch
    %3635 = sbr.rel (0) target = $region29
  $region28: #{tpu_custom_call.1} parent=0 // pred_region
    _
  $region29: #{tpu_custom_call.1} parent=0 // pred_fallthru
    _

</llo_original>
